<compile_context>
chip_gen: v6e
topology: v6e:2x2x1
jax: 0.10.0
libtpu: 0.0.40
codegen_flags: <defaults>
</compile_context>

<pallas_src>
import functools

import numpy as np
import jax
import jax.numpy as jnp
from jax.experimental import pallas as pl
from jax.experimental.pallas import tpu as pltpu

# ----------------------------------------------------------------------------
# Static dimensions implied by the module (fc1 in_features=20*10*10 => 28x28).
# ----------------------------------------------------------------------------
H_IN = 28          # input spatial size
HP, WP = 12, 12    # pooled spatial size after conv1 + 2x2 pool
H2, W2O = 10, 10   # conv2 output spatial size
C1, C2 = 10, 20    # conv1 / conv2 output channels
FC1_OUT = 500
FC1_PAD = 512      # lane-aligned fc1 output (padded with zeros)
NCLS = 10
CLS_PAD = 128      # class dim padded for lane-dense output stores
POOL_PAD = 128     # 12*10=120 pooled feature lanes padded to 128
KCAT = 6 * H_IN    # 168: six conv1 row-bands concatenated along lanes
MAX_TB = 128       # max batch tile per grid step (multiple of 16)


def _round_up(n, m):
    return (n + m - 1) // m * m


# ----------------------------------------------------------------------------
# Fused forward kernel (one grid step = TB images, everything stays in VMEM)
# ----------------------------------------------------------------------------
def _fused_net_kernel(xc_ref, b1w_ref, b1t_ref, c2w_ref, b2t_ref,
                      w1fc_ref, bfc1_ref, w2fc_ref, bfc2_ref, out_ref, *, tb):
    f32 = jnp.float32
    bf16 = jnp.bfloat16

    # ---- conv1 + ReLU + 2x2 maxpool (single matmul) -------------------------
    # xc_ref[ho, n, q*28 + w] = x[n, 2*ho + q, w]  (6 row-bands on lanes).
    # The 5x5 kernel lives entirely in the K=168 contraction; the 2x2 pool
    # window (dh, dw) lives in N as four 128-lane column groups.
    xf = xc_ref[...].reshape(HP * tb, KCAT)                        # bf16
    a = jnp.dot(xf, b1w_ref[...], preferred_element_type=f32)      # (12*tb, 512)
    m = jnp.maximum(
        jnp.maximum(a[:, 0:POOL_PAD], a[:, POOL_PAD:2 * POOL_PAD]),
        jnp.maximum(a[:, 2 * POOL_PAD:3 * POOL_PAD],
                    a[:, 3 * POOL_PAD:4 * POOL_PAD]))
    # relu(max(pre-bias) + bias) == maxpool(relu(conv1)): per-channel bias,
    # relu monotone.  Pad lanes 120..127 stay exactly 0.
    pooled = jnp.maximum(m + b1t_ref[...], 0.0).astype(bf16)       # (12*tb, 128)

    # ---- conv2 + ReLU (3 banded matmuls, contiguous row slices) -------------
    # TODO(synk): conv2's three K=128 matmuls could be lane-concatenated into
    # one K=384 matmul; kept separate (minor share of FLOPs, avoids an
    # in-kernel lane concat).
    y2 = jnp.dot(pooled[0:H2 * tb, :], c2w_ref[0], preferred_element_type=f32)
    for ki in range(1, 3):
        y2 = y2 + jnp.dot(pooled[ki * tb:(ki + H2) * tb, :], c2w_ref[ki],
                          preferred_element_type=f32)
    y2 = jnp.maximum(y2 + b2t_ref[...], 0.0).astype(bf16)          # (10*tb, 200)

    # ---- fc1 + ReLU (PyTorch NCHW flatten folded into w1fc row order) -------
    h1 = jnp.dot(y2[0:tb, :], w1fc_ref[0], preferred_element_type=f32)
    for h2 in range(1, H2):
        h1 = h1 + jnp.dot(y2[h2 * tb:(h2 + 1) * tb, :], w1fc_ref[h2],
                          preferred_element_type=f32)
    h1 = jnp.maximum(h1 + bfc1_ref[...], 0.0).astype(bf16)         # (tb, 512)

    # ---- fc2 + log_softmax ---------------------------------------------------
    # Class dim padded to 128 lanes; pad "biases" are -1e9 so padded classes
    # contribute exp(~-1e9)=0 to the softmax normalizer.
    logits = jnp.dot(h1, w2fc_ref[...], preferred_element_type=f32)
    logits = logits + bfc2_ref[...]                                # (tb, 128)
    mx = jnp.max(logits, axis=-1, keepdims=True)
    s = logits - mx
    lse = jnp.log(jnp.sum(jnp.exp(s), axis=-1, keepdims=True))
    out_ref[...] = s - lse


# ----------------------------------------------------------------------------
# One-time parameter packing (hoisted out of the hot path), bf16 matmul weights
# ----------------------------------------------------------------------------
def prepare_params(params):
    w1 = np.asarray(params["conv1_w"], np.float32)   # (10, 1, 5, 5)
    b1 = np.asarray(params["conv1_b"], np.float32)
    w2 = np.asarray(params["conv2_w"], np.float32)   # (20, 10, 3, 3)
    b2 = np.asarray(params["conv2_b"], np.float32)
    fc1w = np.asarray(params["fc1_w"], np.float32)   # (500, 2000)
    fc1b = np.asarray(params["fc1_b"], np.float32)
    fc2w = np.asarray(params["fc2_w"], np.float32)   # (10, 500)
    fc2b = np.asarray(params["fc2_b"], np.float32)

    # conv1 fused weights:
    #   B1[q*28 + w_in, (2*dh+dw)*128 + wo*10 + co] = w1[co, 0, ki, kj]
    # with q = dh + ki and w_in = 2*wo + dw + kj.
    B1 = np.zeros((KCAT, 4 * POOL_PAD), np.float32)
    for dh in range(2):
        for dw in range(2):
            base = (2 * dh + dw) * POOL_PAD
            for wo in range(WP):
                for ki in range(5):
                    q = dh + ki
                    for kj in range(5):
                        w_in = 2 * wo + dw + kj
                        B1[q * H_IN + w_in,
                           base + wo * C1:base + (wo + 1) * C1] = w1[:, 0, ki, kj]
    b1t = np.zeros((1, POOL_PAD), np.float32)
    b1t[0, :WP * C1] = np.tile(b1, WP)               # index wo*10+co -> b1[co]

    # conv2 banded weights (pooled rows padded 120 -> 128 with zero rows):
    #   C2w[ki, wo*10+ci, w2o*20+co] = w2[co, ci, ki, wo-w2o]
    C2w = np.zeros((3, POOL_PAD, W2O * C2), np.float32)
    for ki in range(3):
        for w2o in range(W2O):
            for kj in range(3):
                wo = w2o + kj
                for ci in range(C1):
                    C2w[ki, wo * C1 + ci, w2o * C2:(w2o + 1) * C2] = \
                        w2[:, ci, ki, kj]
    b2t = np.tile(b2, W2O).reshape(1, W2O * C2)

    # fc1 weights reordered so the kernel's (h2-row, (w2,co)-column) layout is
    # consumed directly (PyTorch NCHW flatten absorbed here); output padded
    # 500 -> 512 for lane alignment.
    t = fc1w.reshape(FC1_OUT, C2, H2, W2O).transpose(2, 3, 1, 0)  # (h2,w2,co,f)
    t = t.reshape(H2, W2O * C2, FC1_OUT)
    W1fc = np.zeros((H2, W2O * C2, FC1_PAD), np.float32)
    W1fc[:, :, :FC1_OUT] = t
    bfc1 = np.zeros((1, FC1_PAD), np.float32)
    bfc1[0, :FC1_OUT] = fc1b

    # fc2 weights padded to (512, 128); class-pad bias = -1e9 masks pad lanes.
    W2fc = np.zeros((FC1_PAD, CLS_PAD), np.float32)
    W2fc[:FC1_OUT, :NCLS] = fc2w.T
    bfc2 = np.full((1, CLS_PAD), -1e9, np.float32)
    bfc2[0, :NCLS] = fc2b

    # Matmul weights -> bf16 (zero padding cast after zero-fill stays exact 0);
    # biases stay f32 (added to f32 accumulators).
    return dict(
        b1w=jnp.asarray(B1, jnp.bfloat16),
        b1t=jnp.asarray(b1t, jnp.float32),
        c2w=jnp.asarray(C2w, jnp.bfloat16),
        b2t=jnp.asarray(b2t, jnp.float32),
        w1fc=jnp.asarray(W1fc, jnp.bfloat16),
        bfc1=jnp.asarray(bfc1, jnp.float32),
        w2fc=jnp.asarray(W2fc, jnp.bfloat16),
        bfc2=jnp.asarray(bfc2, jnp.float32),
    )


# ----------------------------------------------------------------------------
# Forward pass
# ----------------------------------------------------------------------------
@jax.jit
def net_forward(x_nchw, packed):
    N = x_nchw.shape[0]
    assert x_nchw.shape[1:] == (1, H_IN, H_IN)

    # Batch tile: up to 128 rows / grid step, multiple of 16 so bf16 sublane
    # slices inside the kernel stay tile-aligned.
    TB = min(MAX_TB, _round_up(N, 16))
    Np = _round_up(N, TB)

    x3 = x_nchw.reshape(N, H_IN, H_IN).astype(jnp.float32)
    if Np != N:
        x3 = jnp.concatenate(
            [x3, jnp.zeros((Np - N, H_IN, H_IN), jnp.float32)], axis=0)

    # Band-concatenated bf16 input layout (one small fused XLA prepack,
    # ~4 KB/image):  xcat[ho, n, q*28 + w] = x[n, 2*ho + q, w]
    bands = [x3[:, q:q + 2 * HP:2, :] for q in range(6)]   # 6 x (Np, 12, 28)
    xcat = jnp.concatenate(bands, axis=-1)                 # (Np, 12, 168)
    xcat = jnp.transpose(xcat, (1, 0, 2)).astype(jnp.bfloat16)   # (12, Np, 168)

    grid = (Np // TB,)
    in_specs = [
        pl.BlockSpec((HP, TB, KCAT), lambda b: (0, b, 0)),           # xcat
        pl.BlockSpec((KCAT, 4 * POOL_PAD), lambda b: (0, 0)),        # b1w
        pl.BlockSpec((1, POOL_PAD), lambda b: (0, 0)),               # b1t
        pl.BlockSpec((3, POOL_PAD, W2O * C2), lambda b: (0, 0, 0)),  # c2w
        pl.BlockSpec((1, W2O * C2), lambda b: (0, 0)),               # b2t
        pl.BlockSpec((H2, W2O * C2, FC1_PAD), lambda b: (0, 0, 0)),  # w1fc
        pl.BlockSpec((1, FC1_PAD), lambda b: (0, 0)),                # bfc1
        pl.BlockSpec((FC1_PAD, CLS_PAD), lambda b: (0, 0)),          # w2fc
        pl.BlockSpec((1, CLS_PAD), lambda b: (0, 0)),                # bfc2
    ]

    weight_bytes = sum(int(np.prod(v.shape)) * np.dtype(v.dtype).itemsize
                       for v in packed.values())
    flops_per_img = 2 * (HP * KCAT * 4 * POOL_PAD            # conv1 (banded)
                         + H2 * POOL_PAD * (W2O * C2) * 3    # conv2 (banded)
                         + (W2O * C2) * FC1_PAD * H2         # fc1
                         + FC1_PAD * CLS_PAD)                # fc2
    cost = pl.CostEstimate(
        flops=int(flops_per_img * Np),
        transcendentals=int((CLS_PAD + 1) * Np),
        bytes_accessed=int(Np * (HP * KCAT * 2 + CLS_PAD * 4) + weight_bytes))

    out = pl.pallas_call(
        functools.partial(_fused_net_kernel, tb=TB),
        out_shape=jax.ShapeDtypeStruct((Np, CLS_PAD), jnp.float32),
        grid=grid,
        in_specs=in_specs,
        out_specs=pl.BlockSpec((TB, CLS_PAD), lambda b: (b, 0)),
        compiler_params=pltpu.CompilerParams(
            dimension_semantics=("parallel",),
            vmem_limit_bytes=40 * 1024 * 1024),
        cost_estimate=cost,
    )(xcat, packed["b1w"], packed["b1t"], packed["c2w"], packed["b2t"],
      packed["w1fc"], packed["bfc1"], packed["w2fc"], packed["bfc2"])
    return out[:N, :NCLS]


# ----------------------------------------------------------------------------
# Deterministic synthetic parameters (PyTorch tensor layouts)
# ----------------------------------------------------------------------------
def init_params(key):
    ks = jax.random.split(key, 8)

    def u(k, shape, fan_in):
        bound = 1.0 / jnp.sqrt(fan_in)
        return jax.random.uniform(k, shape, jnp.float32, -bound, bound)

    return {
        "conv1_w": u(ks[0], (10, 1, 5, 5), 1 * 5 * 5),
        "conv1_b": u(ks[1], (10,), 1 * 5 * 5),
        "conv2_w": u(ks[2], (20, 10, 3, 3), 10 * 3 * 3),
        "conv2_b": u(ks[3], (20,), 10 * 3 * 3),
        "fc1_w":  u(ks[4], (500, 2000), 2000),
        "fc1_b":  u(ks[5], (500,), 2000),
        "fc2_w":  u(ks[6], (10, 500), 500),
        "fc2_b":  u(ks[7], (10,), 500),
    }


# Pure-JAX reference (for a correctness cross-check only; not the hot path).
def _reference_forward(x, params):
    dn = ("NCHW", "OIHW", "NCHW")
    a1 = jax.lax.conv_general_dilated(x, params["conv1_w"], (1, 1), "VALID",
                                      dimension_numbers=dn)
    a1 = a1 + params["conv1_b"].reshape(1, -1, 1, 1)
    r1 = jnp.maximum(a1, 0.0)
    N = x.shape[0]
    p = r1.reshape(N, C1, HP, 2, WP, 2).max(axis=(3, 5))
    a2 = jax.lax.conv_general_dilated(p, params["conv2_w"], (1, 1), "VALID",
                                      dimension_numbers=dn)
    a2 = a2 + params["conv2_b"].reshape(1, -1, 1, 1)
    r2 = jnp.maximum(a2, 0.0)
    flat = r2.reshape(N, -1)
    h = jnp.maximum(flat @ params["fc1_w"].T + params["fc1_b"], 0.0)
    logits = h @ params["fc2_w"].T + params["fc2_b"]
    return jax.nn.log_softmax(logits, axis=-1)


if __name__ == "__main__":
    key = jax.random.PRNGKey(0)
    k_param, k_x = jax.random.split(key)
    params = init_params(k_param)
    packed = prepare_params(params)          # one-time weight packing

    # MNIST-like input (28x28 is implied by fc1's 20*10*10 input features).
    x = jax.random.normal(k_x, (4, 1, 28, 28), dtype=jnp.float32)

    out = net_forward(x, packed)
    out = jax.block_until_ready(out)
    assert out.shape == (4, NCLS)

    # log_softmax rows must sum to ~1 in probability space
    assert jnp.allclose(jnp.sum(jnp.exp(out), axis=1), 1.0, atol=1e-4)

    # cross-check against a plain-JAX f32 reference of the PyTorch module
    ref = _reference_forward(x, params)
    err = float(jnp.max(jnp.abs(out - ref)))
    assert jnp.allclose(out, ref, atol=2e-2, rtol=2e-2), err

    print("KERNEL_OK")
</pallas_src>

<mosaic_0001>
module attributes {stable_mosaic.version = 11 : i64} {
  func.func @_fused_net_kernel(%arg0: i32, %arg1: memref<12x16x168xbf16, #tpu.memory_space<vmem>>, %arg2: memref<168x512xbf16, #tpu.memory_space<vmem>>, %arg3: memref<1x128xf32, #tpu.memory_space<vmem>>, %arg4: memref<3x128x200xbf16, #tpu.memory_space<vmem>>, %arg5: memref<1x200xf32, #tpu.memory_space<vmem>>, %arg6: memref<10x200x512xbf16, #tpu.memory_space<vmem>>, %arg7: memref<1x512xf32, #tpu.memory_space<vmem>>, %arg8: memref<512x128xbf16, #tpu.memory_space<vmem>>, %arg9: memref<1x128xf32, #tpu.memory_space<vmem>>, %arg10: memref<16x128xf32, #tpu.memory_space<vmem>>) attributes {dimension_semantics = [#tpu.dimension_semantics<parallel>], iteration_bounds = array<i64: 1>, scalar_prefetch = 0 : i64, scratch_operands = 0 : i64, tpu.core_type = #tpu.core_type<tc>, window_params = [{transform_indices = @transform_0, window_bounds = array<i64: 12, 16, 168>}, {pipeline_mode = #tpu.pipeline_mode<synchronous>, transform_indices = @transform_1, window_bounds = array<i64: 168, 512>}, {pipeline_mode = #tpu.pipeline_mode<synchronous>, transform_indices = @transform_2, window_bounds = array<i64: 1, 128>}, {pipeline_mode = #tpu.pipeline_mode<synchronous>, transform_indices = @transform_3, window_bounds = array<i64: 3, 128, 200>}, {pipeline_mode = #tpu.pipeline_mode<synchronous>, transform_indices = @transform_4, window_bounds = array<i64: 1, 200>}, {pipeline_mode = #tpu.pipeline_mode<synchronous>, transform_indices = @transform_5, window_bounds = array<i64: 10, 200, 512>}, {pipeline_mode = #tpu.pipeline_mode<synchronous>, transform_indices = @transform_6, window_bounds = array<i64: 1, 512>}, {pipeline_mode = #tpu.pipeline_mode<synchronous>, transform_indices = @transform_7, window_bounds = array<i64: 512, 128>}, {pipeline_mode = #tpu.pipeline_mode<synchronous>, transform_indices = @transform_8, window_bounds = array<i64: 1, 128>}, {transform_indices = @transform_9, window_bounds = array<i64: 16, 128>}]} {
    %c0 = arith.constant 0 : index
    %c0_0 = arith.constant 0 : index
    %c0_1 = arith.constant 0 : index
    %0 = vector.load %arg1[%c0, %c0_0, %c0_1] : memref<12x16x168xbf16, #tpu.memory_space<vmem>>, vector<12x16x168xbf16>
    %1 = vector.shape_cast %0 : vector<12x16x168xbf16> to vector<192x168xbf16>
    %c0_2 = arith.constant 0 : index
    %c0_3 = arith.constant 0 : index
    %2 = vector.load %arg2[%c0_2, %c0_3] : memref<168x512xbf16, #tpu.memory_space<vmem>>, vector<168x512xbf16>
    %cst = arith.constant dense<0.000000e+00> : vector<192x512xf32>
    %3 = tpu.matmul %1, %2, %cst {dimension_numbers = #tpu.dot_dimension_numbers<[1], [0], [0], [1], [0, 0, 1, 1], [], []>} : vector<192x168xbf16>, vector<168x512xbf16>, vector<192x512xf32> -> vector<192x512xf32>
    %4 = vector.extract_strided_slice %3 {offsets = [0, 0], sizes = [192, 128], strides = [1, 1]} : vector<192x512xf32> to vector<192x128xf32>
    %5 = vector.extract_strided_slice %3 {offsets = [0, 128], sizes = [192, 128], strides = [1, 1]} : vector<192x512xf32> to vector<192x128xf32>
    %6 = arith.maximumf %4, %5 : vector<192x128xf32>
    %7 = vector.extract_strided_slice %3 {offsets = [0, 256], sizes = [192, 128], strides = [1, 1]} : vector<192x512xf32> to vector<192x128xf32>
    %8 = vector.extract_strided_slice %3 {offsets = [0, 384], sizes = [192, 128], strides = [1, 1]} : vector<192x512xf32> to vector<192x128xf32>
    %9 = arith.maximumf %7, %8 : vector<192x128xf32>
    %10 = arith.maximumf %6, %9 : vector<192x128xf32>
    %c0_4 = arith.constant 0 : index
    %c0_5 = arith.constant 0 : index
    %11 = vector.load %arg3[%c0_4, %c0_5] : memref<1x128xf32, #tpu.memory_space<vmem>>, vector<1x128xf32>
    %12 = vector.broadcast %11 : vector<1x128xf32> to vector<192x128xf32>
    %13 = arith.addf %10, %12 : vector<192x128xf32>
    %cst_6 = arith.constant 0.000000e+00 : f32
    %14 = vector.broadcast %cst_6 : f32 to vector<192x128xf32>
    %15 = arith.maximumf %13, %14 : vector<192x128xf32>
    %16 = arith.truncf %15 : vector<192x128xf32> to vector<192x128xbf16>
    %17 = vector.extract_strided_slice %16 {offsets = [0, 0], sizes = [160, 128], strides = [1, 1]} : vector<192x128xbf16> to vector<160x128xbf16>
    %c0_7 = arith.constant 0 : index
    %c0_8 = arith.constant 0 : index
    %c0_9 = arith.constant 0 : index
    %18 = vector.load %arg4[%c0_7, %c0_8, %c0_9] : memref<3x128x200xbf16, #tpu.memory_space<vmem>>, vector<1x128x200xbf16>
    %19 = vector.shape_cast %18 : vector<1x128x200xbf16> to vector<128x200xbf16>
    %cst_10 = arith.constant dense<0.000000e+00> : vector<160x200xf32>
    %20 = tpu.matmul %17, %19, %cst_10 {dimension_numbers = #tpu.dot_dimension_numbers<[1], [0], [0], [1], [0, 0, 1, 1], [], []>} : vector<160x128xbf16>, vector<128x200xbf16>, vector<160x200xf32> -> vector<160x200xf32>
    %21 = vector.extract_strided_slice %16 {offsets = [16, 0], sizes = [160, 128], strides = [1, 1]} : vector<192x128xbf16> to vector<160x128xbf16>
    %c1 = arith.constant 1 : index
    %c0_11 = arith.constant 0 : index
    %c0_12 = arith.constant 0 : index
    %22 = vector.load %arg4[%c1, %c0_11, %c0_12] : memref<3x128x200xbf16, #tpu.memory_space<vmem>>, vector<1x128x200xbf16>
    %23 = vector.shape_cast %22 : vector<1x128x200xbf16> to vector<128x200xbf16>
    %cst_13 = arith.constant dense<0.000000e+00> : vector<160x200xf32>
    %24 = tpu.matmul %21, %23, %cst_13 {dimension_numbers = #tpu.dot_dimension_numbers<[1], [0], [0], [1], [0, 0, 1, 1], [], []>} : vector<160x128xbf16>, vector<128x200xbf16>, vector<160x200xf32> -> vector<160x200xf32>
    %25 = arith.addf %20, %24 : vector<160x200xf32>
    %26 = vector.extract_strided_slice %16 {offsets = [32, 0], sizes = [160, 128], strides = [1, 1]} : vector<192x128xbf16> to vector<160x128xbf16>
    %c2 = arith.constant 2 : index
    %c0_14 = arith.constant 0 : index
    %c0_15 = arith.constant 0 : index
    %27 = vector.load %arg4[%c2, %c0_14, %c0_15] : memref<3x128x200xbf16, #tpu.memory_space<vmem>>, vector<1x128x200xbf16>
    %28 = vector.shape_cast %27 : vector<1x128x200xbf16> to vector<128x200xbf16>
    %cst_16 = arith.constant dense<0.000000e+00> : vector<160x200xf32>
    %29 = tpu.matmul %26, %28, %cst_16 {dimension_numbers = #tpu.dot_dimension_numbers<[1], [0], [0], [1], [0, 0, 1, 1], [], []>} : vector<160x128xbf16>, vector<128x200xbf16>, vector<160x200xf32> -> vector<160x200xf32>
    %30 = arith.addf %25, %29 : vector<160x200xf32>
    %c0_17 = arith.constant 0 : index
    %c0_18 = arith.constant 0 : index
    %31 = vector.load %arg5[%c0_17, %c0_18] : memref<1x200xf32, #tpu.memory_space<vmem>>, vector<1x200xf32>
    %32 = vector.broadcast %31 : vector<1x200xf32> to vector<160x200xf32>
    %33 = arith.addf %30, %32 : vector<160x200xf32>
    %cst_19 = arith.constant 0.000000e+00 : f32
    %34 = vector.broadcast %cst_19 : f32 to vector<160x200xf32>
    %35 = arith.maximumf %33, %34 : vector<160x200xf32>
    %36 = arith.truncf %35 : vector<160x200xf32> to vector<160x200xbf16>
    %37 = vector.extract_strided_slice %36 {offsets = [0, 0], sizes = [16, 200], strides = [1, 1]} : vector<160x200xbf16> to vector<16x200xbf16>
    %c0_20 = arith.constant 0 : index
    %c0_21 = arith.constant 0 : index
    %c0_22 = arith.constant 0 : index
    %38 = vector.load %arg6[%c0_20, %c0_21, %c0_22] : memref<10x200x512xbf16, #tpu.memory_space<vmem>>, vector<1x200x512xbf16>
    %39 = vector.shape_cast %38 : vector<1x200x512xbf16> to vector<200x512xbf16>
    %cst_23 = arith.constant dense<0.000000e+00> : vector<16x512xf32>
    %40 = tpu.matmul %37, %39, %cst_23 {dimension_numbers = #tpu.dot_dimension_numbers<[1], [0], [0], [1], [0, 0, 1, 1], [], []>} : vector<16x200xbf16>, vector<200x512xbf16>, vector<16x512xf32> -> vector<16x512xf32>
    %41 = vector.extract_strided_slice %36 {offsets = [16, 0], sizes = [16, 200], strides = [1, 1]} : vector<160x200xbf16> to vector<16x200xbf16>
    %c1_24 = arith.constant 1 : index
    %c0_25 = arith.constant 0 : index
    %c0_26 = arith.constant 0 : index
    %42 = vector.load %arg6[%c1_24, %c0_25, %c0_26] : memref<10x200x512xbf16, #tpu.memory_space<vmem>>, vector<1x200x512xbf16>
    %43 = vector.shape_cast %42 : vector<1x200x512xbf16> to vector<200x512xbf16>
    %cst_27 = arith.constant dense<0.000000e+00> : vector<16x512xf32>
    %44 = tpu.matmul %41, %43, %cst_27 {dimension_numbers = #tpu.dot_dimension_numbers<[1], [0], [0], [1], [0, 0, 1, 1], [], []>} : vector<16x200xbf16>, vector<200x512xbf16>, vector<16x512xf32> -> vector<16x512xf32>
    %45 = arith.addf %40, %44 : vector<16x512xf32>
    %46 = vector.extract_strided_slice %36 {offsets = [32, 0], sizes = [16, 200], strides = [1, 1]} : vector<160x200xbf16> to vector<16x200xbf16>
    %c2_28 = arith.constant 2 : index
    %c0_29 = arith.constant 0 : index
    %c0_30 = arith.constant 0 : index
    %47 = vector.load %arg6[%c2_28, %c0_29, %c0_30] : memref<10x200x512xbf16, #tpu.memory_space<vmem>>, vector<1x200x512xbf16>
    %48 = vector.shape_cast %47 : vector<1x200x512xbf16> to vector<200x512xbf16>
    %cst_31 = arith.constant dense<0.000000e+00> : vector<16x512xf32>
    %49 = tpu.matmul %46, %48, %cst_31 {dimension_numbers = #tpu.dot_dimension_numbers<[1], [0], [0], [1], [0, 0, 1, 1], [], []>} : vector<16x200xbf16>, vector<200x512xbf16>, vector<16x512xf32> -> vector<16x512xf32>
    %50 = arith.addf %45, %49 : vector<16x512xf32>
    %51 = vector.extract_strided_slice %36 {offsets = [48, 0], sizes = [16, 200], strides = [1, 1]} : vector<160x200xbf16> to vector<16x200xbf16>
    %c3 = arith.constant 3 : index
    %c0_32 = arith.constant 0 : index
    %c0_33 = arith.constant 0 : index
    %52 = vector.load %arg6[%c3, %c0_32, %c0_33] : memref<10x200x512xbf16, #tpu.memory_space<vmem>>, vector<1x200x512xbf16>
    %53 = vector.shape_cast %52 : vector<1x200x512xbf16> to vector<200x512xbf16>
    %cst_34 = arith.constant dense<0.000000e+00> : vector<16x512xf32>
    %54 = tpu.matmul %51, %53, %cst_34 {dimension_numbers = #tpu.dot_dimension_numbers<[1], [0], [0], [1], [0, 0, 1, 1], [], []>} : vector<16x200xbf16>, vector<200x512xbf16>, vector<16x512xf32> -> vector<16x512xf32>
    %55 = arith.addf %50, %54 : vector<16x512xf32>
    %56 = vector.extract_strided_slice %36 {offsets = [64, 0], sizes = [16, 200], strides = [1, 1]} : vector<160x200xbf16> to vector<16x200xbf16>
    %c4 = arith.constant 4 : index
    %c0_35 = arith.constant 0 : index
    %c0_36 = arith.constant 0 : index
    %57 = vector.load %arg6[%c4, %c0_35, %c0_36] : memref<10x200x512xbf16, #tpu.memory_space<vmem>>, vector<1x200x512xbf16>
    %58 = vector.shape_cast %57 : vector<1x200x512xbf16> to vector<200x512xbf16>
    %cst_37 = arith.constant dense<0.000000e+00> : vector<16x512xf32>
    %59 = tpu.matmul %56, %58, %cst_37 {dimension_numbers = #tpu.dot_dimension_numbers<[1], [0], [0], [1], [0, 0, 1, 1], [], []>} : vector<16x200xbf16>, vector<200x512xbf16>, vector<16x512xf32> -> vector<16x512xf32>
    %60 = arith.addf %55, %59 : vector<16x512xf32>
    %61 = vector.extract_strided_slice %36 {offsets = [80, 0], sizes = [16, 200], strides = [1, 1]} : vector<160x200xbf16> to vector<16x200xbf16>
    %c5 = arith.constant 5 : index
    %c0_38 = arith.constant 0 : index
    %c0_39 = arith.constant 0 : index
    %62 = vector.load %arg6[%c5, %c0_38, %c0_39] : memref<10x200x512xbf16, #tpu.memory_space<vmem>>, vector<1x200x512xbf16>
    %63 = vector.shape_cast %62 : vector<1x200x512xbf16> to vector<200x512xbf16>
    %cst_40 = arith.constant dense<0.000000e+00> : vector<16x512xf32>
    %64 = tpu.matmul %61, %63, %cst_40 {dimension_numbers = #tpu.dot_dimension_numbers<[1], [0], [0], [1], [0, 0, 1, 1], [], []>} : vector<16x200xbf16>, vector<200x512xbf16>, vector<16x512xf32> -> vector<16x512xf32>
    %65 = arith.addf %60, %64 : vector<16x512xf32>
    %66 = vector.extract_strided_slice %36 {offsets = [96, 0], sizes = [16, 200], strides = [1, 1]} : vector<160x200xbf16> to vector<16x200xbf16>
    %c6 = arith.constant 6 : index
    %c0_41 = arith.constant 0 : index
    %c0_42 = arith.constant 0 : index
    %67 = vector.load %arg6[%c6, %c0_41, %c0_42] : memref<10x200x512xbf16, #tpu.memory_space<vmem>>, vector<1x200x512xbf16>
    %68 = vector.shape_cast %67 : vector<1x200x512xbf16> to vector<200x512xbf16>
    %cst_43 = arith.constant dense<0.000000e+00> : vector<16x512xf32>
    %69 = tpu.matmul %66, %68, %cst_43 {dimension_numbers = #tpu.dot_dimension_numbers<[1], [0], [0], [1], [0, 0, 1, 1], [], []>} : vector<16x200xbf16>, vector<200x512xbf16>, vector<16x512xf32> -> vector<16x512xf32>
    %70 = arith.addf %65, %69 : vector<16x512xf32>
    %71 = vector.extract_strided_slice %36 {offsets = [112, 0], sizes = [16, 200], strides = [1, 1]} : vector<160x200xbf16> to vector<16x200xbf16>
    %c7 = arith.constant 7 : index
    %c0_44 = arith.constant 0 : index
    %c0_45 = arith.constant 0 : index
    %72 = vector.load %arg6[%c7, %c0_44, %c0_45] : memref<10x200x512xbf16, #tpu.memory_space<vmem>>, vector<1x200x512xbf16>
    %73 = vector.shape_cast %72 : vector<1x200x512xbf16> to vector<200x512xbf16>
    %cst_46 = arith.constant dense<0.000000e+00> : vector<16x512xf32>
    %74 = tpu.matmul %71, %73, %cst_46 {dimension_numbers = #tpu.dot_dimension_numbers<[1], [0], [0], [1], [0, 0, 1, 1], [], []>} : vector<16x200xbf16>, vector<200x512xbf16>, vector<16x512xf32> -> vector<16x512xf32>
    %75 = arith.addf %70, %74 : vector<16x512xf32>
    %76 = vector.extract_strided_slice %36 {offsets = [128, 0], sizes = [16, 200], strides = [1, 1]} : vector<160x200xbf16> to vector<16x200xbf16>
    %c8 = arith.constant 8 : index
    %c0_47 = arith.constant 0 : index
    %c0_48 = arith.constant 0 : index
    %77 = vector.load %arg6[%c8, %c0_47, %c0_48] : memref<10x200x512xbf16, #tpu.memory_space<vmem>>, vector<1x200x512xbf16>
    %78 = vector.shape_cast %77 : vector<1x200x512xbf16> to vector<200x512xbf16>
    %cst_49 = arith.constant dense<0.000000e+00> : vector<16x512xf32>
    %79 = tpu.matmul %76, %78, %cst_49 {dimension_numbers = #tpu.dot_dimension_numbers<[1], [0], [0], [1], [0, 0, 1, 1], [], []>} : vector<16x200xbf16>, vector<200x512xbf16>, vector<16x512xf32> -> vector<16x512xf32>
    %80 = arith.addf %75, %79 : vector<16x512xf32>
    %81 = vector.extract_strided_slice %36 {offsets = [144, 0], sizes = [16, 200], strides = [1, 1]} : vector<160x200xbf16> to vector<16x200xbf16>
    %c9 = arith.constant 9 : index
    %c0_50 = arith.constant 0 : index
    %c0_51 = arith.constant 0 : index
    %82 = vector.load %arg6[%c9, %c0_50, %c0_51] : memref<10x200x512xbf16, #tpu.memory_space<vmem>>, vector<1x200x512xbf16>
    %83 = vector.shape_cast %82 : vector<1x200x512xbf16> to vector<200x512xbf16>
    %cst_52 = arith.constant dense<0.000000e+00> : vector<16x512xf32>
    %84 = tpu.matmul %81, %83, %cst_52 {dimension_numbers = #tpu.dot_dimension_numbers<[1], [0], [0], [1], [0, 0, 1, 1], [], []>} : vector<16x200xbf16>, vector<200x512xbf16>, vector<16x512xf32> -> vector<16x512xf32>
    %85 = arith.addf %80, %84 : vector<16x512xf32>
    %c0_53 = arith.constant 0 : index
    %c0_54 = arith.constant 0 : index
    %86 = vector.load %arg7[%c0_53, %c0_54] : memref<1x512xf32, #tpu.memory_space<vmem>>, vector<1x512xf32>
    %87 = vector.broadcast %86 : vector<1x512xf32> to vector<16x512xf32>
    %88 = arith.addf %85, %87 : vector<16x512xf32>
    %cst_55 = arith.constant 0.000000e+00 : f32
    %89 = vector.broadcast %cst_55 : f32 to vector<16x512xf32>
    %90 = arith.maximumf %88, %89 : vector<16x512xf32>
    %91 = arith.truncf %90 : vector<16x512xf32> to vector<16x512xbf16>
    %c0_56 = arith.constant 0 : index
    %c0_57 = arith.constant 0 : index
    %92 = vector.load %arg8[%c0_56, %c0_57] : memref<512x128xbf16, #tpu.memory_space<vmem>>, vector<512x128xbf16>
    %cst_58 = arith.constant dense<0.000000e+00> : vector<16x128xf32>
    %93 = tpu.matmul %91, %92, %cst_58 {dimension_numbers = #tpu.dot_dimension_numbers<[1], [0], [0], [1], [0, 0, 1, 1], [], []>} : vector<16x512xbf16>, vector<512x128xbf16>, vector<16x128xf32> -> vector<16x128xf32>
    %c0_59 = arith.constant 0 : index
    %c0_60 = arith.constant 0 : index
    %94 = vector.load %arg9[%c0_59, %c0_60] : memref<1x128xf32, #tpu.memory_space<vmem>>, vector<1x128xf32>
    %95 = vector.broadcast %94 : vector<1x128xf32> to vector<16x128xf32>
    %96 = arith.addf %93, %95 : vector<16x128xf32>
    %cst_61 = arith.constant dense<0xFF800000> : vector<16xf32>
    %97 = vector.multi_reduction <maximumf>, %96, %cst_61 [1] : vector<16x128xf32> to vector<16xf32>
    %98 = vector.shape_cast %97 : vector<16xf32> to vector<16x1xf32>
    %99 = vector.broadcast %98 : vector<16x1xf32> to vector<16x128xf32>
    %100 = arith.subf %96, %99 : vector<16x128xf32>
    %101 = math.exp %100 : vector<16x128xf32>
    %cst_62 = arith.constant dense<0.000000e+00> : vector<16xf32>
    %102 = vector.multi_reduction <add>, %101, %cst_62 [1] : vector<16x128xf32> to vector<16xf32>
    %103 = vector.shape_cast %102 : vector<16xf32> to vector<16x1xf32>
    %104 = math.log %103 : vector<16x1xf32>
    %105 = vector.broadcast %104 : vector<16x1xf32> to vector<16x128xf32>
    %106 = arith.subf %100, %105 : vector<16x128xf32>
    %c0_63 = arith.constant 0 : index
    %c0_64 = arith.constant 0 : index
    %107 = vector.load %arg10[%c0_63, %c0_64] : memref<16x128xf32, #tpu.memory_space<vmem>>, vector<16x128xf32>
    tpu.vector_store %arg10[%c0_63, %c0_64], %106 {strides = array<i32>} : memref<16x128xf32, #tpu.memory_space<vmem>>, vector<16x128xf32>,
    return
  }
  func.func @transform_0(%arg0: i32) -> (i32, i32, i32) {
    %c0_i32 = arith.constant 0 : i32
    %c0_i32_0 = arith.constant 0 : i32
    %c0_i32_1 = arith.constant 0 : i32
    return %c0_i32, %arg0, %c0_i32_0 : i32, i32, i32
  }
  func.func @transform_1(%arg0: i32) -> (i32, i32) {
    %c0_i32 = arith.constant 0 : i32
    %c0_i32_0 = arith.constant 0 : i32
    %c0_i32_1 = arith.constant 0 : i32
    return %c0_i32, %c0_i32_0 : i32, i32
  }
  func.func @transform_2(%arg0: i32) -> (i32, i32) {
    %c0_i32 = arith.constant 0 : i32
    %c0_i32_0 = arith.constant 0 : i32
    %c0_i32_1 = arith.constant 0 : i32
    return %c0_i32, %c0_i32_0 : i32, i32
  }
  func.func @transform_3(%arg0: i32) -> (i32, i32, i32) {
    %c0_i32 = arith.constant 0 : i32
    %c0_i32_0 = arith.constant 0 : i32
    %c0_i32_1 = arith.constant 0 : i32
    %c0_i32_2 = arith.constant 0 : i32
    return %c0_i32, %c0_i32_0, %c0_i32_1 : i32, i32, i32
  }
  func.func @transform_4(%arg0: i32) -> (i32, i32) {
    %c0_i32 = arith.constant 0 : i32
    %c0_i32_0 = arith.constant 0 : i32
    %c0_i32_1 = arith.constant 0 : i32
    return %c0_i32, %c0_i32_0 : i32, i32
  }
  func.func @transform_5(%arg0: i32) -> (i32, i32, i32) {
    %c0_i32 = arith.constant 0 : i32
    %c0_i32_0 = arith.constant 0 : i32
    %c0_i32_1 = arith.constant 0 : i32
    %c0_i32_2 = arith.constant 0 : i32
    return %c0_i32, %c0_i32_0, %c0_i32_1 : i32, i32, i32
  }
  func.func @transform_6(%arg0: i32) -> (i32, i32) {
    %c0_i32 = arith.constant 0 : i32
    %c0_i32_0 = arith.constant 0 : i32
    %c0_i32_1 = arith.constant 0 : i32
    return %c0_i32, %c0_i32_0 : i32, i32
  }
  func.func @transform_7(%arg0: i32) -> (i32, i32) {
    %c0_i32 = arith.constant 0 : i32
    %c0_i32_0 = arith.constant 0 : i32
    %c0_i32_1 = arith.constant 0 : i32
    return %c0_i32, %c0_i32_0 : i32, i32
  }
  func.func @transform_8(%arg0: i32) -> (i32, i32) {
    %c0_i32 = arith.constant 0 : i32
    %c0_i32_0 = arith.constant 0 : i32
    %c0_i32_1 = arith.constant 0 : i32
    return %c0_i32, %c0_i32_0 : i32, i32
  }
  func.func @transform_9(%arg0: i32) -> (i32, i32) {
    %c0_i32 = arith.constant 0 : i32
    %c0_i32_0 = arith.constant 0 : i32
    return %arg0, %c0_i32 : i32, i32
  }
}

</mosaic_0001>

<llo_original>
// kernel: net_forward.1
$region0: #{net_forward.1}
  #allocation0 [shape = 'u32[]', space=smem, size = 0x4, offset = 0x4, fixed_abs, tag = 'smem constant byte address 0x4 - core index']
  #allocation1 [shape = 'u32[144,128]{1,0:T(1,128)}', space=vmem, size = 0x12000, scoped, tag = 'internal scratch']
  %s0 = inlined_call_operand.vmem [shape: bf16[12,16,168], index: 0, kind: input, shape index: {}]
  %s1 = inlined_call_operand.hbm [shape: bf16[168,512], index: 1, kind: input, shape index: {}]
  %s2 = inlined_call_operand.hbm [shape: f32[1,128], index: 2, kind: input, shape index: {}]
  %s3 = inlined_call_operand.vmem [shape: bf16[3,128,200], index: 3, kind: input, shape index: {}]
  %s4 = inlined_call_operand.hbm [shape: f32[1,200], index: 4, kind: input, shape index: {}]
  %s5 = inlined_call_operand.hbm [shape: bf16[10,200,512], index: 5, kind: input, shape index: {}]
  %s6 = inlined_call_operand.hbm [shape: f32[1,512], index: 6, kind: input, shape index: {}]
  %s7 = inlined_call_operand.hbm [shape: bf16[512,128], index: 7, kind: input, shape index: {}]
  %s8 = inlined_call_operand.hbm [shape: f32[1,128], index: 8, kind: input, shape index: {}]
  %s9 = inlined_call_operand.vmem [shape: f32[16,128], index: 9, kind: output, shape index: {}]
  %s10 = sld [smem:[#allocation0]]
  $region74: #{net_forward.1} parent=0
    _
  %s12 = ssub.s32 1, %s10
  %s13 = scalar_select 0, %s12, %s10
  $region1: #{net_forward.1} parent=0
    #allocation2 [shape = 'u8[172032]{0}', space=vmem, size = 0x2a000, scoped, tag = 'input window, operand 1, single buffered']
    #allocation3 [shape = 's32[1]{0}', space=sflag, size = 0x4, scoped, tag = 'scoped memory for net_forward.1']
    #allocation4 [shape = 'u8[512]{0}', space=vmem, size = 0x400, scoped, tag = 'input window, operand 2, single buffered']
    #allocation5 [shape = 's32[1]{0}', space=sflag, size = 0x4, scoped, tag = 'scoped memory for net_forward.1']
    #allocation6 [shape = 'u8[1024]{0}', space=vmem, size = 0x400, scoped, tag = 'input window, operand 4, single buffered']
    #allocation7 [shape = 'u8[2048000]{0}', space=vmem, size = 0x1f4000, scoped, tag = 'input window, operand 5, single buffered']
    #allocation8 [shape = 's32[1]{0}', space=sflag, size = 0x4, scoped, tag = 'scoped memory for net_forward.1']
    #allocation9 [shape = 'u8[2048]{0}', space=vmem, size = 0x800, scoped, tag = 'input window, operand 6, single buffered']
    #allocation10 [shape = 'u8[131072]{0}', space=vmem, size = 0x20000, scoped, tag = 'input window, operand 7, single buffered']
    #allocation11 [shape = 's32[1]{0}', space=sflag, size = 0x4, scoped, tag = 'scoped memory for net_forward.1']
    #allocation12 [shape = 'u8[512]{0}', space=vmem, size = 0x400, scoped, tag = 'input window, operand 8, single buffered']
    %14 = vsyncpa [#allocation3], 0
    %15 = vsyncpa [#allocation5], 0
    %16 = vsyncpa [#allocation8], 0
    %17 = vsyncpa [#allocation11], 0
    // Predicated region
    $region2: #{net_forward.1} parent=1 // pred_check
      _
    $region3: #{net_forward.1} parent=1 // pred_check_branch
      %19 = sbr.rel (0) target = $region5
    $region4: #{net_forward.1} parent=1 // pred_region
      _
    $region5: #{net_forward.1} parent=1 // pred_fallthru
      _
    // Predicated region
    $region6: #{net_forward.1} parent=1 // pred_check
      _
    $region7: #{net_forward.1} parent=1 // pred_check_branch
      %21 = sbr.rel (0) target = $region9
    $region8: #{net_forward.1} parent=1 // pred_region
      %s23 = ssub.s32 5376, 5376
      %24 = vsyncadd [#allocation3], %s23
      %s25 = sshll.u32 [#allocation2], 4
      %s26 = int_to_ptr.vmem [resolvable:$true] %s25
      %31 = dma.hbm_to_vmem [thread:$0]  %s1, 5376, %s26, [#allocation3], 256, 256, 16
    $region9: #{net_forward.1} parent=1 // pred_fallthru
      _
    // Predicated region
    $region10: #{net_forward.1} parent=1 // pred_check
      _
    $region11: #{net_forward.1} parent=1 // pred_check_branch
      %33 = sbr.rel (0) target = $region13
    $region12: #{net_forward.1} parent=1 // pred_region
      %s35 = ssub.s32 16, 16
      %36 = vsyncadd [#allocation5], %s35
      %s38 = sshll.u32 [#allocation4], 4
      %s39 = int_to_ptr.vmem [resolvable:$true] %s38
      %41 = dma.hbm_to_vmem [thread:$0]  %s2, 16, %s39, [#allocation5]
    $region13: #{net_forward.1} parent=1 // pred_fallthru
      _
    // Predicated region
    $region14: #{net_forward.1} parent=1 // pred_check
      _
    $region15: #{net_forward.1} parent=1 // pred_check_branch
      %43 = sbr.rel (0) target = $region17
    $region16: #{net_forward.1} parent=1 // pred_region
      _
    $region17: #{net_forward.1} parent=1 // pred_fallthru
      _
    // Predicated region
    $region18: #{net_forward.1} parent=1 // pred_check
      _
    $region19: #{net_forward.1} parent=1 // pred_check_branch
      %45 = sbr.rel (0) target = $region21
    $region20: #{net_forward.1} parent=1 // pred_region
      %s47 = ssub.s32 32, 32
      %48 = vsyncadd [#allocation5], %s47
      %s50 = sshll.u32 [#allocation6], 4
      %s51 = int_to_ptr.vmem [resolvable:$true] %s50
      %53 = dma.hbm_to_vmem [thread:$0]  %s4, 32, %s51, [#allocation5]
    $region21: #{net_forward.1} parent=1 // pred_fallthru
      _
    // Predicated region
    $region22: #{net_forward.1} parent=1 // pred_check
      _
    $region23: #{net_forward.1} parent=1 // pred_check_branch
      %55 = sbr.rel (0) target = $region25
    $region24: #{net_forward.1} parent=1 // pred_region
      %s57 = ssub.s32 64000, 64000
      %58 = vsyncadd [#allocation8], %s57
      %s59 = sshll.u32 [#allocation7], 4
      %s60 = int_to_ptr.vmem [resolvable:$true] %s59
      %65 = dma.hbm_to_vmem [thread:$0]  %s5, 64000, %s60, [#allocation8], 256, 256, 16
    $region25: #{net_forward.1} parent=1 // pred_fallthru
      _
    // Predicated region
    $region26: #{net_forward.1} parent=1 // pred_check
      _
    $region27: #{net_forward.1} parent=1 // pred_check_branch
      %67 = sbr.rel (0) target = $region29
    $region28: #{net_forward.1} parent=1 // pred_region
      %s69 = ssub.s32 64, 64
      %70 = vsyncadd [#allocation8], %s69
      %s72 = sshll.u32 [#allocation9], 4
      %s73 = int_to_ptr.vmem [resolvable:$true] %s72
      %75 = dma.hbm_to_vmem [thread:$0]  %s6, 64, %s73, [#allocation8]
    $region29: #{net_forward.1} parent=1 // pred_fallthru
      _
    // Predicated region
    $region30: #{net_forward.1} parent=1 // pred_check
      _
    $region31: #{net_forward.1} parent=1 // pred_check_branch
      %77 = sbr.rel (0) target = $region33
    $region32: #{net_forward.1} parent=1 // pred_region
      %s79 = ssub.s32 4096, 4096
      %80 = vsyncadd [#allocation11], %s79
      %s81 = sshll.u32 [#allocation10], 4
      %s82 = int_to_ptr.vmem [resolvable:$true] %s81
      %87 = dma.hbm_to_vmem [thread:$0]  %s7, 4096, %s82, [#allocation11], 64, 64, 4
    $region33: #{net_forward.1} parent=1 // pred_fallthru
      _
    // Predicated region
    $region34: #{net_forward.1} parent=1 // pred_check
      _
    $region35: #{net_forward.1} parent=1 // pred_check_branch
      %89 = sbr.rel (0) target = $region37
    $region36: #{net_forward.1} parent=1 // pred_region
      %s91 = ssub.s32 16, 16
      %92 = vsyncadd [#allocation11], %s91
      %s94 = sshll.u32 [#allocation12], 4
      %s95 = int_to_ptr.vmem [resolvable:$true] %s94
      %97 = dma.hbm_to_vmem [thread:$0]  %s8, 16, %s95, [#allocation11]
    $region37: #{net_forward.1} parent=1 // pred_fallthru
      _
    // Predicated region
    $region38: #{net_forward.1} parent=1 // pred_check
      _
    $region39: #{net_forward.1} parent=1 // pred_check_branch
      %99 = sbr.rel (0) target = $region41
    $region40: #{net_forward.1} parent=1 // pred_region
      %100 = dma.done [#allocation3], 5376
    $region41: #{net_forward.1} parent=1 // pred_fallthru
      _
    // Predicated region
    $region42: #{net_forward.1} parent=1 // pred_check
      _
    $region43: #{net_forward.1} parent=1 // pred_check_branch
      %102 = sbr.rel (0) target = $region45
    $region44: #{net_forward.1} parent=1 // pred_region
      %103 = dma.done [#allocation5], 16
    $region45: #{net_forward.1} parent=1 // pred_fallthru
      _
    // Predicated region
    $region46: #{net_forward.1} parent=1 // pred_check
      _
    $region47: #{net_forward.1} parent=1 // pred_check_branch
      %105 = sbr.rel (0) target = $region49
    $region48: #{net_forward.1} parent=1 // pred_region
      %106 = dma.done [#allocation5], 32
    $region49: #{net_forward.1} parent=1 // pred_fallthru
      _
    // Predicated region
    $region50: #{net_forward.1} parent=1 // pred_check
      _
    $region51: #{net_forward.1} parent=1 // pred_check_branch
      %108 = sbr.rel (0) target = $region53
    $region52: #{net_forward.1} parent=1 // pred_region
      %109 = dma.done [#allocation8], 64000
    $region53: #{net_forward.1} parent=1 // pred_fallthru
      _
    // Predicated region
    $region54: #{net_forward.1} parent=1 // pred_check
      _
    $region55: #{net_forward.1} parent=1 // pred_check_branch
      %111 = sbr.rel (0) target = $region57
    $region56: #{net_forward.1} parent=1 // pred_region
      %112 = dma.done [#allocation8], 64
    $region57: #{net_forward.1} parent=1 // pred_fallthru
      _
    // Predicated region
    $region58: #{net_forward.1} parent=1 // pred_check
      _
    $region59: #{net_forward.1} parent=1 // pred_check_branch
      %114 = sbr.rel (0) target = $region61
    $region60: #{net_forward.1} parent=1 // pred_region
      %115 = dma.done [#allocation11], 4096
    $region61: #{net_forward.1} parent=1 // pred_fallthru
      _
    // Predicated region
    $region62: #{net_forward.1} parent=1 // pred_check
      _
    $region63: #{net_forward.1} parent=1 // pred_check_branch
      %117 = sbr.rel (0) target = $region65
    $region64: #{net_forward.1} parent=1 // pred_region
      %118 = dma.done [#allocation11], 16
    $region65: #{net_forward.1} parent=1 // pred_fallthru
      _
    %v120 = vld [vmem:[%s0] sm:$0xff]
    %v121 = vld [vmem:[%s0 + $0x8] sm:$0xff]
    %v122 = vld [vmem:[%s0 + $0x10] sm:$0xff]
    %v123 = vld [vmem:[%s0 + $0x18] sm:$0xff]
    %v124 = vld [vmem:[%s0 + $0x20] sm:$0xff]
    %v125 = vld [vmem:[%s0 + $0x28] sm:$0xff]
    %v126 = vld [vmem:[%s0 + $0x30] sm:$0xff]
    %v127 = vld [vmem:[%s0 + $0x38] sm:$0xff]
    %v128 = vld [vmem:[%s0 + $0x40] sm:$0xff]
    %v129 = vld [vmem:[%s0 + $0x48] sm:$0xff]
    %v130 = vld [vmem:[%s0 + $0x50] sm:$0xff]
    %v131 = vld [vmem:[%s0 + $0x58] sm:$0xff]
    %v132 = vld [vmem:[%s0 + $0x60] sm:$0xff]
    %v133 = vld [vmem:[%s0 + $0x68] sm:$0xff]
    %v134 = vld [vmem:[%s0 + $0x70] sm:$0xff]
    %v135 = vld [vmem:[%s0 + $0x78] sm:$0xff]
    %v136 = vld [vmem:[%s0 + $0x80] sm:$0xff]
    %v137 = vld [vmem:[%s0 + $0x88] sm:$0xff]
    %v138 = vld [vmem:[%s0 + $0x90] sm:$0xff]
    %v139 = vld [vmem:[%s0 + $0x98] sm:$0xff]
    %v140 = vld [vmem:[%s0 + $0xa0] sm:$0xff]
    %v141 = vld [vmem:[%s0 + $0xa8] sm:$0xff]
    %v142 = vld [vmem:[%s0 + $0xb0] sm:$0xff]
    %v143 = vld [vmem:[%s0 + $0xb8] sm:$0xff]
    %v144 = vld [vmem:[#allocation2] sm:$0xff]
    %v145 = vld [vmem:[#allocation2 + $0x8] sm:$0xff]
    %v146 = vld [vmem:[#allocation2 + $0x10] sm:$0xff]
    %v147 = vld [vmem:[#allocation2 + $0x18] sm:$0xff]
    %v148 = vld [vmem:[#allocation2 + $0x20] sm:$0xff]
    %v149 = vld [vmem:[#allocation2 + $0x28] sm:$0xff]
    %v150 = vld [vmem:[#allocation2 + $0x30] sm:$0xff]
    %v151 = vld [vmem:[#allocation2 + $0x38] sm:$0xff]
    %v152 = vld [vmem:[#allocation2 + $0x40] sm:$0xff]
    %v153 = vld [vmem:[#allocation2 + $0x48] sm:$0xff]
    %v154 = vld [vmem:[#allocation2 + $0x50] sm:$0xff]
    %v155 = vld [vmem:[#allocation2 + $0x58] sm:$0xff]
    %v156 = vld [vmem:[#allocation2 + $0x60] sm:$0xff]
    %v157 = vld [vmem:[#allocation2 + $0x68] sm:$0xff]
    %v158 = vld [vmem:[#allocation2 + $0x70] sm:$0xff]
    %v159 = vld [vmem:[#allocation2 + $0x78] sm:$0xff]
    %v160 = vld [vmem:[#allocation2 + $0x80] sm:$0xff]
    %v161 = vld [vmem:[#allocation2 + $0x88] sm:$0xff]
    %v162 = vld [vmem:[#allocation2 + $0x90] sm:$0xff]
    %v163 = vld [vmem:[#allocation2 + $0x98] sm:$0xff]
    %v164 = vld [vmem:[#allocation2 + $0xa0] sm:$0xff]
    %v165 = vld [vmem:[#allocation2 + $0xa8] sm:$0xff]
    %v166 = vld [vmem:[#allocation2 + $0xb0] sm:$0xff]
    %v167 = vld [vmem:[#allocation2 + $0xb8] sm:$0xff]
    %v168 = vld [vmem:[#allocation2 + $0xc0] sm:$0xff]
    %v169 = vld [vmem:[#allocation2 + $0xc8] sm:$0xff]
    %v170 = vld [vmem:[#allocation2 + $0xd0] sm:$0xff]
    %v171 = vld [vmem:[#allocation2 + $0xd8] sm:$0xff]
    %v172 = vld [vmem:[#allocation2 + $0xe0] sm:$0xff]
    %v173 = vld [vmem:[#allocation2 + $0xe8] sm:$0xff]
    %v174 = vld [vmem:[#allocation2 + $0xf0] sm:$0xff]
    %v175 = vld [vmem:[#allocation2 + $0xf8] sm:$0xff]
    %v176 = vld [vmem:[#allocation2 + $0x100] sm:$0xff]
    %v177 = vld [vmem:[#allocation2 + $0x108] sm:$0xff]
    %v178 = vld [vmem:[#allocation2 + $0x110] sm:$0xff]
    %v179 = vld [vmem:[#allocation2 + $0x118] sm:$0xff]
    %v180 = vld [vmem:[#allocation2 + $0x120] sm:$0xff]
    %v181 = vld [vmem:[#allocation2 + $0x128] sm:$0xff]
    %v182 = vld [vmem:[#allocation2 + $0x130] sm:$0xff]
    %v183 = vld [vmem:[#allocation2 + $0x138] sm:$0xff]
    %v184 = vld [vmem:[#allocation2 + $0x140] sm:$0xff]
    %v185 = vld [vmem:[#allocation2 + $0x148] sm:$0xff]
    %v210 = vunpack.c.l.b16 %v120
    %v211 = vunpack.c.h.b16 %v120
    %v212 = vunpack.c.l.b16 %v121
    %v213 = vunpack.c.h.b16 %v121
    %v214 = vunpack.c.l.b16 %v122
    %v215 = vunpack.c.h.b16 %v122
    %v216 = vunpack.c.l.b16 %v123
    %v217 = vunpack.c.h.b16 %v123
    %v218 = vunpack.c.l.b16 %v124
    %v219 = vunpack.c.h.b16 %v124
    %v220 = vunpack.c.l.b16 %v125
    %v221 = vunpack.c.h.b16 %v125
    %v222 = vunpack.c.l.b16 %v126
    %v223 = vunpack.c.h.b16 %v126
    %v224 = vunpack.c.l.b16 %v127
    %v225 = vunpack.c.h.b16 %v127
    %v226 = vunpack.c.l.b16 %v128
    %v227 = vunpack.c.h.b16 %v128
    %v228 = vunpack.c.l.b16 %v129
    %v229 = vunpack.c.h.b16 %v129
    %v230 = vunpack.c.l.b16 %v130
    %v231 = vunpack.c.h.b16 %v130
    %v232 = vunpack.c.l.b16 %v131
    %v233 = vunpack.c.h.b16 %v131
    %v234 = vunpack.c.l.b16 %v132
    %v235 = vunpack.c.h.b16 %v132
    %v236 = vunpack.c.l.b16 %v133
    %v237 = vunpack.c.h.b16 %v133
    %v238 = vunpack.c.l.b16 %v134
    %v239 = vunpack.c.h.b16 %v134
    %v240 = vunpack.c.l.b16 %v135
    %v241 = vunpack.c.h.b16 %v135
    %v242 = vunpack.c.l.b16 %v136
    %v243 = vunpack.c.h.b16 %v136
    %v244 = vunpack.c.l.b16 %v137
    %v245 = vunpack.c.h.b16 %v137
    %v246 = vunpack.c.l.b16 %v138
    %v247 = vunpack.c.h.b16 %v138
    %v248 = vunpack.c.l.b16 %v139
    %v249 = vunpack.c.h.b16 %v139
    %v250 = vunpack.c.l.b16 %v140
    %v251 = vunpack.c.h.b16 %v140
    %v252 = vunpack.c.l.b16 %v141
    %v253 = vunpack.c.h.b16 %v141
    %v254 = vunpack.c.l.b16 %v142
    %v255 = vunpack.c.h.b16 %v142
    %v256 = vunpack.c.l.b16 %v143
    %v257 = vunpack.c.h.b16 %v143
    %v258 = vpack.c.b16 %v212, %v210
    %v259 = vpack.c.b16 %v213, %v211
    %v260 = vpack.c.b16 %v216, %v214
    %v261 = vpack.c.b16 %v217, %v215
    %v262 = vpack.c.b16 %v220, %v218
    %v263 = vpack.c.b16 %v221, %v219
    %v264 = vpack.c.b16 %v224, %v222
    %v265 = vpack.c.b16 %v225, %v223
    %v266 = vpack.c.b16 %v228, %v226
    %v267 = vpack.c.b16 %v229, %v227
    %v268 = vpack.c.b16 %v232, %v230
    %v269 = vpack.c.b16 %v233, %v231
    %v270 = vpack.c.b16 %v236, %v234
    %v271 = vpack.c.b16 %v237, %v235
    %v272 = vpack.c.b16 %v240, %v238
    %v273 = vpack.c.b16 %v241, %v239
    %v274 = vpack.c.b16 %v244, %v242
    %v275 = vpack.c.b16 %v245, %v243
    %v276 = vpack.c.b16 %v248, %v246
    %v277 = vpack.c.b16 %v249, %v247
    %v278 = vpack.c.b16 %v252, %v250
    %v279 = vpack.c.b16 %v253, %v251
    %v280 = vpack.c.b16 %v256, %v254
    %v281 = vpack.c.b16 %v257, %v255
    %v336 = vunpack.c.l.b16 %v144
    %v337 = vunpack.c.h.b16 %v144
    %v338 = vunpack.c.l.b16 %v145
    %v339 = vunpack.c.h.b16 %v145
    %v340 = vunpack.c.l.b16 %v146
    %v341 = vunpack.c.h.b16 %v146
    %v342 = vunpack.c.l.b16 %v147
    %v343 = vunpack.c.h.b16 %v147
    %v344 = vunpack.c.l.b16 %v148
    %v345 = vunpack.c.h.b16 %v148
    %v346 = vunpack.c.l.b16 %v149
    %v347 = vunpack.c.h.b16 %v149
    %v348 = vunpack.c.l.b16 %v150
    %v349 = vunpack.c.h.b16 %v150
    %v350 = vunpack.c.l.b16 %v151
    %v351 = vunpack.c.h.b16 %v151
    %v352 = vunpack.c.l.b16 %v152
    %v353 = vunpack.c.h.b16 %v152
    %v354 = vunpack.c.l.b16 %v153
    %v355 = vunpack.c.h.b16 %v153
    %v356 = vunpack.c.l.b16 %v154
    %v357 = vunpack.c.h.b16 %v154
    %v358 = vunpack.c.l.b16 %v155
    %v359 = vunpack.c.h.b16 %v155
    %v360 = vunpack.c.l.b16 %v156
    %v361 = vunpack.c.h.b16 %v156
    %v362 = vunpack.c.l.b16 %v157
    %v363 = vunpack.c.h.b16 %v157
    %v364 = vunpack.c.l.b16 %v158
    %v365 = vunpack.c.h.b16 %v158
    %v366 = vunpack.c.l.b16 %v159
    %v367 = vunpack.c.h.b16 %v159
    %v368 = vunpack.c.l.b16 %v160
    %v369 = vunpack.c.h.b16 %v160
    %v370 = vunpack.c.l.b16 %v161
    %v371 = vunpack.c.h.b16 %v161
    %v372 = vunpack.c.l.b16 %v162
    %v373 = vunpack.c.h.b16 %v162
    %v374 = vunpack.c.l.b16 %v163
    %v375 = vunpack.c.h.b16 %v163
    %v376 = vunpack.c.l.b16 %v164
    %v377 = vunpack.c.h.b16 %v164
    %v378 = vunpack.c.l.b16 %v165
    %v379 = vunpack.c.h.b16 %v165
    %v380 = vunpack.c.l.b16 %v166
    %v381 = vunpack.c.h.b16 %v166
    %v382 = vunpack.c.l.b16 %v167
    %v383 = vunpack.c.h.b16 %v167
    %v384 = vunpack.c.l.b16 %v168
    %v385 = vunpack.c.h.b16 %v168
    %v386 = vunpack.c.l.b16 %v169
    %v387 = vunpack.c.h.b16 %v169
    %v388 = vunpack.c.l.b16 %v170
    %v389 = vunpack.c.h.b16 %v170
    %v390 = vunpack.c.l.b16 %v171
    %v391 = vunpack.c.h.b16 %v171
    %v392 = vunpack.c.l.b16 %v172
    %v393 = vunpack.c.h.b16 %v172
    %v394 = vunpack.c.l.b16 %v173
    %v395 = vunpack.c.h.b16 %v173
    %v396 = vunpack.c.l.b16 %v174
    %v397 = vunpack.c.h.b16 %v174
    %v398 = vunpack.c.l.b16 %v175
    %v399 = vunpack.c.h.b16 %v175
    %v400 = vunpack.c.l.b16 %v176
    %v401 = vunpack.c.h.b16 %v176
    %v402 = vunpack.c.l.b16 %v177
    %v403 = vunpack.c.h.b16 %v177
    %v404 = vunpack.c.l.b16 %v178
    %v405 = vunpack.c.h.b16 %v178
    %v406 = vunpack.c.l.b16 %v179
    %v407 = vunpack.c.h.b16 %v179
    %v408 = vunpack.c.l.b16 %v180
    %v409 = vunpack.c.h.b16 %v180
    %v410 = vunpack.c.l.b16 %v181
    %v411 = vunpack.c.h.b16 %v181
    %v412 = vunpack.c.l.b16 %v182
    %v413 = vunpack.c.h.b16 %v182
    %v414 = vunpack.c.l.b16 %v183
    %v415 = vunpack.c.h.b16 %v183
    %v416 = vunpack.c.l.b16 %v184
    %v417 = vunpack.c.h.b16 %v184
    %v418 = vunpack.c.l.b16 %v185
    %v419 = vunpack.c.h.b16 %v185
    %v420 = vpack.c.b16 %v340, %v336
    %v421 = vpack.c.b16 %v341, %v337
    %v422 = vpack.c.b16 %v342, %v338
    %v423 = vpack.c.b16 %v343, %v339
    %v424 = vpack.c.b16 %v348, %v344
    %v425 = vpack.c.b16 %v349, %v345
    %v426 = vpack.c.b16 %v350, %v346
    %v427 = vpack.c.b16 %v351, %v347
    %v428 = vpack.c.b16 %v356, %v352
    %v429 = vpack.c.b16 %v357, %v353
    %v430 = vpack.c.b16 %v358, %v354
    %v431 = vpack.c.b16 %v359, %v355
    %v432 = vpack.c.b16 %v364, %v360
    %v433 = vpack.c.b16 %v365, %v361
    %v434 = vpack.c.b16 %v366, %v362
    %v435 = vpack.c.b16 %v367, %v363
    %v436 = vpack.c.b16 %v372, %v368
    %v437 = vpack.c.b16 %v373, %v369
    %v438 = vpack.c.b16 %v374, %v370
    %v439 = vpack.c.b16 %v375, %v371
    %v440 = vpack.c.b16 %v380, %v376
    %v441 = vpack.c.b16 %v381, %v377
    %v442 = vpack.c.b16 %v382, %v378
    %v443 = vpack.c.b16 %v383, %v379
    %v444 = vpack.c.b16 %v388, %v384
    %v445 = vpack.c.b16 %v389, %v385
    %v446 = vpack.c.b16 %v390, %v386
    %v447 = vpack.c.b16 %v391, %v387
    %v448 = vpack.c.b16 %v396, %v392
    %v449 = vpack.c.b16 %v397, %v393
    %v450 = vpack.c.b16 %v398, %v394
    %v451 = vpack.c.b16 %v399, %v395
    %v452 = vpack.c.b16 %v404, %v400
    %v453 = vpack.c.b16 %v405, %v401
    %v454 = vpack.c.b16 %v406, %v402
    %v455 = vpack.c.b16 %v407, %v403
    %v456 = vpack.c.b16 %v412, %v408
    %v457 = vpack.c.b16 %v413, %v409
    %v458 = vpack.c.b16 %v414, %v410
    %v459 = vpack.c.b16 %v415, %v411
    %v460 = vpack.c.b16 %v416, %v416
    %v461 = vpack.c.b16 %v417, %v417
    %v462 = vpack.c.b16 %v418, %v418
    %v463 = vpack.c.b16 %v419, %v419
    %vm504 = vcmask 326656
    %v506 = vsel %vm504, %v259, 0
    %v509 = vsel %vm504, %v261, 0
    %v512 = vsel %vm504, %v263, 0
    %v515 = vsel %vm504, %v265, 0
    %v518 = vsel %vm504, %v267, 0
    %v521 = vsel %vm504, %v269, 0
    %v524 = vsel %vm504, %v271, 0
    %v527 = vsel %vm504, %v273, 0
    %v530 = vsel %vm504, %v275, 0
    %v533 = vsel %vm504, %v277, 0
    %v536 = vsel %vm504, %v279, 0
    %v539 = vsel %vm504, %v281, 0
    %vm541 = vcmask 1043456
    %v543 = vsel %vm541, %v460, 0
    %v546 = vsel %vm541, %v461, 0
    %v549 = vsel %vm541, %v462, 0
    %v552 = vsel %vm541, %v463, 0
    %554 = vmatprep.subr.bf16.mxu0 %v449
    %555 = vmatpush1.bf16.msra.mxu0 %v448
    %556 = vmatprep.subr.bf16.mxu0 %v445
    %557 = vmatpush1.bf16.msra.mxu0 %v444
    %558 = vmatprep.subr.bf16.mxu0 %v441
    %559 = vmatpush1.bf16.msra.mxu0 %v440
    %560 = vmatprep.subr.bf16.mxu0 %v437
    %561 = vmatpush1.bf16.msra.mxu0 %v436
    %562 = vmatprep.subr.bf16.mxu0 %v433
    %563 = vmatpush1.bf16.msra.mxu0 %v432
    %564 = vmatprep.subr.bf16.mxu0 %v429
    %565 = vmatpush1.bf16.msra.mxu0 %v428
    %566 = vmatprep.subr.bf16.mxu0 %v425
    %567 = vmatpush1.bf16.msra.mxu0 %v424
    %568 = vmatprep.subr.bf16.mxu0 %v421
    %569 = vmatpush1.bf16.msra.mxu0 %v420
    %570 = vmatprep.subr.bf16.mxu0 0
    %571 = vmatpush2.bf16.msra.mxu0 0
    %572 = vmatprep.subr.bf16.mxu0 0
    %573 = vmatpush2.bf16.msra.mxu0 0
    %574 = vmatprep.subr.bf16.mxu0 0
    %575 = vmatpush2.bf16.msra.mxu0 0
    %576 = vmatprep.subr.bf16.mxu0 0
    %577 = vmatpush2.bf16.msra.mxu0 0
    %578 = vmatprep.subr.bf16.mxu0 0
    %579 = vmatpush2.bf16.msra.mxu0 0
    %580 = vmatprep.subr.bf16.mxu0 %v546
    %581 = vmatpush2.bf16.msra.mxu0 %v543
    %582 = vmatprep.subr.bf16.mxu0 %v457
    %583 = vmatpush2.bf16.msra.mxu0 %v456
    %584 = vmatprep.subr.bf16.mxu0 %v453
    %585 = vmatpush2.bf16.msra.mxu0 %v452
    %586 = vmatprep.mubr.bf16.mxu0 %v506
    %587 = vmatmul.mubr.bf16.gmra.mxu0 %v258
    %v588 = vpop.f32.mrf.mxu0
    %v589 = vadd.f32 0.0, %v588
    %v590 = vpop.f32.mrf.mxu0
    %v591 = vadd.f32 0.0, %v590
    %v592 = vpop.f32.mrf.mxu0
    %v593 = vadd.f32 0.0, %v592
    %v594 = vpop.f32.mrf.mxu0
    %v595 = vadd.f32 0.0, %v594
    %596 = vmatprep.mubr.bf16.mxu0 %v509
    %597 = vmatmul.mubr.bf16.gmra.mxu0 %v260
    %v598 = vpop.f32.mrf.mxu0
    %v599 = vadd.f32 0.0, %v598
    %v600 = vpop.f32.mrf.mxu0
    %v601 = vadd.f32 0.0, %v600
    %v602 = vpop.f32.mrf.mxu0
    %v603 = vadd.f32 0.0, %v602
    %v604 = vpop.f32.mrf.mxu0
    %v605 = vadd.f32 0.0, %v604
    %606 = vmatprep.mubr.bf16.mxu0 %v512
    %607 = vmatmul.mubr.bf16.gmra.mxu0 %v262
    %v608 = vpop.f32.mrf.mxu0
    %v609 = vadd.f32 0.0, %v608
    %v610 = vpop.f32.mrf.mxu0
    %v611 = vadd.f32 0.0, %v610
    %v612 = vpop.f32.mrf.mxu0
    %v613 = vadd.f32 0.0, %v612
    %v614 = vpop.f32.mrf.mxu0
    %v615 = vadd.f32 0.0, %v614
    %616 = vmatprep.mubr.bf16.mxu0 %v515
    %617 = vmatmul.mubr.bf16.gmra.mxu0 %v264
    %v618 = vpop.f32.mrf.mxu0
    %v619 = vadd.f32 0.0, %v618
    %v620 = vpop.f32.mrf.mxu0
    %v621 = vadd.f32 0.0, %v620
    %v622 = vpop.f32.mrf.mxu0
    %v623 = vadd.f32 0.0, %v622
    %v624 = vpop.f32.mrf.mxu0
    %v625 = vadd.f32 0.0, %v624
    %626 = vmatprep.mubr.bf16.mxu0 %v518
    %627 = vmatmul.mubr.bf16.gmra.mxu0 %v266
    %v628 = vpop.f32.mrf.mxu0
    %v629 = vadd.f32 0.0, %v628
    %v630 = vpop.f32.mrf.mxu0
    %v631 = vadd.f32 0.0, %v630
    %v632 = vpop.f32.mrf.mxu0
    %v633 = vadd.f32 0.0, %v632
    %v634 = vpop.f32.mrf.mxu0
    %v635 = vadd.f32 0.0, %v634
    %636 = vmatprep.mubr.bf16.mxu0 %v521
    %637 = vmatmul.mubr.bf16.gmra.mxu0 %v268
    %v638 = vpop.f32.mrf.mxu0
    %v639 = vadd.f32 0.0, %v638
    %v640 = vpop.f32.mrf.mxu0
    %v641 = vadd.f32 0.0, %v640
    %v642 = vpop.f32.mrf.mxu0
    %v643 = vadd.f32 0.0, %v642
    %v644 = vpop.f32.mrf.mxu0
    %v645 = vadd.f32 0.0, %v644
    %646 = vmatprep.mubr.bf16.mxu0 %v524
    %647 = vmatmul.mubr.bf16.gmra.mxu0 %v270
    %v648 = vpop.f32.mrf.mxu0
    %v649 = vadd.f32 0.0, %v648
    %v650 = vpop.f32.mrf.mxu0
    %v651 = vadd.f32 0.0, %v650
    %v652 = vpop.f32.mrf.mxu0
    %v653 = vadd.f32 0.0, %v652
    %v654 = vpop.f32.mrf.mxu0
    %v655 = vadd.f32 0.0, %v654
    %656 = vmatprep.mubr.bf16.mxu0 %v527
    %657 = vmatmul.mubr.bf16.gmra.mxu0 %v272
    %v658 = vpop.f32.mrf.mxu0
    %v659 = vadd.f32 0.0, %v658
    %v660 = vpop.f32.mrf.mxu0
    %v661 = vadd.f32 0.0, %v660
    %v662 = vpop.f32.mrf.mxu0
    %v663 = vadd.f32 0.0, %v662
    %v664 = vpop.f32.mrf.mxu0
    %v665 = vadd.f32 0.0, %v664
    %666 = vmatprep.mubr.bf16.mxu0 %v530
    %667 = vmatmul.mubr.bf16.gmra.mxu0 %v274
    %v668 = vpop.f32.mrf.mxu0
    %v669 = vadd.f32 0.0, %v668
    %v670 = vpop.f32.mrf.mxu0
    %v671 = vadd.f32 0.0, %v670
    %v672 = vpop.f32.mrf.mxu0
    %v673 = vadd.f32 0.0, %v672
    %v674 = vpop.f32.mrf.mxu0
    %v675 = vadd.f32 0.0, %v674
    %676 = vmatprep.mubr.bf16.mxu0 %v533
    %677 = vmatmul.mubr.bf16.gmra.mxu0 %v276
    %v678 = vpop.f32.mrf.mxu0
    %v679 = vadd.f32 0.0, %v678
    %v680 = vpop.f32.mrf.mxu0
    %v681 = vadd.f32 0.0, %v680
    %v682 = vpop.f32.mrf.mxu0
    %v683 = vadd.f32 0.0, %v682
    %v684 = vpop.f32.mrf.mxu0
    %v685 = vadd.f32 0.0, %v684
    %686 = vmatprep.mubr.bf16.mxu0 %v536
    %687 = vmatmul.mubr.bf16.gmra.mxu0 %v278
    %v688 = vpop.f32.mrf.mxu0
    %v689 = vadd.f32 0.0, %v688
    %v690 = vpop.f32.mrf.mxu0
    %v691 = vadd.f32 0.0, %v690
    %v692 = vpop.f32.mrf.mxu0
    %v693 = vadd.f32 0.0, %v692
    %v694 = vpop.f32.mrf.mxu0
    %v695 = vadd.f32 0.0, %v694
    %696 = vmatprep.mubr.bf16.mxu0 %v539
    %697 = vmatmul.mubr.bf16.gmra.mxu0 %v280
    %v698 = vpop.f32.mrf.mxu0
    %v699 = vadd.f32 0.0, %v698
    %v700 = vpop.f32.mrf.mxu0
    %v701 = vadd.f32 0.0, %v700
    %v702 = vpop.f32.mrf.mxu0
    %v703 = vadd.f32 0.0, %v702
    %v704 = vpop.f32.mrf.mxu0
    %v705 = vadd.f32 0.0, %v704
    %706 = vdwg.mxu0
    %707 = vmatprep.subr.bf16.mxu0 %v451
    %708 = vmatpush1.bf16.msra.mxu0 %v450
    %709 = vmatprep.subr.bf16.mxu0 %v447
    %710 = vmatpush1.bf16.msra.mxu0 %v446
    %711 = vmatprep.subr.bf16.mxu0 %v443
    %712 = vmatpush1.bf16.msra.mxu0 %v442
    %713 = vmatprep.subr.bf16.mxu0 %v439
    %714 = vmatpush1.bf16.msra.mxu0 %v438
    %715 = vmatprep.subr.bf16.mxu0 %v435
    %716 = vmatpush1.bf16.msra.mxu0 %v434
    %717 = vmatprep.subr.bf16.mxu0 %v431
    %718 = vmatpush1.bf16.msra.mxu0 %v430
    %719 = vmatprep.subr.bf16.mxu0 %v427
    %720 = vmatpush1.bf16.msra.mxu0 %v426
    %721 = vmatprep.subr.bf16.mxu0 %v423
    %722 = vmatpush1.bf16.msra.mxu0 %v422
    %723 = vmatprep.subr.bf16.mxu0 0
    %724 = vmatpush2.bf16.msra.mxu0 0
    %725 = vmatprep.subr.bf16.mxu0 0
    %726 = vmatpush2.bf16.msra.mxu0 0
    %727 = vmatprep.subr.bf16.mxu0 0
    %728 = vmatpush2.bf16.msra.mxu0 0
    %729 = vmatprep.subr.bf16.mxu0 0
    %730 = vmatpush2.bf16.msra.mxu0 0
    %731 = vmatprep.subr.bf16.mxu0 0
    %732 = vmatpush2.bf16.msra.mxu0 0
    %733 = vmatprep.subr.bf16.mxu0 %v552
    %734 = vmatpush2.bf16.msra.mxu0 %v549
    %735 = vmatprep.subr.bf16.mxu0 %v459
    %736 = vmatpush2.bf16.msra.mxu0 %v458
    %737 = vmatprep.subr.bf16.mxu0 %v455
    %738 = vmatpush2.bf16.msra.mxu0 %v454
    %739 = vmatprep.mubr.bf16.mxu0 %v506
    %740 = vmatmul.mubr.bf16.gmra.mxu0 %v258
    %v741 = vpop.f32.mrf.mxu0
    %v742 = vadd.f32 0.0, %v741
    %v743 = vpop.f32.mrf.mxu0
    %v744 = vadd.f32 0.0, %v743
    %v745 = vpop.f32.mrf.mxu0
    %v746 = vadd.f32 0.0, %v745
    %v747 = vpop.f32.mrf.mxu0
    %v748 = vadd.f32 0.0, %v747
    %749 = vmatprep.mubr.bf16.mxu0 %v509
    %750 = vmatmul.mubr.bf16.gmra.mxu0 %v260
    %v751 = vpop.f32.mrf.mxu0
    %v752 = vadd.f32 0.0, %v751
    %v753 = vpop.f32.mrf.mxu0
    %v754 = vadd.f32 0.0, %v753
    %v755 = vpop.f32.mrf.mxu0
    %v756 = vadd.f32 0.0, %v755
    %v757 = vpop.f32.mrf.mxu0
    %v758 = vadd.f32 0.0, %v757
    %759 = vmatprep.mubr.bf16.mxu0 %v512
    %760 = vmatmul.mubr.bf16.gmra.mxu0 %v262
    %v761 = vpop.f32.mrf.mxu0
    %v762 = vadd.f32 0.0, %v761
    %v763 = vpop.f32.mrf.mxu0
    %v764 = vadd.f32 0.0, %v763
    %v765 = vpop.f32.mrf.mxu0
    %v766 = vadd.f32 0.0, %v765
    %v767 = vpop.f32.mrf.mxu0
    %v768 = vadd.f32 0.0, %v767
    %769 = vmatprep.mubr.bf16.mxu0 %v515
    %770 = vmatmul.mubr.bf16.gmra.mxu0 %v264
    %v771 = vpop.f32.mrf.mxu0
    %v772 = vadd.f32 0.0, %v771
    %v773 = vpop.f32.mrf.mxu0
    %v774 = vadd.f32 0.0, %v773
    %v775 = vpop.f32.mrf.mxu0
    %v776 = vadd.f32 0.0, %v775
    %v777 = vpop.f32.mrf.mxu0
    %v778 = vadd.f32 0.0, %v777
    %779 = vmatprep.mubr.bf16.mxu0 %v518
    %780 = vmatmul.mubr.bf16.gmra.mxu0 %v266
    %v781 = vpop.f32.mrf.mxu0
    %v782 = vadd.f32 0.0, %v781
    %v783 = vpop.f32.mrf.mxu0
    %v784 = vadd.f32 0.0, %v783
    %v785 = vpop.f32.mrf.mxu0
    %v786 = vadd.f32 0.0, %v785
    %v787 = vpop.f32.mrf.mxu0
    %v788 = vadd.f32 0.0, %v787
    %789 = vmatprep.mubr.bf16.mxu0 %v521
    %790 = vmatmul.mubr.bf16.gmra.mxu0 %v268
    %v791 = vpop.f32.mrf.mxu0
    %v792 = vadd.f32 0.0, %v791
    %v793 = vpop.f32.mrf.mxu0
    %v794 = vadd.f32 0.0, %v793
    %v795 = vpop.f32.mrf.mxu0
    %v796 = vadd.f32 0.0, %v795
    %v797 = vpop.f32.mrf.mxu0
    %v798 = vadd.f32 0.0, %v797
    %799 = vmatprep.mubr.bf16.mxu0 %v524
    %800 = vmatmul.mubr.bf16.gmra.mxu0 %v270
    %v801 = vpop.f32.mrf.mxu0
    %v802 = vadd.f32 0.0, %v801
    %v803 = vpop.f32.mrf.mxu0
    %v804 = vadd.f32 0.0, %v803
    %v805 = vpop.f32.mrf.mxu0
    %v806 = vadd.f32 0.0, %v805
    %v807 = vpop.f32.mrf.mxu0
    %v808 = vadd.f32 0.0, %v807
    %809 = vmatprep.mubr.bf16.mxu0 %v527
    %810 = vmatmul.mubr.bf16.gmra.mxu0 %v272
    %v811 = vpop.f32.mrf.mxu0
    %v812 = vadd.f32 0.0, %v811
    %v813 = vpop.f32.mrf.mxu0
    %v814 = vadd.f32 0.0, %v813
    %v815 = vpop.f32.mrf.mxu0
    %v816 = vadd.f32 0.0, %v815
    %v817 = vpop.f32.mrf.mxu0
    %v818 = vadd.f32 0.0, %v817
    %819 = vmatprep.mubr.bf16.mxu0 %v530
    %820 = vmatmul.mubr.bf16.gmra.mxu0 %v274
    %v821 = vpop.f32.mrf.mxu0
    %v822 = vadd.f32 0.0, %v821
    %v823 = vpop.f32.mrf.mxu0
    %v824 = vadd.f32 0.0, %v823
    %v825 = vpop.f32.mrf.mxu0
    %v826 = vadd.f32 0.0, %v825
    %v827 = vpop.f32.mrf.mxu0
    %v828 = vadd.f32 0.0, %v827
    %829 = vmatprep.mubr.bf16.mxu0 %v533
    %830 = vmatmul.mubr.bf16.gmra.mxu0 %v276
    %v831 = vpop.f32.mrf.mxu0
    %v832 = vadd.f32 0.0, %v831
    %v833 = vpop.f32.mrf.mxu0
    %v834 = vadd.f32 0.0, %v833
    %v835 = vpop.f32.mrf.mxu0
    %v836 = vadd.f32 0.0, %v835
    %v837 = vpop.f32.mrf.mxu0
    %v838 = vadd.f32 0.0, %v837
    %839 = vmatprep.mubr.bf16.mxu0 %v536
    %840 = vmatmul.mubr.bf16.gmra.mxu0 %v278
    %v841 = vpop.f32.mrf.mxu0
    %v842 = vadd.f32 0.0, %v841
    %v843 = vpop.f32.mrf.mxu0
    %v844 = vadd.f32 0.0, %v843
    %v845 = vpop.f32.mrf.mxu0
    %v846 = vadd.f32 0.0, %v845
    %v847 = vpop.f32.mrf.mxu0
    %v848 = vadd.f32 0.0, %v847
    %849 = vmatprep.mubr.bf16.mxu0 %v539
    %850 = vmatmul.mubr.bf16.gmra.mxu0 %v280
    %v851 = vpop.f32.mrf.mxu0
    %v852 = vadd.f32 0.0, %v851
    %v853 = vpop.f32.mrf.mxu0
    %v854 = vadd.f32 0.0, %v853
    %v855 = vpop.f32.mrf.mxu0
    %v856 = vadd.f32 0.0, %v855
    %v857 = vpop.f32.mrf.mxu0
    %v858 = vadd.f32 0.0, %v857
    %859 = vdwg.mxu0
    %v860 = vmax.f32 %v589, %v591
    %v861 = vmax.f32 %v593, %v595
    %v862 = vmax.f32 %v599, %v601
    %v863 = vmax.f32 %v603, %v605
    %v864 = vmax.f32 %v609, %v611
    %v865 = vmax.f32 %v613, %v615
    %v866 = vmax.f32 %v619, %v621
    %v867 = vmax.f32 %v623, %v625
    %v868 = vmax.f32 %v629, %v631
    %v869 = vmax.f32 %v633, %v635
    %v870 = vmax.f32 %v639, %v641
    %v871 = vmax.f32 %v643, %v645
    %v872 = vmax.f32 %v649, %v651
    %v873 = vmax.f32 %v653, %v655
    %v874 = vmax.f32 %v659, %v661
    %v875 = vmax.f32 %v663, %v665
    %v876 = vmax.f32 %v669, %v671
    %v877 = vmax.f32 %v673, %v675
    %v878 = vmax.f32 %v679, %v681
    %v879 = vmax.f32 %v683, %v685
    %v880 = vmax.f32 %v689, %v691
    %v881 = vmax.f32 %v693, %v695
    %v882 = vmax.f32 %v699, %v701
    %v883 = vmax.f32 %v703, %v705
    %v884 = vmax.f32 %v742, %v744
    %v885 = vmax.f32 %v746, %v748
    %v886 = vmax.f32 %v752, %v754
    %v887 = vmax.f32 %v756, %v758
    %v888 = vmax.f32 %v762, %v764
    %v889 = vmax.f32 %v766, %v768
    %v890 = vmax.f32 %v772, %v774
    %v891 = vmax.f32 %v776, %v778
    %v892 = vmax.f32 %v782, %v784
    %v893 = vmax.f32 %v786, %v788
    %v894 = vmax.f32 %v792, %v794
    %v895 = vmax.f32 %v796, %v798
    %v896 = vmax.f32 %v802, %v804
    %v897 = vmax.f32 %v806, %v808
    %v898 = vmax.f32 %v812, %v814
    %v899 = vmax.f32 %v816, %v818
    %v900 = vmax.f32 %v822, %v824
    %v901 = vmax.f32 %v826, %v828
    %v902 = vmax.f32 %v832, %v834
    %v903 = vmax.f32 %v836, %v838
    %v904 = vmax.f32 %v842, %v844
    %v905 = vmax.f32 %v846, %v848
    %v906 = vmax.f32 %v852, %v854
    %v907 = vmax.f32 %v856, %v858
    %v908 = vmax.f32 %v860, %v884
    %v909 = vmax.f32 %v861, %v885
    %v910 = vmax.f32 %v862, %v886
    %v911 = vmax.f32 %v863, %v887
    %v912 = vmax.f32 %v864, %v888
    %v913 = vmax.f32 %v865, %v889
    %v914 = vmax.f32 %v866, %v890
    %v915 = vmax.f32 %v867, %v891
    %v916 = vmax.f32 %v868, %v892
    %v917 = vmax.f32 %v869, %v893
    %v918 = vmax.f32 %v870, %v894
    %v919 = vmax.f32 %v871, %v895
    %v920 = vmax.f32 %v872, %v896
    %v921 = vmax.f32 %v873, %v897
    %v922 = vmax.f32 %v874, %v898
    %v923 = vmax.f32 %v875, %v899
    %v924 = vmax.f32 %v876, %v900
    %v925 = vmax.f32 %v877, %v901
    %v926 = vmax.f32 %v878, %v902
    %v927 = vmax.f32 %v879, %v903
    %v928 = vmax.f32 %v880, %v904
    %v929 = vmax.f32 %v881, %v905
    %v930 = vmax.f32 %v882, %v906
    %v931 = vmax.f32 %v883, %v907
    %v932 = vld [vmem:[#allocation4] sm:$0x1]
    %v934 = vlaneseq
    %v935 = vshrl.u32 %v934, 7
    %v936 = vsub.s32 0, %v935
    %v937 = vrot.slane %v932, %v936
    %v939 = vadd.f32 %v908, %v937
    %v940 = vadd.f32 %v909, %v937
    %v941 = vadd.f32 %v910, %v937
    %v942 = vadd.f32 %v911, %v937
    %v943 = vadd.f32 %v912, %v937
    %v944 = vadd.f32 %v913, %v937
    %v945 = vadd.f32 %v914, %v937
    %v946 = vadd.f32 %v915, %v937
    %v947 = vadd.f32 %v916, %v937
    %v948 = vadd.f32 %v917, %v937
    %v949 = vadd.f32 %v918, %v937
    %v950 = vadd.f32 %v919, %v937
    %v951 = vadd.f32 %v920, %v937
    %v952 = vadd.f32 %v921, %v937
    %v953 = vadd.f32 %v922, %v937
    %v954 = vadd.f32 %v923, %v937
    %v955 = vadd.f32 %v924, %v937
    %v956 = vadd.f32 %v925, %v937
    %v957 = vadd.f32 %v926, %v937
    %v958 = vadd.f32 %v927, %v937
    %v959 = vadd.f32 %v928, %v937
    %v960 = vadd.f32 %v929, %v937
    %v961 = vadd.f32 %v930, %v937
    %v962 = vadd.f32 %v931, %v937
    %v963 = vmax.f32 %v939, 0.0
    %v964 = vmax.f32 %v940, 0.0
    %v965 = vmax.f32 %v941, 0.0
    %v966 = vmax.f32 %v942, 0.0
    %v967 = vmax.f32 %v943, 0.0
    %v968 = vmax.f32 %v944, 0.0
    %v969 = vmax.f32 %v945, 0.0
    %v970 = vmax.f32 %v946, 0.0
    %v971 = vmax.f32 %v947, 0.0
    %v972 = vmax.f32 %v948, 0.0
    %v973 = vmax.f32 %v949, 0.0
    %v974 = vmax.f32 %v950, 0.0
    %v975 = vmax.f32 %v951, 0.0
    %v976 = vmax.f32 %v952, 0.0
    %v977 = vmax.f32 %v953, 0.0
    %v978 = vmax.f32 %v954, 0.0
    %v979 = vmax.f32 %v955, 0.0
    %v980 = vmax.f32 %v956, 0.0
    %v981 = vmax.f32 %v957, 0.0
    %v982 = vmax.f32 %v958, 0.0
    %v983 = vmax.f32 %v959, 0.0
    %v984 = vmax.f32 %v960, 0.0
    %v985 = vmax.f32 %v961, 0.0
    %v986 = vmax.f32 %v962, 0.0
    %v987 = vpack.c.bf16 %v964, %v963
    %v988 = vpack.c.bf16 %v966, %v965
    %v989 = vpack.c.bf16 %v968, %v967
    %v990 = vpack.c.bf16 %v970, %v969
    %v991 = vpack.c.bf16 %v972, %v971
    %v992 = vpack.c.bf16 %v974, %v973
    %v993 = vpack.c.bf16 %v976, %v975
    %v994 = vpack.c.bf16 %v978, %v977
    %v995 = vpack.c.bf16 %v980, %v979
    %v996 = vpack.c.bf16 %v982, %v981
    %v997 = vpack.c.bf16 %v984, %v983
    %v998 = vpack.c.bf16 %v986, %v985
    %v999 = vld [vmem:[%s3] sm:$0xff]
    %v1000 = vld [vmem:[%s3 + $0x8] sm:$0xff]
    %v1001 = vld [vmem:[%s3 + $0x10] sm:$0xff]
    %v1002 = vld [vmem:[%s3 + $0x18] sm:$0xff]
    %v1003 = vld [vmem:[%s3 + $0x20] sm:$0xff]
    %v1004 = vld [vmem:[%s3 + $0x28] sm:$0xff]
    %v1005 = vld [vmem:[%s3 + $0x30] sm:$0xff]
    %v1006 = vld [vmem:[%s3 + $0x38] sm:$0xff]
    %v1007 = vld [vmem:[%s3 + $0x40] sm:$0xff]
    %v1008 = vld [vmem:[%s3 + $0x48] sm:$0xff]
    %v1009 = vld [vmem:[%s3 + $0x50] sm:$0xff]
    %v1010 = vld [vmem:[%s3 + $0x58] sm:$0xff]
    %v1011 = vld [vmem:[%s3 + $0x60] sm:$0xff]
    %v1012 = vld [vmem:[%s3 + $0x68] sm:$0xff]
    %v1013 = vld [vmem:[%s3 + $0x70] sm:$0xff]
    %v1014 = vld [vmem:[%s3 + $0x78] sm:$0xff]
    %s1015 = scalar_lea.vmem %s3, 128
    %v1016 = vld [vmem:[%s1015] sm:$0xff]
    %v1017 = vld [vmem:[%s1015 + $0x8] sm:$0xff]
    %v1018 = vld [vmem:[%s1015 + $0x10] sm:$0xff]
    %v1019 = vld [vmem:[%s1015 + $0x18] sm:$0xff]
    %v1020 = vld [vmem:[%s1015 + $0x20] sm:$0xff]
    %v1021 = vld [vmem:[%s1015 + $0x28] sm:$0xff]
    %v1022 = vld [vmem:[%s1015 + $0x30] sm:$0xff]
    %v1023 = vld [vmem:[%s1015 + $0x38] sm:$0xff]
    %v1024 = vld [vmem:[%s1015 + $0x40] sm:$0xff]
    %v1025 = vld [vmem:[%s1015 + $0x48] sm:$0xff]
    %v1026 = vld [vmem:[%s1015 + $0x50] sm:$0xff]
    %v1027 = vld [vmem:[%s1015 + $0x58] sm:$0xff]
    %v1028 = vld [vmem:[%s1015 + $0x60] sm:$0xff]
    %v1029 = vld [vmem:[%s1015 + $0x68] sm:$0xff]
    %v1030 = vld [vmem:[%s1015 + $0x70] sm:$0xff]
    %v1031 = vld [vmem:[%s1015 + $0x78] sm:$0xff]
    %v1048 = vunpack.c.l.b16 %v1016
    %v1049 = vunpack.c.h.b16 %v1016
    %v1050 = vunpack.c.l.b16 %v1017
    %v1051 = vunpack.c.h.b16 %v1017
    %v1052 = vunpack.c.l.b16 %v1018
    %v1053 = vunpack.c.h.b16 %v1018
    %v1054 = vunpack.c.l.b16 %v1019
    %v1055 = vunpack.c.h.b16 %v1019
    %v1056 = vunpack.c.l.b16 %v1020
    %v1057 = vunpack.c.h.b16 %v1020
    %v1058 = vunpack.c.l.b16 %v1021
    %v1059 = vunpack.c.h.b16 %v1021
    %v1060 = vunpack.c.l.b16 %v1022
    %v1061 = vunpack.c.h.b16 %v1022
    %v1062 = vunpack.c.l.b16 %v1023
    %v1063 = vunpack.c.h.b16 %v1023
    %v1064 = vunpack.c.l.b16 %v1024
    %v1065 = vunpack.c.h.b16 %v1024
    %v1066 = vunpack.c.l.b16 %v1025
    %v1067 = vunpack.c.h.b16 %v1025
    %v1068 = vunpack.c.l.b16 %v1026
    %v1069 = vunpack.c.h.b16 %v1026
    %v1070 = vunpack.c.l.b16 %v1027
    %v1071 = vunpack.c.h.b16 %v1027
    %v1072 = vunpack.c.l.b16 %v1028
    %v1073 = vunpack.c.h.b16 %v1028
    %v1074 = vunpack.c.l.b16 %v1029
    %v1075 = vunpack.c.h.b16 %v1029
    %v1076 = vunpack.c.l.b16 %v1030
    %v1077 = vunpack.c.h.b16 %v1030
    %v1078 = vunpack.c.l.b16 %v1031
    %v1079 = vunpack.c.h.b16 %v1031
    %v1080 = vpack.c.b16 %v1050, %v1048
    %v1081 = vpack.c.b16 %v1051, %v1049
    %v1082 = vpack.c.b16 %v1054, %v1052
    %v1083 = vpack.c.b16 %v1055, %v1053
    %v1084 = vpack.c.b16 %v1058, %v1056
    %v1085 = vpack.c.b16 %v1059, %v1057
    %v1086 = vpack.c.b16 %v1062, %v1060
    %v1087 = vpack.c.b16 %v1063, %v1061
    %v1088 = vpack.c.b16 %v1066, %v1064
    %v1089 = vpack.c.b16 %v1067, %v1065
    %v1090 = vpack.c.b16 %v1070, %v1068
    %v1091 = vpack.c.b16 %v1071, %v1069
    %v1092 = vpack.c.b16 %v1074, %v1072
    %v1093 = vpack.c.b16 %v1075, %v1073
    %v1094 = vpack.c.b16 %v1078, %v1076
    %v1095 = vpack.c.b16 %v1079, %v1077
    %1112 = vmatprep.subr.bf16.mxu0 %v1095
    %1113 = vmatpush1.bf16.msra.mxu0 %v1094
    %1114 = vmatprep.subr.bf16.mxu0 %v1093
    %1115 = vmatpush1.bf16.msra.mxu0 %v1092
    %1116 = vmatprep.subr.bf16.mxu0 %v1091
    %1117 = vmatpush1.bf16.msra.mxu0 %v1090
    %1118 = vmatprep.subr.bf16.mxu0 %v1089
    %1119 = vmatpush1.bf16.msra.mxu0 %v1088
    %1120 = vmatprep.subr.bf16.mxu0 %v1087
    %1121 = vmatpush1.bf16.msra.mxu0 %v1086
    %1122 = vmatprep.subr.bf16.mxu0 %v1085
    %1123 = vmatpush1.bf16.msra.mxu0 %v1084
    %1124 = vmatprep.subr.bf16.mxu0 %v1083
    %1125 = vmatpush1.bf16.msra.mxu0 %v1082
    %1126 = vmatprep.subr.bf16.mxu0 %v1081
    %1127 = vmatpush1.bf16.msra.mxu0 %v1080
    %1128 = vmatprep.subr.bf16.mxu0 0
    %1129 = vmatpush2.bf16.msra.mxu0 0
    %1130 = vmatprep.subr.bf16.mxu0 0
    %1131 = vmatpush2.bf16.msra.mxu0 0
    %1132 = vmatprep.subr.bf16.mxu0 0
    %1133 = vmatpush2.bf16.msra.mxu0 0
    %1134 = vmatprep.subr.bf16.mxu0 0
    %1135 = vmatpush2.bf16.msra.mxu0 0
    %1136 = vmatprep.subr.bf16.mxu0 0
    %1137 = vmatpush2.bf16.msra.mxu0 0
    %1138 = vmatprep.subr.bf16.mxu0 0
    %1139 = vmatpush2.bf16.msra.mxu0 0
    %1140 = vmatprep.subr.bf16.mxu0 0
    %1141 = vmatpush2.bf16.msra.mxu0 0
    %1142 = vmatprep.subr.bf16.mxu0 0
    %1143 = vmatpush2.bf16.msra.mxu0 0
    %1144 = vmatprep.mubr.bf16.mxu0 0
    %1145 = vmatmul.mubr.bf16.gmra.mxu0 %v988
    %v1146 = vpop.f32.mrf.mxu0
    %v1147 = vadd.f32 0.0, %v1146
    %v1148 = vpop.f32.mrf.mxu0
    %v1149 = vadd.f32 0.0, %v1148
    %v1150 = vpop.f32.mrf.mxu0
    %v1151 = vadd.f32 0.0, %v1150
    %v1152 = vpop.f32.mrf.mxu0
    %v1153 = vadd.f32 0.0, %v1152
    %1154 = vmatprep.mubr.bf16.mxu0 0
    %1155 = vmatmul.mubr.bf16.gmra.mxu0 %v989
    %v1156 = vpop.f32.mrf.mxu0
    %v1157 = vadd.f32 0.0, %v1156
    %v1158 = vpop.f32.mrf.mxu0
    %v1159 = vadd.f32 0.0, %v1158
    %v1160 = vpop.f32.mrf.mxu0
    %v1161 = vadd.f32 0.0, %v1160
    %v1162 = vpop.f32.mrf.mxu0
    %v1163 = vadd.f32 0.0, %v1162
    %1164 = vmatprep.mubr.bf16.mxu0 0
    %1165 = vmatmul.mubr.bf16.gmra.mxu0 %v990
    %v1166 = vpop.f32.mrf.mxu0
    %v1167 = vadd.f32 0.0, %v1166
    %v1168 = vpop.f32.mrf.mxu0
    %v1169 = vadd.f32 0.0, %v1168
    %v1170 = vpop.f32.mrf.mxu0
    %v1171 = vadd.f32 0.0, %v1170
    %v1172 = vpop.f32.mrf.mxu0
    %v1173 = vadd.f32 0.0, %v1172
    %1174 = vmatprep.mubr.bf16.mxu0 0
    %1175 = vmatmul.mubr.bf16.gmra.mxu0 %v991
    %v1176 = vpop.f32.mrf.mxu0
    %v1177 = vadd.f32 0.0, %v1176
    %v1178 = vpop.f32.mrf.mxu0
    %v1179 = vadd.f32 0.0, %v1178
    %v1180 = vpop.f32.mrf.mxu0
    %v1181 = vadd.f32 0.0, %v1180
    %v1182 = vpop.f32.mrf.mxu0
    %v1183 = vadd.f32 0.0, %v1182
    %1184 = vmatprep.mubr.bf16.mxu0 0
    %1185 = vmatmul.mubr.bf16.gmra.mxu0 %v992
    %v1186 = vpop.f32.mrf.mxu0
    %v1187 = vadd.f32 0.0, %v1186
    %v1188 = vpop.f32.mrf.mxu0
    %v1189 = vadd.f32 0.0, %v1188
    %v1190 = vpop.f32.mrf.mxu0
    %v1191 = vadd.f32 0.0, %v1190
    %v1192 = vpop.f32.mrf.mxu0
    %v1193 = vadd.f32 0.0, %v1192
    %1194 = vmatprep.mubr.bf16.mxu0 0
    %1195 = vmatmul.mubr.bf16.gmra.mxu0 %v993
    %v1196 = vpop.f32.mrf.mxu0
    %v1197 = vadd.f32 0.0, %v1196
    %v1198 = vpop.f32.mrf.mxu0
    %v1199 = vadd.f32 0.0, %v1198
    %v1200 = vpop.f32.mrf.mxu0
    %v1201 = vadd.f32 0.0, %v1200
    %v1202 = vpop.f32.mrf.mxu0
    %v1203 = vadd.f32 0.0, %v1202
    %1204 = vmatprep.mubr.bf16.mxu0 0
    %1205 = vmatmul.mubr.bf16.gmra.mxu0 %v994
    %v1206 = vpop.f32.mrf.mxu0
    %v1207 = vadd.f32 0.0, %v1206
    %v1208 = vpop.f32.mrf.mxu0
    %v1209 = vadd.f32 0.0, %v1208
    %v1210 = vpop.f32.mrf.mxu0
    %v1211 = vadd.f32 0.0, %v1210
    %v1212 = vpop.f32.mrf.mxu0
    %v1213 = vadd.f32 0.0, %v1212
    %1214 = vmatprep.mubr.bf16.mxu0 0
    %1215 = vmatmul.mubr.bf16.gmra.mxu0 %v995
    %v1216 = vpop.f32.mrf.mxu0
    %v1217 = vadd.f32 0.0, %v1216
    %v1218 = vpop.f32.mrf.mxu0
    %v1219 = vadd.f32 0.0, %v1218
    %v1220 = vpop.f32.mrf.mxu0
    %v1221 = vadd.f32 0.0, %v1220
    %v1222 = vpop.f32.mrf.mxu0
    %v1223 = vadd.f32 0.0, %v1222
    %1224 = vmatprep.mubr.bf16.mxu0 0
    %1225 = vmatmul.mubr.bf16.gmra.mxu0 %v996
    %v1226 = vpop.f32.mrf.mxu0
    %v1227 = vadd.f32 0.0, %v1226
    %v1228 = vpop.f32.mrf.mxu0
    %v1229 = vadd.f32 0.0, %v1228
    %v1230 = vpop.f32.mrf.mxu0
    %v1231 = vadd.f32 0.0, %v1230
    %v1232 = vpop.f32.mrf.mxu0
    %v1233 = vadd.f32 0.0, %v1232
    %1234 = vmatprep.mubr.bf16.mxu0 0
    %1235 = vmatmul.mubr.bf16.gmra.mxu0 %v997
    %v1236 = vpop.f32.mrf.mxu0
    %v1237 = vadd.f32 0.0, %v1236
    %v1238 = vpop.f32.mrf.mxu0
    %v1239 = vadd.f32 0.0, %v1238
    %v1240 = vpop.f32.mrf.mxu0
    %v1241 = vadd.f32 0.0, %v1240
    %v1242 = vpop.f32.mrf.mxu0
    %v1243 = vadd.f32 0.0, %v1242
    %1244 = vdwg.mxu0
    %v1261 = vunpack.c.l.b16 %v999
    %v1262 = vunpack.c.h.b16 %v999
    %v1263 = vunpack.c.l.b16 %v1000
    %v1264 = vunpack.c.h.b16 %v1000
    %v1265 = vunpack.c.l.b16 %v1001
    %v1266 = vunpack.c.h.b16 %v1001
    %v1267 = vunpack.c.l.b16 %v1002
    %v1268 = vunpack.c.h.b16 %v1002
    %v1269 = vunpack.c.l.b16 %v1003
    %v1270 = vunpack.c.h.b16 %v1003
    %v1271 = vunpack.c.l.b16 %v1004
    %v1272 = vunpack.c.h.b16 %v1004
    %v1273 = vunpack.c.l.b16 %v1005
    %v1274 = vunpack.c.h.b16 %v1005
    %v1275 = vunpack.c.l.b16 %v1006
    %v1276 = vunpack.c.h.b16 %v1006
    %v1277 = vunpack.c.l.b16 %v1007
    %v1278 = vunpack.c.h.b16 %v1007
    %v1279 = vunpack.c.l.b16 %v1008
    %v1280 = vunpack.c.h.b16 %v1008
    %v1281 = vunpack.c.l.b16 %v1009
    %v1282 = vunpack.c.h.b16 %v1009
    %v1283 = vunpack.c.l.b16 %v1010
    %v1284 = vunpack.c.h.b16 %v1010
    %v1285 = vunpack.c.l.b16 %v1011
    %v1286 = vunpack.c.h.b16 %v1011
    %v1287 = vunpack.c.l.b16 %v1012
    %v1288 = vunpack.c.h.b16 %v1012
    %v1289 = vunpack.c.l.b16 %v1013
    %v1290 = vunpack.c.h.b16 %v1013
    %v1291 = vunpack.c.l.b16 %v1014
    %v1292 = vunpack.c.h.b16 %v1014
    %v1293 = vpack.c.b16 %v1263, %v1261
    %v1294 = vpack.c.b16 %v1264, %v1262
    %v1295 = vpack.c.b16 %v1267, %v1265
    %v1296 = vpack.c.b16 %v1268, %v1266
    %v1297 = vpack.c.b16 %v1271, %v1269
    %v1298 = vpack.c.b16 %v1272, %v1270
    %v1299 = vpack.c.b16 %v1275, %v1273
    %v1300 = vpack.c.b16 %v1276, %v1274
    %v1301 = vpack.c.b16 %v1279, %v1277
    %v1302 = vpack.c.b16 %v1280, %v1278
    %v1303 = vpack.c.b16 %v1283, %v1281
    %v1304 = vpack.c.b16 %v1284, %v1282
    %v1305 = vpack.c.b16 %v1287, %v1285
    %v1306 = vpack.c.b16 %v1288, %v1286
    %v1307 = vpack.c.b16 %v1291, %v1289
    %v1308 = vpack.c.b16 %v1292, %v1290
    %1325 = vmatprep.subr.bf16.mxu0 %v1308
    %1326 = vmatpush1.bf16.msra.mxu0 %v1307
    %1327 = vmatprep.subr.bf16.mxu0 %v1306
    %1328 = vmatpush1.bf16.msra.mxu0 %v1305
    %1329 = vmatprep.subr.bf16.mxu0 %v1304
    %1330 = vmatpush1.bf16.msra.mxu0 %v1303
    %1331 = vmatprep.subr.bf16.mxu0 %v1302
    %1332 = vmatpush1.bf16.msra.mxu0 %v1301
    %1333 = vmatprep.subr.bf16.mxu0 %v1300
    %1334 = vmatpush1.bf16.msra.mxu0 %v1299
    %1335 = vmatprep.subr.bf16.mxu0 %v1298
    %1336 = vmatpush1.bf16.msra.mxu0 %v1297
    %1337 = vmatprep.subr.bf16.mxu0 %v1296
    %1338 = vmatpush1.bf16.msra.mxu0 %v1295
    %1339 = vmatprep.subr.bf16.mxu0 %v1294
    %1340 = vmatpush1.bf16.msra.mxu0 %v1293
    %1341 = vmatprep.subr.bf16.mxu0 0
    %1342 = vmatpush2.bf16.msra.mxu0 0
    %1343 = vmatprep.subr.bf16.mxu0 0
    %1344 = vmatpush2.bf16.msra.mxu0 0
    %1345 = vmatprep.subr.bf16.mxu0 0
    %1346 = vmatpush2.bf16.msra.mxu0 0
    %1347 = vmatprep.subr.bf16.mxu0 0
    %1348 = vmatpush2.bf16.msra.mxu0 0
    %1349 = vmatprep.subr.bf16.mxu0 0
    %1350 = vmatpush2.bf16.msra.mxu0 0
    %1351 = vmatprep.subr.bf16.mxu0 0
    %1352 = vmatpush2.bf16.msra.mxu0 0
    %1353 = vmatprep.subr.bf16.mxu0 0
    %1354 = vmatpush2.bf16.msra.mxu0 0
    %1355 = vmatprep.subr.bf16.mxu0 0
    %1356 = vmatpush2.bf16.msra.mxu0 0
    %1357 = vmatprep.mubr.bf16.mxu0 0
    %1358 = vmatmul.mubr.bf16.gmra.mxu0 %v987
    %v1359 = vpop.f32.mrf.mxu0
    %v1360 = vadd.f32 %v1147, %v1359
    %v1361 = vpop.f32.mrf.mxu0
    %v1362 = vadd.f32 %v1149, %v1361
    %v1363 = vpop.f32.mrf.mxu0
    %v1364 = vadd.f32 %v1151, %v1363
    %v1365 = vpop.f32.mrf.mxu0
    %v1366 = vadd.f32 %v1153, %v1365
    %1367 = vmatprep.mubr.bf16.mxu0 0
    %1368 = vmatmul.mubr.bf16.gmra.mxu0 %v988
    %v1369 = vpop.f32.mrf.mxu0
    %v1370 = vadd.f32 %v1157, %v1369
    %v1371 = vpop.f32.mrf.mxu0
    %v1372 = vadd.f32 %v1159, %v1371
    %v1373 = vpop.f32.mrf.mxu0
    %v1374 = vadd.f32 %v1161, %v1373
    %v1375 = vpop.f32.mrf.mxu0
    %v1376 = vadd.f32 %v1163, %v1375
    %1377 = vmatprep.mubr.bf16.mxu0 0
    %1378 = vmatmul.mubr.bf16.gmra.mxu0 %v989
    %v1379 = vpop.f32.mrf.mxu0
    %v1380 = vadd.f32 %v1167, %v1379
    %v1381 = vpop.f32.mrf.mxu0
    %v1382 = vadd.f32 %v1169, %v1381
    %v1383 = vpop.f32.mrf.mxu0
    %v1384 = vadd.f32 %v1171, %v1383
    %v1385 = vpop.f32.mrf.mxu0
    %v1386 = vadd.f32 %v1173, %v1385
    %1387 = vmatprep.mubr.bf16.mxu0 0
    %1388 = vmatmul.mubr.bf16.gmra.mxu0 %v990
    %v1389 = vpop.f32.mrf.mxu0
    %v1390 = vadd.f32 %v1177, %v1389
    %v1391 = vpop.f32.mrf.mxu0
    %v1392 = vadd.f32 %v1179, %v1391
    %v1393 = vpop.f32.mrf.mxu0
    %v1394 = vadd.f32 %v1181, %v1393
    %v1395 = vpop.f32.mrf.mxu0
    %v1396 = vadd.f32 %v1183, %v1395
    %1397 = vmatprep.mubr.bf16.mxu0 0
    %1398 = vmatmul.mubr.bf16.gmra.mxu0 %v991
    %v1399 = vpop.f32.mrf.mxu0
    %v1400 = vadd.f32 %v1187, %v1399
    %v1401 = vpop.f32.mrf.mxu0
    %v1402 = vadd.f32 %v1189, %v1401
    %v1403 = vpop.f32.mrf.mxu0
    %v1404 = vadd.f32 %v1191, %v1403
    %v1405 = vpop.f32.mrf.mxu0
    %v1406 = vadd.f32 %v1193, %v1405
    %1407 = vmatprep.mubr.bf16.mxu0 0
    %1408 = vmatmul.mubr.bf16.gmra.mxu0 %v992
    %v1409 = vpop.f32.mrf.mxu0
    %v1410 = vadd.f32 %v1197, %v1409
    %v1411 = vpop.f32.mrf.mxu0
    %v1412 = vadd.f32 %v1199, %v1411
    %v1413 = vpop.f32.mrf.mxu0
    %v1414 = vadd.f32 %v1201, %v1413
    %v1415 = vpop.f32.mrf.mxu0
    %v1416 = vadd.f32 %v1203, %v1415
    %1417 = vmatprep.mubr.bf16.mxu0 0
    %1418 = vmatmul.mubr.bf16.gmra.mxu0 %v993
    %v1419 = vpop.f32.mrf.mxu0
    %v1420 = vadd.f32 %v1207, %v1419
    %v1421 = vpop.f32.mrf.mxu0
    %v1422 = vadd.f32 %v1209, %v1421
    %v1423 = vpop.f32.mrf.mxu0
    %v1424 = vadd.f32 %v1211, %v1423
    %v1425 = vpop.f32.mrf.mxu0
    %v1426 = vadd.f32 %v1213, %v1425
    %1427 = vmatprep.mubr.bf16.mxu0 0
    %1428 = vmatmul.mubr.bf16.gmra.mxu0 %v994
    %v1429 = vpop.f32.mrf.mxu0
    %v1430 = vadd.f32 %v1217, %v1429
    %v1431 = vpop.f32.mrf.mxu0
    %v1432 = vadd.f32 %v1219, %v1431
    %v1433 = vpop.f32.mrf.mxu0
    %v1434 = vadd.f32 %v1221, %v1433
    %v1435 = vpop.f32.mrf.mxu0
    %v1436 = vadd.f32 %v1223, %v1435
    %1437 = vmatprep.mubr.bf16.mxu0 0
    %1438 = vmatmul.mubr.bf16.gmra.mxu0 %v995
    %v1439 = vpop.f32.mrf.mxu0
    %v1440 = vadd.f32 %v1227, %v1439
    %v1441 = vpop.f32.mrf.mxu0
    %v1442 = vadd.f32 %v1229, %v1441
    %v1443 = vpop.f32.mrf.mxu0
    %v1444 = vadd.f32 %v1231, %v1443
    %v1445 = vpop.f32.mrf.mxu0
    %v1446 = vadd.f32 %v1233, %v1445
    %1447 = vmatprep.mubr.bf16.mxu0 0
    %1448 = vmatmul.mubr.bf16.gmra.mxu0 %v996
    %v1449 = vpop.f32.mrf.mxu0
    %v1450 = vadd.f32 %v1237, %v1449
    %v1451 = vpop.f32.mrf.mxu0
    %v1452 = vadd.f32 %v1239, %v1451
    %v1453 = vpop.f32.mrf.mxu0
    %v1454 = vadd.f32 %v1241, %v1453
    %v1455 = vpop.f32.mrf.mxu0
    %v1456 = vadd.f32 %v1243, %v1455
    %1457 = vdwg.mxu0
    %s1458 = scalar_lea.vmem %s3, 256
    %v1459 = vld [vmem:[%s1458] sm:$0xff]
    %v1460 = vld [vmem:[%s1458 + $0x8] sm:$0xff]
    %v1461 = vld [vmem:[%s1458 + $0x10] sm:$0xff]
    %v1462 = vld [vmem:[%s1458 + $0x18] sm:$0xff]
    %v1463 = vld [vmem:[%s1458 + $0x20] sm:$0xff]
    %v1464 = vld [vmem:[%s1458 + $0x28] sm:$0xff]
    %v1465 = vld [vmem:[%s1458 + $0x30] sm:$0xff]
    %v1466 = vld [vmem:[%s1458 + $0x38] sm:$0xff]
    %v1467 = vld [vmem:[%s1458 + $0x40] sm:$0xff]
    %v1468 = vld [vmem:[%s1458 + $0x48] sm:$0xff]
    %v1469 = vld [vmem:[%s1458 + $0x50] sm:$0xff]
    %v1470 = vld [vmem:[%s1458 + $0x58] sm:$0xff]
    %v1471 = vld [vmem:[%s1458 + $0x60] sm:$0xff]
    %v1472 = vld [vmem:[%s1458 + $0x68] sm:$0xff]
    %v1473 = vld [vmem:[%s1458 + $0x70] sm:$0xff]
    %v1474 = vld [vmem:[%s1458 + $0x78] sm:$0xff]
    %v1491 = vunpack.c.l.b16 %v1459
    %v1492 = vunpack.c.h.b16 %v1459
    %v1493 = vunpack.c.l.b16 %v1460
    %v1494 = vunpack.c.h.b16 %v1460
    %v1495 = vunpack.c.l.b16 %v1461
    %v1496 = vunpack.c.h.b16 %v1461
    %v1497 = vunpack.c.l.b16 %v1462
    %v1498 = vunpack.c.h.b16 %v1462
    %v1499 = vunpack.c.l.b16 %v1463
    %v1500 = vunpack.c.h.b16 %v1463
    %v1501 = vunpack.c.l.b16 %v1464
    %v1502 = vunpack.c.h.b16 %v1464
    %v1503 = vunpack.c.l.b16 %v1465
    %v1504 = vunpack.c.h.b16 %v1465
    %v1505 = vunpack.c.l.b16 %v1466
    %v1506 = vunpack.c.h.b16 %v1466
    %v1507 = vunpack.c.l.b16 %v1467
    %v1508 = vunpack.c.h.b16 %v1467
    %v1509 = vunpack.c.l.b16 %v1468
    %v1510 = vunpack.c.h.b16 %v1468
    %v1511 = vunpack.c.l.b16 %v1469
    %v1512 = vunpack.c.h.b16 %v1469
    %v1513 = vunpack.c.l.b16 %v1470
    %v1514 = vunpack.c.h.b16 %v1470
    %v1515 = vunpack.c.l.b16 %v1471
    %v1516 = vunpack.c.h.b16 %v1471
    %v1517 = vunpack.c.l.b16 %v1472
    %v1518 = vunpack.c.h.b16 %v1472
    %v1519 = vunpack.c.l.b16 %v1473
    %v1520 = vunpack.c.h.b16 %v1473
    %v1521 = vunpack.c.l.b16 %v1474
    %v1522 = vunpack.c.h.b16 %v1474
    %v1523 = vpack.c.b16 %v1493, %v1491
    %v1524 = vpack.c.b16 %v1494, %v1492
    %v1525 = vpack.c.b16 %v1497, %v1495
    %v1526 = vpack.c.b16 %v1498, %v1496
    %v1527 = vpack.c.b16 %v1501, %v1499
    %v1528 = vpack.c.b16 %v1502, %v1500
    %v1529 = vpack.c.b16 %v1505, %v1503
    %v1530 = vpack.c.b16 %v1506, %v1504
    %v1531 = vpack.c.b16 %v1509, %v1507
    %v1532 = vpack.c.b16 %v1510, %v1508
    %v1533 = vpack.c.b16 %v1513, %v1511
    %v1534 = vpack.c.b16 %v1514, %v1512
    %v1535 = vpack.c.b16 %v1517, %v1515
    %v1536 = vpack.c.b16 %v1518, %v1516
    %v1537 = vpack.c.b16 %v1521, %v1519
    %v1538 = vpack.c.b16 %v1522, %v1520
    %1555 = vmatprep.subr.bf16.mxu0 %v1538
    %1556 = vmatpush1.bf16.msra.mxu0 %v1537
    %1557 = vmatprep.subr.bf16.mxu0 %v1536
    %1558 = vmatpush1.bf16.msra.mxu0 %v1535
    %1559 = vmatprep.subr.bf16.mxu0 %v1534
    %1560 = vmatpush1.bf16.msra.mxu0 %v1533
    %1561 = vmatprep.subr.bf16.mxu0 %v1532
    %1562 = vmatpush1.bf16.msra.mxu0 %v1531
    %1563 = vmatprep.subr.bf16.mxu0 %v1530
    %1564 = vmatpush1.bf16.msra.mxu0 %v1529
    %1565 = vmatprep.subr.bf16.mxu0 %v1528
    %1566 = vmatpush1.bf16.msra.mxu0 %v1527
    %1567 = vmatprep.subr.bf16.mxu0 %v1526
    %1568 = vmatpush1.bf16.msra.mxu0 %v1525
    %1569 = vmatprep.subr.bf16.mxu0 %v1524
    %1570 = vmatpush1.bf16.msra.mxu0 %v1523
    %1571 = vmatprep.subr.bf16.mxu0 0
    %1572 = vmatpush2.bf16.msra.mxu0 0
    %1573 = vmatprep.subr.bf16.mxu0 0
    %1574 = vmatpush2.bf16.msra.mxu0 0
    %1575 = vmatprep.subr.bf16.mxu0 0
    %1576 = vmatpush2.bf16.msra.mxu0 0
    %1577 = vmatprep.subr.bf16.mxu0 0
    %1578 = vmatpush2.bf16.msra.mxu0 0
    %1579 = vmatprep.subr.bf16.mxu0 0
    %1580 = vmatpush2.bf16.msra.mxu0 0
    %1581 = vmatprep.subr.bf16.mxu0 0
    %1582 = vmatpush2.bf16.msra.mxu0 0
    %1583 = vmatprep.subr.bf16.mxu0 0
    %1584 = vmatpush2.bf16.msra.mxu0 0
    %1585 = vmatprep.subr.bf16.mxu0 0
    %1586 = vmatpush2.bf16.msra.mxu0 0
    %1587 = vmatprep.mubr.bf16.mxu0 0
    %1588 = vmatmul.mubr.bf16.gmra.mxu0 %v989
    %v1589 = vpop.f32.mrf.mxu0
    %v1590 = vadd.f32 0.0, %v1589
    %v1591 = vpop.f32.mrf.mxu0
    %v1592 = vadd.f32 0.0, %v1591
    %v1593 = vpop.f32.mrf.mxu0
    %v1594 = vadd.f32 0.0, %v1593
    %v1595 = vpop.f32.mrf.mxu0
    %v1596 = vadd.f32 0.0, %v1595
    %1597 = vmatprep.mubr.bf16.mxu0 0
    %1598 = vmatmul.mubr.bf16.gmra.mxu0 %v990
    %v1599 = vpop.f32.mrf.mxu0
    %v1600 = vadd.f32 0.0, %v1599
    %v1601 = vpop.f32.mrf.mxu0
    %v1602 = vadd.f32 0.0, %v1601
    %v1603 = vpop.f32.mrf.mxu0
    %v1604 = vadd.f32 0.0, %v1603
    %v1605 = vpop.f32.mrf.mxu0
    %v1606 = vadd.f32 0.0, %v1605
    %1607 = vmatprep.mubr.bf16.mxu0 0
    %1608 = vmatmul.mubr.bf16.gmra.mxu0 %v991
    %v1609 = vpop.f32.mrf.mxu0
    %v1610 = vadd.f32 0.0, %v1609
    %v1611 = vpop.f32.mrf.mxu0
    %v1612 = vadd.f32 0.0, %v1611
    %v1613 = vpop.f32.mrf.mxu0
    %v1614 = vadd.f32 0.0, %v1613
    %v1615 = vpop.f32.mrf.mxu0
    %v1616 = vadd.f32 0.0, %v1615
    %1617 = vmatprep.mubr.bf16.mxu0 0
    %1618 = vmatmul.mubr.bf16.gmra.mxu0 %v992
    %v1619 = vpop.f32.mrf.mxu0
    %v1620 = vadd.f32 0.0, %v1619
    %v1621 = vpop.f32.mrf.mxu0
    %v1622 = vadd.f32 0.0, %v1621
    %v1623 = vpop.f32.mrf.mxu0
    %v1624 = vadd.f32 0.0, %v1623
    %v1625 = vpop.f32.mrf.mxu0
    %v1626 = vadd.f32 0.0, %v1625
    %1627 = vmatprep.mubr.bf16.mxu0 0
    %1628 = vmatmul.mubr.bf16.gmra.mxu0 %v993
    %v1629 = vpop.f32.mrf.mxu0
    %v1630 = vadd.f32 0.0, %v1629
    %v1631 = vpop.f32.mrf.mxu0
    %v1632 = vadd.f32 0.0, %v1631
    %v1633 = vpop.f32.mrf.mxu0
    %v1634 = vadd.f32 0.0, %v1633
    %v1635 = vpop.f32.mrf.mxu0
    %v1636 = vadd.f32 0.0, %v1635
    %1637 = vmatprep.mubr.bf16.mxu0 0
    %1638 = vmatmul.mubr.bf16.gmra.mxu0 %v994
    %v1639 = vpop.f32.mrf.mxu0
    %v1640 = vadd.f32 0.0, %v1639
    %v1641 = vpop.f32.mrf.mxu0
    %v1642 = vadd.f32 0.0, %v1641
    %v1643 = vpop.f32.mrf.mxu0
    %v1644 = vadd.f32 0.0, %v1643
    %v1645 = vpop.f32.mrf.mxu0
    %v1646 = vadd.f32 0.0, %v1645
    %1647 = vmatprep.mubr.bf16.mxu0 0
    %1648 = vmatmul.mubr.bf16.gmra.mxu0 %v995
    %v1649 = vpop.f32.mrf.mxu0
    %v1650 = vadd.f32 0.0, %v1649
    %v1651 = vpop.f32.mrf.mxu0
    %v1652 = vadd.f32 0.0, %v1651
    %v1653 = vpop.f32.mrf.mxu0
    %v1654 = vadd.f32 0.0, %v1653
    %v1655 = vpop.f32.mrf.mxu0
    %v1656 = vadd.f32 0.0, %v1655
    %1657 = vmatprep.mubr.bf16.mxu0 0
    %1658 = vmatmul.mubr.bf16.gmra.mxu0 %v996
    %v1659 = vpop.f32.mrf.mxu0
    %v1660 = vadd.f32 0.0, %v1659
    %v1661 = vpop.f32.mrf.mxu0
    %v1662 = vadd.f32 0.0, %v1661
    %v1663 = vpop.f32.mrf.mxu0
    %v1664 = vadd.f32 0.0, %v1663
    %v1665 = vpop.f32.mrf.mxu0
    %v1666 = vadd.f32 0.0, %v1665
    %1667 = vmatprep.mubr.bf16.mxu0 0
    %1668 = vmatmul.mubr.bf16.gmra.mxu0 %v997
    %v1669 = vpop.f32.mrf.mxu0
    %v1670 = vadd.f32 0.0, %v1669
    %v1671 = vpop.f32.mrf.mxu0
    %v1672 = vadd.f32 0.0, %v1671
    %v1673 = vpop.f32.mrf.mxu0
    %v1674 = vadd.f32 0.0, %v1673
    %v1675 = vpop.f32.mrf.mxu0
    %v1676 = vadd.f32 0.0, %v1675
    %1677 = vmatprep.mubr.bf16.mxu0 0
    %1678 = vmatmul.mubr.bf16.gmra.mxu0 %v998
    %v1679 = vpop.f32.mrf.mxu0
    %v1680 = vadd.f32 0.0, %v1679
    %v1681 = vpop.f32.mrf.mxu0
    %v1682 = vadd.f32 0.0, %v1681
    %v1683 = vpop.f32.mrf.mxu0
    %v1684 = vadd.f32 0.0, %v1683
    %v1685 = vpop.f32.mrf.mxu0
    %v1686 = vadd.f32 0.0, %v1685
    %1687 = vdwg.mxu0
    %v1688 = vadd.f32 %v1360, %v1590
    %v1689 = vadd.f32 %v1362, %v1592
    %v1690 = vadd.f32 %v1364, %v1594
    %v1691 = vadd.f32 %v1366, %v1596
    %v1692 = vadd.f32 %v1370, %v1600
    %v1693 = vadd.f32 %v1372, %v1602
    %v1694 = vadd.f32 %v1374, %v1604
    %v1695 = vadd.f32 %v1376, %v1606
    %v1696 = vadd.f32 %v1380, %v1610
    %v1697 = vadd.f32 %v1382, %v1612
    %v1698 = vadd.f32 %v1384, %v1614
    %v1699 = vadd.f32 %v1386, %v1616
    %v1700 = vadd.f32 %v1390, %v1620
    %v1701 = vadd.f32 %v1392, %v1622
    %v1702 = vadd.f32 %v1394, %v1624
    %v1703 = vadd.f32 %v1396, %v1626
    %v1704 = vadd.f32 %v1400, %v1630
    %v1705 = vadd.f32 %v1402, %v1632
    %v1706 = vadd.f32 %v1404, %v1634
    %v1707 = vadd.f32 %v1406, %v1636
    %v1708 = vadd.f32 %v1410, %v1640
    %v1709 = vadd.f32 %v1412, %v1642
    %v1710 = vadd.f32 %v1414, %v1644
    %v1711 = vadd.f32 %v1416, %v1646
    %v1712 = vadd.f32 %v1420, %v1650
    %v1713 = vadd.f32 %v1422, %v1652
    %v1714 = vadd.f32 %v1424, %v1654
    %v1715 = vadd.f32 %v1426, %v1656
    %v1716 = vadd.f32 %v1430, %v1660
    %v1717 = vadd.f32 %v1432, %v1662
    %v1718 = vadd.f32 %v1434, %v1664
    %v1719 = vadd.f32 %v1436, %v1666
    %v1720 = vadd.f32 %v1440, %v1670
    %v1721 = vadd.f32 %v1442, %v1672
    %v1722 = vadd.f32 %v1444, %v1674
    %v1723 = vadd.f32 %v1446, %v1676
    %v1724 = vadd.f32 %v1450, %v1680
    %v1725 = vadd.f32 %v1452, %v1682
    %v1726 = vadd.f32 %v1454, %v1684
    %v1727 = vadd.f32 %v1456, %v1686
    %v1728 = vld [vmem:[#allocation6] sm:$0x3]
    %v1730 = vlaneseq
    %v1731 = vshrl.u32 %v1730, 7
    %v1732 = vsub.s32 0, %v1731
    %v1733 = vrot.slane %v1728, %v1732
    %v1734 = vlaneseq
    %v1735 = vshrl.u32 %v1734, 7
    %v1736 = vsub.s32 1, %v1735
    %v1737 = vrot.slane %v1728, %v1736
    %v1740 = vadd.f32 %v1688, %v1733
    %v1741 = vadd.f32 %v1689, %v1737
    %v1742 = vadd.f32 %v1690, %v1733
    %v1743 = vadd.f32 %v1691, %v1737
    %v1744 = vadd.f32 %v1692, %v1733
    %v1745 = vadd.f32 %v1693, %v1737
    %v1746 = vadd.f32 %v1694, %v1733
    %v1747 = vadd.f32 %v1695, %v1737
    %v1748 = vadd.f32 %v1696, %v1733
    %v1749 = vadd.f32 %v1697, %v1737
    %v1750 = vadd.f32 %v1698, %v1733
    %v1751 = vadd.f32 %v1699, %v1737
    %v1752 = vadd.f32 %v1700, %v1733
    %v1753 = vadd.f32 %v1701, %v1737
    %v1754 = vadd.f32 %v1702, %v1733
    %v1755 = vadd.f32 %v1703, %v1737
    %v1756 = vadd.f32 %v1704, %v1733
    %v1757 = vadd.f32 %v1705, %v1737
    %v1758 = vadd.f32 %v1706, %v1733
    %v1759 = vadd.f32 %v1707, %v1737
    %v1760 = vadd.f32 %v1708, %v1733
    %v1761 = vadd.f32 %v1709, %v1737
    %v1762 = vadd.f32 %v1710, %v1733
    %v1763 = vadd.f32 %v1711, %v1737
    %v1764 = vadd.f32 %v1712, %v1733
    %v1765 = vadd.f32 %v1713, %v1737
    %v1766 = vadd.f32 %v1714, %v1733
    %v1767 = vadd.f32 %v1715, %v1737
    %v1768 = vadd.f32 %v1716, %v1733
    %v1769 = vadd.f32 %v1717, %v1737
    %v1770 = vadd.f32 %v1718, %v1733
    %v1771 = vadd.f32 %v1719, %v1737
    %v1772 = vadd.f32 %v1720, %v1733
    %v1773 = vadd.f32 %v1721, %v1737
    %v1774 = vadd.f32 %v1722, %v1733
    %v1775 = vadd.f32 %v1723, %v1737
    %v1776 = vadd.f32 %v1724, %v1733
    %v1777 = vadd.f32 %v1725, %v1737
    %v1778 = vadd.f32 %v1726, %v1733
    %v1779 = vadd.f32 %v1727, %v1737
    %v1780 = vmax.f32 %v1740, 0.0
    %v1781 = vmax.f32 %v1741, 0.0
    %v1782 = vmax.f32 %v1742, 0.0
    %v1783 = vmax.f32 %v1743, 0.0
    %v1784 = vmax.f32 %v1744, 0.0
    %v1785 = vmax.f32 %v1745, 0.0
    %v1786 = vmax.f32 %v1746, 0.0
    %v1787 = vmax.f32 %v1747, 0.0
    %v1788 = vmax.f32 %v1748, 0.0
    %v1789 = vmax.f32 %v1749, 0.0
    %v1790 = vmax.f32 %v1750, 0.0
    %v1791 = vmax.f32 %v1751, 0.0
    %v1792 = vmax.f32 %v1752, 0.0
    %v1793 = vmax.f32 %v1753, 0.0
    %v1794 = vmax.f32 %v1754, 0.0
    %v1795 = vmax.f32 %v1755, 0.0
    %v1796 = vmax.f32 %v1756, 0.0
    %v1797 = vmax.f32 %v1757, 0.0
    %v1798 = vmax.f32 %v1758, 0.0
    %v1799 = vmax.f32 %v1759, 0.0
    %v1800 = vmax.f32 %v1760, 0.0
    %v1801 = vmax.f32 %v1761, 0.0
    %v1802 = vmax.f32 %v1762, 0.0
    %v1803 = vmax.f32 %v1763, 0.0
    %v1804 = vmax.f32 %v1764, 0.0
    %v1805 = vmax.f32 %v1765, 0.0
    %v1806 = vmax.f32 %v1766, 0.0
    %v1807 = vmax.f32 %v1767, 0.0
    %v1808 = vmax.f32 %v1768, 0.0
    %v1809 = vmax.f32 %v1769, 0.0
    %v1810 = vmax.f32 %v1770, 0.0
    %v1811 = vmax.f32 %v1771, 0.0
    %v1812 = vmax.f32 %v1772, 0.0
    %v1813 = vmax.f32 %v1773, 0.0
    %v1814 = vmax.f32 %v1774, 0.0
    %v1815 = vmax.f32 %v1775, 0.0
    %v1816 = vmax.f32 %v1776, 0.0
    %v1817 = vmax.f32 %v1777, 0.0
    %v1818 = vmax.f32 %v1778, 0.0
    %v1819 = vmax.f32 %v1779, 0.0
    %v1820 = vpack.c.bf16 %v1782, %v1780
    %v1821 = vpack.c.bf16 %v1783, %v1781
    %v1822 = vpack.c.bf16 %v1786, %v1784
    %v1823 = vpack.c.bf16 %v1787, %v1785
    %v1824 = vpack.c.bf16 %v1790, %v1788
    %v1825 = vpack.c.bf16 %v1791, %v1789
    %v1826 = vpack.c.bf16 %v1794, %v1792
    %v1827 = vpack.c.bf16 %v1795, %v1793
    %v1828 = vpack.c.bf16 %v1798, %v1796
    %v1829 = vpack.c.bf16 %v1799, %v1797
    %v1830 = vpack.c.bf16 %v1802, %v1800
    %v1831 = vpack.c.bf16 %v1803, %v1801
    %v1832 = vpack.c.bf16 %v1806, %v1804
    %v1833 = vpack.c.bf16 %v1807, %v1805
    %v1834 = vpack.c.bf16 %v1810, %v1808
    %v1835 = vpack.c.bf16 %v1811, %v1809
    %v1836 = vpack.c.bf16 %v1814, %v1812
    %v1837 = vpack.c.bf16 %v1815, %v1813
    %v1838 = vpack.c.bf16 %v1818, %v1816
    %v1839 = vpack.c.bf16 %v1819, %v1817
    %v1840 = vld [vmem:[#allocation7] sm:$0xff]
    %v1841 = vld [vmem:[#allocation7 + $0x8] sm:$0xff]
    %v1842 = vld [vmem:[#allocation7 + $0x10] sm:$0xff]
    %v1843 = vld [vmem:[#allocation7 + $0x18] sm:$0xff]
    %v1844 = vld [vmem:[#allocation7 + $0x20] sm:$0xff]
    %v1845 = vld [vmem:[#allocation7 + $0x28] sm:$0xff]
    %v1846 = vld [vmem:[#allocation7 + $0x30] sm:$0xff]
    %v1847 = vld [vmem:[#allocation7 + $0x38] sm:$0xff]
    %v1848 = vld [vmem:[#allocation7 + $0x40] sm:$0xff]
    %v1849 = vld [vmem:[#allocation7 + $0x48] sm:$0xff]
    %v1850 = vld [vmem:[#allocation7 + $0x50] sm:$0xff]
    %v1851 = vld [vmem:[#allocation7 + $0x58] sm:$0xff]
    %v1852 = vld [vmem:[#allocation7 + $0x60] sm:$0xff]
    %v1853 = vld [vmem:[#allocation7 + $0x68] sm:$0xff]
    %v1854 = vld [vmem:[#allocation7 + $0x70] sm:$0xff]
    %v1855 = vld [vmem:[#allocation7 + $0x78] sm:$0xff]
    %v1856 = vld [vmem:[#allocation7 + $0x80] sm:$0xff]
    %v1857 = vld [vmem:[#allocation7 + $0x88] sm:$0xff]
    %v1858 = vld [vmem:[#allocation7 + $0x90] sm:$0xff]
    %v1859 = vld [vmem:[#allocation7 + $0x98] sm:$0xff]
    %v1860 = vld [vmem:[#allocation7 + $0xa0] sm:$0xff]
    %v1861 = vld [vmem:[#allocation7 + $0xa8] sm:$0xff]
    %v1862 = vld [vmem:[#allocation7 + $0xb0] sm:$0xff]
    %v1863 = vld [vmem:[#allocation7 + $0xb8] sm:$0xff]
    %v1864 = vld [vmem:[#allocation7 + $0xc0] sm:$0xff]
    %v1865 = vld [vmem:[#allocation7 + $0xc8] sm:$0xff]
    %v1866 = vld [vmem:[#allocation7 + $0xd0] sm:$0xff]
    %v1867 = vld [vmem:[#allocation7 + $0xd8] sm:$0xff]
    %v1868 = vld [vmem:[#allocation7 + $0xe0] sm:$0xff]
    %v1869 = vld [vmem:[#allocation7 + $0xe8] sm:$0xff]
    %v1870 = vld [vmem:[#allocation7 + $0xf0] sm:$0xff]
    %v1871 = vld [vmem:[#allocation7 + $0xf8] sm:$0xff]
    %v1872 = vld [vmem:[#allocation7 + $0x100] sm:$0xff]
    %v1873 = vld [vmem:[#allocation7 + $0x108] sm:$0xff]
    %v1874 = vld [vmem:[#allocation7 + $0x110] sm:$0xff]
    %v1875 = vld [vmem:[#allocation7 + $0x118] sm:$0xff]
    %v1876 = vld [vmem:[#allocation7 + $0x120] sm:$0xff]
    %v1877 = vld [vmem:[#allocation7 + $0x128] sm:$0xff]
    %v1878 = vld [vmem:[#allocation7 + $0x130] sm:$0xff]
    %v1879 = vld [vmem:[#allocation7 + $0x138] sm:$0xff]
    %v1880 = vld [vmem:[#allocation7 + $0x140] sm:$0xff]
    %v1881 = vld [vmem:[#allocation7 + $0x148] sm:$0xff]
    %v1882 = vld [vmem:[#allocation7 + $0x150] sm:$0xff]
    %v1883 = vld [vmem:[#allocation7 + $0x158] sm:$0xff]
    %v1884 = vld [vmem:[#allocation7 + $0x160] sm:$0xff]
    %v1885 = vld [vmem:[#allocation7 + $0x168] sm:$0xff]
    %v1886 = vld [vmem:[#allocation7 + $0x170] sm:$0xff]
    %v1887 = vld [vmem:[#allocation7 + $0x178] sm:$0xff]
    %v1888 = vld [vmem:[#allocation7 + $0x180] sm:$0xff]
    %v1889 = vld [vmem:[#allocation7 + $0x188] sm:$0xff]
    %s1890 = scalar_lea.vmem [#allocation7], 400
    %v1891 = vld [vmem:[%s1890] sm:$0xff]
    %v1892 = vld [vmem:[%s1890 + $0x8] sm:$0xff]
    %v1893 = vld [vmem:[%s1890 + $0x10] sm:$0xff]
    %v1894 = vld [vmem:[%s1890 + $0x18] sm:$0xff]
    %v1895 = vld [vmem:[%s1890 + $0x20] sm:$0xff]
    %v1896 = vld [vmem:[%s1890 + $0x28] sm:$0xff]
    %v1897 = vld [vmem:[%s1890 + $0x30] sm:$0xff]
    %v1898 = vld [vmem:[%s1890 + $0x38] sm:$0xff]
    %v1899 = vld [vmem:[%s1890 + $0x40] sm:$0xff]
    %v1900 = vld [vmem:[%s1890 + $0x48] sm:$0xff]
    %v1901 = vld [vmem:[%s1890 + $0x50] sm:$0xff]
    %v1902 = vld [vmem:[%s1890 + $0x58] sm:$0xff]
    %v1903 = vld [vmem:[%s1890 + $0x60] sm:$0xff]
    %v1904 = vld [vmem:[%s1890 + $0x68] sm:$0xff]
    %v1905 = vld [vmem:[%s1890 + $0x70] sm:$0xff]
    %v1906 = vld [vmem:[%s1890 + $0x78] sm:$0xff]
    %v1907 = vld [vmem:[%s1890 + $0x80] sm:$0xff]
    %v1908 = vld [vmem:[%s1890 + $0x88] sm:$0xff]
    %v1909 = vld [vmem:[%s1890 + $0x90] sm:$0xff]
    %v1910 = vld [vmem:[%s1890 + $0x98] sm:$0xff]
    %v1911 = vld [vmem:[%s1890 + $0xa0] sm:$0xff]
    %v1912 = vld [vmem:[%s1890 + $0xa8] sm:$0xff]
    %v1913 = vld [vmem:[%s1890 + $0xb0] sm:$0xff]
    %v1914 = vld [vmem:[%s1890 + $0xb8] sm:$0xff]
    %v1915 = vld [vmem:[%s1890 + $0xc0] sm:$0xff]
    %v1916 = vld [vmem:[%s1890 + $0xc8] sm:$0xff]
    %v1917 = vld [vmem:[%s1890 + $0xd0] sm:$0xff]
    %v1918 = vld [vmem:[%s1890 + $0xd8] sm:$0xff]
    %v1919 = vld [vmem:[%s1890 + $0xe0] sm:$0xff]
    %v1920 = vld [vmem:[%s1890 + $0xe8] sm:$0xff]
    %v1921 = vld [vmem:[%s1890 + $0xf0] sm:$0xff]
    %v1922 = vld [vmem:[%s1890 + $0xf8] sm:$0xff]
    %v1923 = vld [vmem:[%s1890 + $0x100] sm:$0xff]
    %v1924 = vld [vmem:[%s1890 + $0x108] sm:$0xff]
    %v1925 = vld [vmem:[%s1890 + $0x110] sm:$0xff]
    %v1926 = vld [vmem:[%s1890 + $0x118] sm:$0xff]
    %v1927 = vld [vmem:[%s1890 + $0x120] sm:$0xff]
    %v1928 = vld [vmem:[%s1890 + $0x128] sm:$0xff]
    %v1929 = vld [vmem:[%s1890 + $0x130] sm:$0xff]
    %v1930 = vld [vmem:[%s1890 + $0x138] sm:$0xff]
    %v1931 = vld [vmem:[%s1890 + $0x140] sm:$0xff]
    %v1932 = vld [vmem:[%s1890 + $0x148] sm:$0xff]
    %v1933 = vld [vmem:[%s1890 + $0x150] sm:$0xff]
    %v1934 = vld [vmem:[%s1890 + $0x158] sm:$0xff]
    %v1935 = vld [vmem:[%s1890 + $0x160] sm:$0xff]
    %v1936 = vld [vmem:[%s1890 + $0x168] sm:$0xff]
    %v1937 = vld [vmem:[%s1890 + $0x170] sm:$0xff]
    %v1938 = vld [vmem:[%s1890 + $0x178] sm:$0xff]
    %v1939 = vld [vmem:[%s1890 + $0x180] sm:$0xff]
    %v1940 = vld [vmem:[%s1890 + $0x188] sm:$0xff]
    %v1991 = vunpack.c.l.b16 %v1891
    %v1992 = vunpack.c.h.b16 %v1891
    %v1993 = vunpack.c.l.b16 %v1892
    %v1994 = vunpack.c.h.b16 %v1892
    %v1995 = vunpack.c.l.b16 %v1893
    %v1996 = vunpack.c.h.b16 %v1893
    %v1997 = vunpack.c.l.b16 %v1894
    %v1998 = vunpack.c.h.b16 %v1894
    %v1999 = vunpack.c.l.b16 %v1895
    %v2000 = vunpack.c.h.b16 %v1895
    %v2001 = vunpack.c.l.b16 %v1896
    %v2002 = vunpack.c.h.b16 %v1896
    %v2003 = vunpack.c.l.b16 %v1897
    %v2004 = vunpack.c.h.b16 %v1897
    %v2005 = vunpack.c.l.b16 %v1898
    %v2006 = vunpack.c.h.b16 %v1898
    %v2007 = vunpack.c.l.b16 %v1899
    %v2008 = vunpack.c.h.b16 %v1899
    %v2009 = vunpack.c.l.b16 %v1900
    %v2010 = vunpack.c.h.b16 %v1900
    %v2011 = vunpack.c.l.b16 %v1901
    %v2012 = vunpack.c.h.b16 %v1901
    %v2013 = vunpack.c.l.b16 %v1902
    %v2014 = vunpack.c.h.b16 %v1902
    %v2015 = vunpack.c.l.b16 %v1903
    %v2016 = vunpack.c.h.b16 %v1903
    %v2017 = vunpack.c.l.b16 %v1904
    %v2018 = vunpack.c.h.b16 %v1904
    %v2019 = vunpack.c.l.b16 %v1905
    %v2020 = vunpack.c.h.b16 %v1905
    %v2021 = vunpack.c.l.b16 %v1906
    %v2022 = vunpack.c.h.b16 %v1906
    %v2023 = vunpack.c.l.b16 %v1907
    %v2024 = vunpack.c.h.b16 %v1907
    %v2025 = vunpack.c.l.b16 %v1908
    %v2026 = vunpack.c.h.b16 %v1908
    %v2027 = vunpack.c.l.b16 %v1909
    %v2028 = vunpack.c.h.b16 %v1909
    %v2029 = vunpack.c.l.b16 %v1910
    %v2030 = vunpack.c.h.b16 %v1910
    %v2031 = vunpack.c.l.b16 %v1911
    %v2032 = vunpack.c.h.b16 %v1911
    %v2033 = vunpack.c.l.b16 %v1912
    %v2034 = vunpack.c.h.b16 %v1912
    %v2035 = vunpack.c.l.b16 %v1913
    %v2036 = vunpack.c.h.b16 %v1913
    %v2037 = vunpack.c.l.b16 %v1914
    %v2038 = vunpack.c.h.b16 %v1914
    %v2039 = vunpack.c.l.b16 %v1915
    %v2040 = vunpack.c.h.b16 %v1915
    %v2041 = vunpack.c.l.b16 %v1916
    %v2042 = vunpack.c.h.b16 %v1916
    %v2043 = vunpack.c.l.b16 %v1917
    %v2044 = vunpack.c.h.b16 %v1917
    %v2045 = vunpack.c.l.b16 %v1918
    %v2046 = vunpack.c.h.b16 %v1918
    %v2047 = vunpack.c.l.b16 %v1919
    %v2048 = vunpack.c.h.b16 %v1919
    %v2049 = vunpack.c.l.b16 %v1920
    %v2050 = vunpack.c.h.b16 %v1920
    %v2051 = vunpack.c.l.b16 %v1921
    %v2052 = vunpack.c.h.b16 %v1921
    %v2053 = vunpack.c.l.b16 %v1922
    %v2054 = vunpack.c.h.b16 %v1922
    %v2055 = vunpack.c.l.b16 %v1923
    %v2056 = vunpack.c.h.b16 %v1923
    %v2057 = vunpack.c.l.b16 %v1924
    %v2058 = vunpack.c.h.b16 %v1924
    %v2059 = vunpack.c.l.b16 %v1925
    %v2060 = vunpack.c.h.b16 %v1925
    %v2061 = vunpack.c.l.b16 %v1926
    %v2062 = vunpack.c.h.b16 %v1926
    %v2063 = vunpack.c.l.b16 %v1927
    %v2064 = vunpack.c.h.b16 %v1927
    %v2065 = vunpack.c.l.b16 %v1928
    %v2066 = vunpack.c.h.b16 %v1928
    %v2067 = vunpack.c.l.b16 %v1929
    %v2068 = vunpack.c.h.b16 %v1929
    %v2069 = vunpack.c.l.b16 %v1930
    %v2070 = vunpack.c.h.b16 %v1930
    %v2071 = vunpack.c.l.b16 %v1931
    %v2072 = vunpack.c.h.b16 %v1931
    %v2073 = vunpack.c.l.b16 %v1932
    %v2074 = vunpack.c.h.b16 %v1932
    %v2075 = vunpack.c.l.b16 %v1933
    %v2076 = vunpack.c.h.b16 %v1933
    %v2077 = vunpack.c.l.b16 %v1934
    %v2078 = vunpack.c.h.b16 %v1934
    %v2079 = vunpack.c.l.b16 %v1935
    %v2080 = vunpack.c.h.b16 %v1935
    %v2081 = vunpack.c.l.b16 %v1936
    %v2082 = vunpack.c.h.b16 %v1936
    %v2083 = vunpack.c.l.b16 %v1937
    %v2084 = vunpack.c.h.b16 %v1937
    %v2085 = vunpack.c.l.b16 %v1938
    %v2086 = vunpack.c.h.b16 %v1938
    %v2087 = vunpack.c.l.b16 %v1939
    %v2088 = vunpack.c.h.b16 %v1939
    %v2089 = vunpack.c.l.b16 %v1940
    %v2090 = vunpack.c.h.b16 %v1940
    %v2091 = vpack.c.b16 %v1995, %v1991
    %v2092 = vpack.c.b16 %v1996, %v1992
    %v2093 = vpack.c.b16 %v1997, %v1993
    %v2094 = vpack.c.b16 %v1998, %v1994
    %v2095 = vpack.c.b16 %v2003, %v1999
    %v2096 = vpack.c.b16 %v2004, %v2000
    %v2097 = vpack.c.b16 %v2005, %v2001
    %v2098 = vpack.c.b16 %v2006, %v2002
    %v2099 = vpack.c.b16 %v2011, %v2007
    %v2100 = vpack.c.b16 %v2012, %v2008
    %v2101 = vpack.c.b16 %v2013, %v2009
    %v2102 = vpack.c.b16 %v2014, %v2010
    %v2103 = vpack.c.b16 %v2019, %v2015
    %v2104 = vpack.c.b16 %v2020, %v2016
    %v2105 = vpack.c.b16 %v2021, %v2017
    %v2106 = vpack.c.b16 %v2022, %v2018
    %v2107 = vpack.c.b16 %v2027, %v2023
    %v2108 = vpack.c.b16 %v2028, %v2024
    %v2109 = vpack.c.b16 %v2029, %v2025
    %v2110 = vpack.c.b16 %v2030, %v2026
    %v2111 = vpack.c.b16 %v2035, %v2031
    %v2112 = vpack.c.b16 %v2036, %v2032
    %v2113 = vpack.c.b16 %v2037, %v2033
    %v2114 = vpack.c.b16 %v2038, %v2034
    %v2115 = vpack.c.b16 %v2043, %v2039
    %v2116 = vpack.c.b16 %v2044, %v2040
    %v2117 = vpack.c.b16 %v2045, %v2041
    %v2118 = vpack.c.b16 %v2046, %v2042
    %v2119 = vpack.c.b16 %v2051, %v2047
    %v2120 = vpack.c.b16 %v2052, %v2048
    %v2121 = vpack.c.b16 %v2053, %v2049
    %v2122 = vpack.c.b16 %v2054, %v2050
    %v2123 = vpack.c.b16 %v2059, %v2055
    %v2124 = vpack.c.b16 %v2060, %v2056
    %v2125 = vpack.c.b16 %v2061, %v2057
    %v2126 = vpack.c.b16 %v2062, %v2058
    %v2127 = vpack.c.b16 %v2067, %v2063
    %v2128 = vpack.c.b16 %v2068, %v2064
    %v2129 = vpack.c.b16 %v2069, %v2065
    %v2130 = vpack.c.b16 %v2070, %v2066
    %v2131 = vpack.c.b16 %v2075, %v2071
    %v2132 = vpack.c.b16 %v2076, %v2072
    %v2133 = vpack.c.b16 %v2077, %v2073
    %v2134 = vpack.c.b16 %v2078, %v2074
    %v2135 = vpack.c.b16 %v2083, %v2079
    %v2136 = vpack.c.b16 %v2084, %v2080
    %v2137 = vpack.c.b16 %v2085, %v2081
    %v2138 = vpack.c.b16 %v2086, %v2082
    %v2139 = vpack.c.b16 %v2087, %v2087
    %v2140 = vpack.c.b16 %v2088, %v2088
    %v2141 = vpack.c.b16 %v2089, %v2089
    %v2142 = vpack.c.b16 %v2090, %v2090
    %vm2191 = vcmask 588800
    %v2193 = vsel %vm2191, %v1823, 0
    %v2196 = vsel %vm541, %v2139, 0
    %v2199 = vsel %vm541, %v2140, 0
    %v2202 = vsel %vm541, %v2141, 0
    %v2205 = vsel %vm541, %v2142, 0
    %2207 = vmatprep.subr.bf16.mxu0 %v2120
    %2208 = vmatpush1.bf16.msra.mxu0 %v2119
    %2209 = vmatprep.subr.bf16.mxu0 %v2116
    %2210 = vmatpush1.bf16.msra.mxu0 %v2115
    %2211 = vmatprep.subr.bf16.mxu0 %v2112
    %2212 = vmatpush1.bf16.msra.mxu0 %v2111
    %2213 = vmatprep.subr.bf16.mxu0 %v2108
    %2214 = vmatpush1.bf16.msra.mxu0 %v2107
    %2215 = vmatprep.subr.bf16.mxu0 %v2104
    %2216 = vmatpush1.bf16.msra.mxu0 %v2103
    %2217 = vmatprep.subr.bf16.mxu0 %v2100
    %2218 = vmatpush1.bf16.msra.mxu0 %v2099
    %2219 = vmatprep.subr.bf16.mxu0 %v2096
    %2220 = vmatpush1.bf16.msra.mxu0 %v2095
    %2221 = vmatprep.subr.bf16.mxu0 %v2092
    %2222 = vmatpush1.bf16.msra.mxu0 %v2091
    %2223 = vmatprep.subr.bf16.mxu0 0
    %2224 = vmatpush2.bf16.msra.mxu0 0
    %2225 = vmatprep.subr.bf16.mxu0 0
    %2226 = vmatpush2.bf16.msra.mxu0 0
    %2227 = vmatprep.subr.bf16.mxu0 0
    %2228 = vmatpush2.bf16.msra.mxu0 0
    %2229 = vmatprep.subr.bf16.mxu0 %v2199
    %2230 = vmatpush2.bf16.msra.mxu0 %v2196
    %2231 = vmatprep.subr.bf16.mxu0 %v2136
    %2232 = vmatpush2.bf16.msra.mxu0 %v2135
    %2233 = vmatprep.subr.bf16.mxu0 %v2132
    %2234 = vmatpush2.bf16.msra.mxu0 %v2131
    %2235 = vmatprep.subr.bf16.mxu0 %v2128
    %2236 = vmatpush2.bf16.msra.mxu0 %v2127
    %2237 = vmatprep.subr.bf16.mxu0 %v2124
    %2238 = vmatpush2.bf16.msra.mxu0 %v2123
    %2239 = vmatprep.mubr.bf16.mxu0 %v2193
    %2240 = vmatmul.mubr.bf16.gmra.mxu0 %v1822
    %v2241 = vpop.f32.mrf.mxu0
    %v2242 = vadd.f32 0.0, %v2241
    %v2243 = vpop.f32.mrf.mxu0
    %v2244 = vadd.f32 0.0, %v2243
    %v2245 = vpop.f32.mrf.mxu0
    %v2246 = vadd.f32 0.0, %v2245
    %v2247 = vpop.f32.mrf.mxu0
    %v2248 = vadd.f32 0.0, %v2247
    %2249 = vdwg.mxu0
    %2250 = vmatprep.subr.bf16.mxu0 %v2122
    %2251 = vmatpush1.bf16.msra.mxu0 %v2121
    %2252 = vmatprep.subr.bf16.mxu0 %v2118
    %2253 = vmatpush1.bf16.msra.mxu0 %v2117
    %2254 = vmatprep.subr.bf16.mxu0 %v2114
    %2255 = vmatpush1.bf16.msra.mxu0 %v2113
    %2256 = vmatprep.subr.bf16.mxu0 %v2110
    %2257 = vmatpush1.bf16.msra.mxu0 %v2109
    %2258 = vmatprep.subr.bf16.mxu0 %v2106
    %2259 = vmatpush1.bf16.msra.mxu0 %v2105
    %2260 = vmatprep.subr.bf16.mxu0 %v2102
    %2261 = vmatpush1.bf16.msra.mxu0 %v2101
    %2262 = vmatprep.subr.bf16.mxu0 %v2098
    %2263 = vmatpush1.bf16.msra.mxu0 %v2097
    %2264 = vmatprep.subr.bf16.mxu0 %v2094
    %2265 = vmatpush1.bf16.msra.mxu0 %v2093
    %2266 = vmatprep.subr.bf16.mxu0 0
    %2267 = vmatpush2.bf16.msra.mxu0 0
    %2268 = vmatprep.subr.bf16.mxu0 0
    %2269 = vmatpush2.bf16.msra.mxu0 0
    %2270 = vmatprep.subr.bf16.mxu0 0
    %2271 = vmatpush2.bf16.msra.mxu0 0
    %2272 = vmatprep.subr.bf16.mxu0 %v2205
    %2273 = vmatpush2.bf16.msra.mxu0 %v2202
    %2274 = vmatprep.subr.bf16.mxu0 %v2138
    %2275 = vmatpush2.bf16.msra.mxu0 %v2137
    %2276 = vmatprep.subr.bf16.mxu0 %v2134
    %2277 = vmatpush2.bf16.msra.mxu0 %v2133
    %2278 = vmatprep.subr.bf16.mxu0 %v2130
    %2279 = vmatpush2.bf16.msra.mxu0 %v2129
    %2280 = vmatprep.subr.bf16.mxu0 %v2126
    %2281 = vmatpush2.bf16.msra.mxu0 %v2125
    %2282 = vmatprep.mubr.bf16.mxu0 %v2193
    %2283 = vmatmul.mubr.bf16.gmra.mxu0 %v1822
    %v2284 = vpop.f32.mrf.mxu0
    %v2285 = vadd.f32 0.0, %v2284
    %v2286 = vpop.f32.mrf.mxu0
    %v2287 = vadd.f32 0.0, %v2286
    %v2288 = vpop.f32.mrf.mxu0
    %v2289 = vadd.f32 0.0, %v2288
    %v2290 = vpop.f32.mrf.mxu0
    %v2291 = vadd.f32 0.0, %v2290
    %2292 = vdwg.mxu0
    %v2343 = vunpack.c.l.b16 %v1840
    %v2344 = vunpack.c.h.b16 %v1840
    %v2345 = vunpack.c.l.b16 %v1841
    %v2346 = vunpack.c.h.b16 %v1841
    %v2347 = vunpack.c.l.b16 %v1842
    %v2348 = vunpack.c.h.b16 %v1842
    %v2349 = vunpack.c.l.b16 %v1843
    %v2350 = vunpack.c.h.b16 %v1843
    %v2351 = vunpack.c.l.b16 %v1844
    %v2352 = vunpack.c.h.b16 %v1844
    %v2353 = vunpack.c.l.b16 %v1845
    %v2354 = vunpack.c.h.b16 %v1845
    %v2355 = vunpack.c.l.b16 %v1846
    %v2356 = vunpack.c.h.b16 %v1846
    %v2357 = vunpack.c.l.b16 %v1847
    %v2358 = vunpack.c.h.b16 %v1847
    %v2359 = vunpack.c.l.b16 %v1848
    %v2360 = vunpack.c.h.b16 %v1848
    %v2361 = vunpack.c.l.b16 %v1849
    %v2362 = vunpack.c.h.b16 %v1849
    %v2363 = vunpack.c.l.b16 %v1850
    %v2364 = vunpack.c.h.b16 %v1850
    %v2365 = vunpack.c.l.b16 %v1851
    %v2366 = vunpack.c.h.b16 %v1851
    %v2367 = vunpack.c.l.b16 %v1852
    %v2368 = vunpack.c.h.b16 %v1852
    %v2369 = vunpack.c.l.b16 %v1853
    %v2370 = vunpack.c.h.b16 %v1853
    %v2371 = vunpack.c.l.b16 %v1854
    %v2372 = vunpack.c.h.b16 %v1854
    %v2373 = vunpack.c.l.b16 %v1855
    %v2374 = vunpack.c.h.b16 %v1855
    %v2375 = vunpack.c.l.b16 %v1856
    %v2376 = vunpack.c.h.b16 %v1856
    %v2377 = vunpack.c.l.b16 %v1857
    %v2378 = vunpack.c.h.b16 %v1857
    %v2379 = vunpack.c.l.b16 %v1858
    %v2380 = vunpack.c.h.b16 %v1858
    %v2381 = vunpack.c.l.b16 %v1859
    %v2382 = vunpack.c.h.b16 %v1859
    %v2383 = vunpack.c.l.b16 %v1860
    %v2384 = vunpack.c.h.b16 %v1860
    %v2385 = vunpack.c.l.b16 %v1861
    %v2386 = vunpack.c.h.b16 %v1861
    %v2387 = vunpack.c.l.b16 %v1862
    %v2388 = vunpack.c.h.b16 %v1862
    %v2389 = vunpack.c.l.b16 %v1863
    %v2390 = vunpack.c.h.b16 %v1863
    %v2391 = vunpack.c.l.b16 %v1864
    %v2392 = vunpack.c.h.b16 %v1864
    %v2393 = vunpack.c.l.b16 %v1865
    %v2394 = vunpack.c.h.b16 %v1865
    %v2395 = vunpack.c.l.b16 %v1866
    %v2396 = vunpack.c.h.b16 %v1866
    %v2397 = vunpack.c.l.b16 %v1867
    %v2398 = vunpack.c.h.b16 %v1867
    %v2399 = vunpack.c.l.b16 %v1868
    %v2400 = vunpack.c.h.b16 %v1868
    %v2401 = vunpack.c.l.b16 %v1869
    %v2402 = vunpack.c.h.b16 %v1869
    %v2403 = vunpack.c.l.b16 %v1870
    %v2404 = vunpack.c.h.b16 %v1870
    %v2405 = vunpack.c.l.b16 %v1871
    %v2406 = vunpack.c.h.b16 %v1871
    %v2407 = vunpack.c.l.b16 %v1872
    %v2408 = vunpack.c.h.b16 %v1872
    %v2409 = vunpack.c.l.b16 %v1873
    %v2410 = vunpack.c.h.b16 %v1873
    %v2411 = vunpack.c.l.b16 %v1874
    %v2412 = vunpack.c.h.b16 %v1874
    %v2413 = vunpack.c.l.b16 %v1875
    %v2414 = vunpack.c.h.b16 %v1875
    %v2415 = vunpack.c.l.b16 %v1876
    %v2416 = vunpack.c.h.b16 %v1876
    %v2417 = vunpack.c.l.b16 %v1877
    %v2418 = vunpack.c.h.b16 %v1877
    %v2419 = vunpack.c.l.b16 %v1878
    %v2420 = vunpack.c.h.b16 %v1878
    %v2421 = vunpack.c.l.b16 %v1879
    %v2422 = vunpack.c.h.b16 %v1879
    %v2423 = vunpack.c.l.b16 %v1880
    %v2424 = vunpack.c.h.b16 %v1880
    %v2425 = vunpack.c.l.b16 %v1881
    %v2426 = vunpack.c.h.b16 %v1881
    %v2427 = vunpack.c.l.b16 %v1882
    %v2428 = vunpack.c.h.b16 %v1882
    %v2429 = vunpack.c.l.b16 %v1883
    %v2430 = vunpack.c.h.b16 %v1883
    %v2431 = vunpack.c.l.b16 %v1884
    %v2432 = vunpack.c.h.b16 %v1884
    %v2433 = vunpack.c.l.b16 %v1885
    %v2434 = vunpack.c.h.b16 %v1885
    %v2435 = vunpack.c.l.b16 %v1886
    %v2436 = vunpack.c.h.b16 %v1886
    %v2437 = vunpack.c.l.b16 %v1887
    %v2438 = vunpack.c.h.b16 %v1887
    %v2439 = vunpack.c.l.b16 %v1888
    %v2440 = vunpack.c.h.b16 %v1888
    %v2441 = vunpack.c.l.b16 %v1889
    %v2442 = vunpack.c.h.b16 %v1889
    %v2443 = vpack.c.b16 %v2347, %v2343
    %v2444 = vpack.c.b16 %v2348, %v2344
    %v2445 = vpack.c.b16 %v2349, %v2345
    %v2446 = vpack.c.b16 %v2350, %v2346
    %v2447 = vpack.c.b16 %v2355, %v2351
    %v2448 = vpack.c.b16 %v2356, %v2352
    %v2449 = vpack.c.b16 %v2357, %v2353
    %v2450 = vpack.c.b16 %v2358, %v2354
    %v2451 = vpack.c.b16 %v2363, %v2359
    %v2452 = vpack.c.b16 %v2364, %v2360
    %v2453 = vpack.c.b16 %v2365, %v2361
    %v2454 = vpack.c.b16 %v2366, %v2362
    %v2455 = vpack.c.b16 %v2371, %v2367
    %v2456 = vpack.c.b16 %v2372, %v2368
    %v2457 = vpack.c.b16 %v2373, %v2369
    %v2458 = vpack.c.b16 %v2374, %v2370
    %v2459 = vpack.c.b16 %v2379, %v2375
    %v2460 = vpack.c.b16 %v2380, %v2376
    %v2461 = vpack.c.b16 %v2381, %v2377
    %v2462 = vpack.c.b16 %v2382, %v2378
    %v2463 = vpack.c.b16 %v2387, %v2383
    %v2464 = vpack.c.b16 %v2388, %v2384
    %v2465 = vpack.c.b16 %v2389, %v2385
    %v2466 = vpack.c.b16 %v2390, %v2386
    %v2467 = vpack.c.b16 %v2395, %v2391
    %v2468 = vpack.c.b16 %v2396, %v2392
    %v2469 = vpack.c.b16 %v2397, %v2393
    %v2470 = vpack.c.b16 %v2398, %v2394
    %v2471 = vpack.c.b16 %v2403, %v2399
    %v2472 = vpack.c.b16 %v2404, %v2400
    %v2473 = vpack.c.b16 %v2405, %v2401
    %v2474 = vpack.c.b16 %v2406, %v2402
    %v2475 = vpack.c.b16 %v2411, %v2407
    %v2476 = vpack.c.b16 %v2412, %v2408
    %v2477 = vpack.c.b16 %v2413, %v2409
    %v2478 = vpack.c.b16 %v2414, %v2410
    %v2479 = vpack.c.b16 %v2419, %v2415
    %v2480 = vpack.c.b16 %v2420, %v2416
    %v2481 = vpack.c.b16 %v2421, %v2417
    %v2482 = vpack.c.b16 %v2422, %v2418
    %v2483 = vpack.c.b16 %v2427, %v2423
    %v2484 = vpack.c.b16 %v2428, %v2424
    %v2485 = vpack.c.b16 %v2429, %v2425
    %v2486 = vpack.c.b16 %v2430, %v2426
    %v2487 = vpack.c.b16 %v2435, %v2431
    %v2488 = vpack.c.b16 %v2436, %v2432
    %v2489 = vpack.c.b16 %v2437, %v2433
    %v2490 = vpack.c.b16 %v2438, %v2434
    %v2491 = vpack.c.b16 %v2439, %v2439
    %v2492 = vpack.c.b16 %v2440, %v2440
    %v2493 = vpack.c.b16 %v2441, %v2441
    %v2494 = vpack.c.b16 %v2442, %v2442
    %v2544 = vsel %vm2191, %v1821, 0
    %v2547 = vsel %vm541, %v2491, 0
    %v2550 = vsel %vm541, %v2492, 0
    %v2553 = vsel %vm541, %v2493, 0
    %v2556 = vsel %vm541, %v2494, 0
    %2558 = vmatprep.subr.bf16.mxu0 %v2472
    %2559 = vmatpush1.bf16.msra.mxu0 %v2471
    %2560 = vmatprep.subr.bf16.mxu0 %v2468
    %2561 = vmatpush1.bf16.msra.mxu0 %v2467
    %2562 = vmatprep.subr.bf16.mxu0 %v2464
    %2563 = vmatpush1.bf16.msra.mxu0 %v2463
    %2564 = vmatprep.subr.bf16.mxu0 %v2460
    %2565 = vmatpush1.bf16.msra.mxu0 %v2459
    %2566 = vmatprep.subr.bf16.mxu0 %v2456
    %2567 = vmatpush1.bf16.msra.mxu0 %v2455
    %2568 = vmatprep.subr.bf16.mxu0 %v2452
    %2569 = vmatpush1.bf16.msra.mxu0 %v2451
    %2570 = vmatprep.subr.bf16.mxu0 %v2448
    %2571 = vmatpush1.bf16.msra.mxu0 %v2447
    %2572 = vmatprep.subr.bf16.mxu0 %v2444
    %2573 = vmatpush1.bf16.msra.mxu0 %v2443
    %2574 = vmatprep.subr.bf16.mxu0 0
    %2575 = vmatpush2.bf16.msra.mxu0 0
    %2576 = vmatprep.subr.bf16.mxu0 0
    %2577 = vmatpush2.bf16.msra.mxu0 0
    %2578 = vmatprep.subr.bf16.mxu0 0
    %2579 = vmatpush2.bf16.msra.mxu0 0
    %2580 = vmatprep.subr.bf16.mxu0 %v2550
    %2581 = vmatpush2.bf16.msra.mxu0 %v2547
    %2582 = vmatprep.subr.bf16.mxu0 %v2488
    %2583 = vmatpush2.bf16.msra.mxu0 %v2487
    %2584 = vmatprep.subr.bf16.mxu0 %v2484
    %2585 = vmatpush2.bf16.msra.mxu0 %v2483
    %2586 = vmatprep.subr.bf16.mxu0 %v2480
    %2587 = vmatpush2.bf16.msra.mxu0 %v2479
    %2588 = vmatprep.subr.bf16.mxu0 %v2476
    %2589 = vmatpush2.bf16.msra.mxu0 %v2475
    %2590 = vmatprep.mubr.bf16.mxu0 %v2544
    %2591 = vmatmul.mubr.bf16.gmra.mxu0 %v1820
    %v2592 = vpop.f32.mrf.mxu0
    %v2593 = vadd.f32 %v2242, %v2592
    %v2594 = vpop.f32.mrf.mxu0
    %v2595 = vadd.f32 %v2244, %v2594
    %v2596 = vpop.f32.mrf.mxu0
    %v2597 = vadd.f32 %v2246, %v2596
    %v2598 = vpop.f32.mrf.mxu0
    %v2599 = vadd.f32 %v2248, %v2598
    %2600 = vdwg.mxu0
    %2601 = vmatprep.subr.bf16.mxu0 %v2474
    %2602 = vmatpush1.bf16.msra.mxu0 %v2473
    %2603 = vmatprep.subr.bf16.mxu0 %v2470
    %2604 = vmatpush1.bf16.msra.mxu0 %v2469
    %2605 = vmatprep.subr.bf16.mxu0 %v2466
    %2606 = vmatpush1.bf16.msra.mxu0 %v2465
    %2607 = vmatprep.subr.bf16.mxu0 %v2462
    %2608 = vmatpush1.bf16.msra.mxu0 %v2461
    %2609 = vmatprep.subr.bf16.mxu0 %v2458
    %2610 = vmatpush1.bf16.msra.mxu0 %v2457
    %2611 = vmatprep.subr.bf16.mxu0 %v2454
    %2612 = vmatpush1.bf16.msra.mxu0 %v2453
    %2613 = vmatprep.subr.bf16.mxu0 %v2450
    %2614 = vmatpush1.bf16.msra.mxu0 %v2449
    %2615 = vmatprep.subr.bf16.mxu0 %v2446
    %2616 = vmatpush1.bf16.msra.mxu0 %v2445
    %2617 = vmatprep.subr.bf16.mxu0 0
    %2618 = vmatpush2.bf16.msra.mxu0 0
    %2619 = vmatprep.subr.bf16.mxu0 0
    %2620 = vmatpush2.bf16.msra.mxu0 0
    %2621 = vmatprep.subr.bf16.mxu0 0
    %2622 = vmatpush2.bf16.msra.mxu0 0
    %2623 = vmatprep.subr.bf16.mxu0 %v2556
    %2624 = vmatpush2.bf16.msra.mxu0 %v2553
    %2625 = vmatprep.subr.bf16.mxu0 %v2490
    %2626 = vmatpush2.bf16.msra.mxu0 %v2489
    %2627 = vmatprep.subr.bf16.mxu0 %v2486
    %2628 = vmatpush2.bf16.msra.mxu0 %v2485
    %2629 = vmatprep.subr.bf16.mxu0 %v2482
    %2630 = vmatpush2.bf16.msra.mxu0 %v2481
    %2631 = vmatprep.subr.bf16.mxu0 %v2478
    %2632 = vmatpush2.bf16.msra.mxu0 %v2477
    %2633 = vmatprep.mubr.bf16.mxu0 %v2544
    %2634 = vmatmul.mubr.bf16.gmra.mxu0 %v1820
    %v2635 = vpop.f32.mrf.mxu0
    %v2636 = vadd.f32 %v2285, %v2635
    %v2637 = vpop.f32.mrf.mxu0
    %v2638 = vadd.f32 %v2287, %v2637
    %v2639 = vpop.f32.mrf.mxu0
    %v2640 = vadd.f32 %v2289, %v2639
    %v2641 = vpop.f32.mrf.mxu0
    %v2642 = vadd.f32 %v2291, %v2641
    %2643 = vdwg.mxu0
    %s2644 = scalar_lea.vmem [#allocation7], 800
    %v2645 = vld [vmem:[%s2644] sm:$0xff]
    %v2646 = vld [vmem:[%s2644 + $0x8] sm:$0xff]
    %v2647 = vld [vmem:[%s2644 + $0x10] sm:$0xff]
    %v2648 = vld [vmem:[%s2644 + $0x18] sm:$0xff]
    %v2649 = vld [vmem:[%s2644 + $0x20] sm:$0xff]
    %v2650 = vld [vmem:[%s2644 + $0x28] sm:$0xff]
    %v2651 = vld [vmem:[%s2644 + $0x30] sm:$0xff]
    %v2652 = vld [vmem:[%s2644 + $0x38] sm:$0xff]
    %v2653 = vld [vmem:[%s2644 + $0x40] sm:$0xff]
    %v2654 = vld [vmem:[%s2644 + $0x48] sm:$0xff]
    %v2655 = vld [vmem:[%s2644 + $0x50] sm:$0xff]
    %v2656 = vld [vmem:[%s2644 + $0x58] sm:$0xff]
    %v2657 = vld [vmem:[%s2644 + $0x60] sm:$0xff]
    %v2658 = vld [vmem:[%s2644 + $0x68] sm:$0xff]
    %v2659 = vld [vmem:[%s2644 + $0x70] sm:$0xff]
    %v2660 = vld [vmem:[%s2644 + $0x78] sm:$0xff]
    %v2661 = vld [vmem:[%s2644 + $0x80] sm:$0xff]
    %v2662 = vld [vmem:[%s2644 + $0x88] sm:$0xff]
    %v2663 = vld [vmem:[%s2644 + $0x90] sm:$0xff]
    %v2664 = vld [vmem:[%s2644 + $0x98] sm:$0xff]
    %v2665 = vld [vmem:[%s2644 + $0xa0] sm:$0xff]
    %v2666 = vld [vmem:[%s2644 + $0xa8] sm:$0xff]
    %v2667 = vld [vmem:[%s2644 + $0xb0] sm:$0xff]
    %v2668 = vld [vmem:[%s2644 + $0xb8] sm:$0xff]
    %v2669 = vld [vmem:[%s2644 + $0xc0] sm:$0xff]
    %v2670 = vld [vmem:[%s2644 + $0xc8] sm:$0xff]
    %v2671 = vld [vmem:[%s2644 + $0xd0] sm:$0xff]
    %v2672 = vld [vmem:[%s2644 + $0xd8] sm:$0xff]
    %v2673 = vld [vmem:[%s2644 + $0xe0] sm:$0xff]
    %v2674 = vld [vmem:[%s2644 + $0xe8] sm:$0xff]
    %v2675 = vld [vmem:[%s2644 + $0xf0] sm:$0xff]
    %v2676 = vld [vmem:[%s2644 + $0xf8] sm:$0xff]
    %v2677 = vld [vmem:[%s2644 + $0x100] sm:$0xff]
    %v2678 = vld [vmem:[%s2644 + $0x108] sm:$0xff]
    %v2679 = vld [vmem:[%s2644 + $0x110] sm:$0xff]
    %v2680 = vld [vmem:[%s2644 + $0x118] sm:$0xff]
    %v2681 = vld [vmem:[%s2644 + $0x120] sm:$0xff]
    %v2682 = vld [vmem:[%s2644 + $0x128] sm:$0xff]
    %v2683 = vld [vmem:[%s2644 + $0x130] sm:$0xff]
    %v2684 = vld [vmem:[%s2644 + $0x138] sm:$0xff]
    %v2685 = vld [vmem:[%s2644 + $0x140] sm:$0xff]
    %v2686 = vld [vmem:[%s2644 + $0x148] sm:$0xff]
    %v2687 = vld [vmem:[%s2644 + $0x150] sm:$0xff]
    %v2688 = vld [vmem:[%s2644 + $0x158] sm:$0xff]
    %v2689 = vld [vmem:[%s2644 + $0x160] sm:$0xff]
    %v2690 = vld [vmem:[%s2644 + $0x168] sm:$0xff]
    %v2691 = vld [vmem:[%s2644 + $0x170] sm:$0xff]
    %v2692 = vld [vmem:[%s2644 + $0x178] sm:$0xff]
    %v2693 = vld [vmem:[%s2644 + $0x180] sm:$0xff]
    %v2694 = vld [vmem:[%s2644 + $0x188] sm:$0xff]
    %v2745 = vunpack.c.l.b16 %v2645
    %v2746 = vunpack.c.h.b16 %v2645
    %v2747 = vunpack.c.l.b16 %v2646
    %v2748 = vunpack.c.h.b16 %v2646
    %v2749 = vunpack.c.l.b16 %v2647
    %v2750 = vunpack.c.h.b16 %v2647
    %v2751 = vunpack.c.l.b16 %v2648
    %v2752 = vunpack.c.h.b16 %v2648
    %v2753 = vunpack.c.l.b16 %v2649
    %v2754 = vunpack.c.h.b16 %v2649
    %v2755 = vunpack.c.l.b16 %v2650
    %v2756 = vunpack.c.h.b16 %v2650
    %v2757 = vunpack.c.l.b16 %v2651
    %v2758 = vunpack.c.h.b16 %v2651
    %v2759 = vunpack.c.l.b16 %v2652
    %v2760 = vunpack.c.h.b16 %v2652
    %v2761 = vunpack.c.l.b16 %v2653
    %v2762 = vunpack.c.h.b16 %v2653
    %v2763 = vunpack.c.l.b16 %v2654
    %v2764 = vunpack.c.h.b16 %v2654
    %v2765 = vunpack.c.l.b16 %v2655
    %v2766 = vunpack.c.h.b16 %v2655
    %v2767 = vunpack.c.l.b16 %v2656
    %v2768 = vunpack.c.h.b16 %v2656
    %v2769 = vunpack.c.l.b16 %v2657
    %v2770 = vunpack.c.h.b16 %v2657
    %v2771 = vunpack.c.l.b16 %v2658
    %v2772 = vunpack.c.h.b16 %v2658
    %v2773 = vunpack.c.l.b16 %v2659
    %v2774 = vunpack.c.h.b16 %v2659
    %v2775 = vunpack.c.l.b16 %v2660
    %v2776 = vunpack.c.h.b16 %v2660
    %v2777 = vunpack.c.l.b16 %v2661
    %v2778 = vunpack.c.h.b16 %v2661
    %v2779 = vunpack.c.l.b16 %v2662
    %v2780 = vunpack.c.h.b16 %v2662
    %v2781 = vunpack.c.l.b16 %v2663
    %v2782 = vunpack.c.h.b16 %v2663
    %v2783 = vunpack.c.l.b16 %v2664
    %v2784 = vunpack.c.h.b16 %v2664
    %v2785 = vunpack.c.l.b16 %v2665
    %v2786 = vunpack.c.h.b16 %v2665
    %v2787 = vunpack.c.l.b16 %v2666
    %v2788 = vunpack.c.h.b16 %v2666
    %v2789 = vunpack.c.l.b16 %v2667
    %v2790 = vunpack.c.h.b16 %v2667
    %v2791 = vunpack.c.l.b16 %v2668
    %v2792 = vunpack.c.h.b16 %v2668
    %v2793 = vunpack.c.l.b16 %v2669
    %v2794 = vunpack.c.h.b16 %v2669
    %v2795 = vunpack.c.l.b16 %v2670
    %v2796 = vunpack.c.h.b16 %v2670
    %v2797 = vunpack.c.l.b16 %v2671
    %v2798 = vunpack.c.h.b16 %v2671
    %v2799 = vunpack.c.l.b16 %v2672
    %v2800 = vunpack.c.h.b16 %v2672
    %v2801 = vunpack.c.l.b16 %v2673
    %v2802 = vunpack.c.h.b16 %v2673
    %v2803 = vunpack.c.l.b16 %v2674
    %v2804 = vunpack.c.h.b16 %v2674
    %v2805 = vunpack.c.l.b16 %v2675
    %v2806 = vunpack.c.h.b16 %v2675
    %v2807 = vunpack.c.l.b16 %v2676
    %v2808 = vunpack.c.h.b16 %v2676
    %v2809 = vunpack.c.l.b16 %v2677
    %v2810 = vunpack.c.h.b16 %v2677
    %v2811 = vunpack.c.l.b16 %v2678
    %v2812 = vunpack.c.h.b16 %v2678
    %v2813 = vunpack.c.l.b16 %v2679
    %v2814 = vunpack.c.h.b16 %v2679
    %v2815 = vunpack.c.l.b16 %v2680
    %v2816 = vunpack.c.h.b16 %v2680
    %v2817 = vunpack.c.l.b16 %v2681
    %v2818 = vunpack.c.h.b16 %v2681
    %v2819 = vunpack.c.l.b16 %v2682
    %v2820 = vunpack.c.h.b16 %v2682
    %v2821 = vunpack.c.l.b16 %v2683
    %v2822 = vunpack.c.h.b16 %v2683
    %v2823 = vunpack.c.l.b16 %v2684
    %v2824 = vunpack.c.h.b16 %v2684
    %v2825 = vunpack.c.l.b16 %v2685
    %v2826 = vunpack.c.h.b16 %v2685
    %v2827 = vunpack.c.l.b16 %v2686
    %v2828 = vunpack.c.h.b16 %v2686
    %v2829 = vunpack.c.l.b16 %v2687
    %v2830 = vunpack.c.h.b16 %v2687
    %v2831 = vunpack.c.l.b16 %v2688
    %v2832 = vunpack.c.h.b16 %v2688
    %v2833 = vunpack.c.l.b16 %v2689
    %v2834 = vunpack.c.h.b16 %v2689
    %v2835 = vunpack.c.l.b16 %v2690
    %v2836 = vunpack.c.h.b16 %v2690
    %v2837 = vunpack.c.l.b16 %v2691
    %v2838 = vunpack.c.h.b16 %v2691
    %v2839 = vunpack.c.l.b16 %v2692
    %v2840 = vunpack.c.h.b16 %v2692
    %v2841 = vunpack.c.l.b16 %v2693
    %v2842 = vunpack.c.h.b16 %v2693
    %v2843 = vunpack.c.l.b16 %v2694
    %v2844 = vunpack.c.h.b16 %v2694
    %v2845 = vpack.c.b16 %v2749, %v2745
    %v2846 = vpack.c.b16 %v2750, %v2746
    %v2847 = vpack.c.b16 %v2751, %v2747
    %v2848 = vpack.c.b16 %v2752, %v2748
    %v2849 = vpack.c.b16 %v2757, %v2753
    %v2850 = vpack.c.b16 %v2758, %v2754
    %v2851 = vpack.c.b16 %v2759, %v2755
    %v2852 = vpack.c.b16 %v2760, %v2756
    %v2853 = vpack.c.b16 %v2765, %v2761
    %v2854 = vpack.c.b16 %v2766, %v2762
    %v2855 = vpack.c.b16 %v2767, %v2763
    %v2856 = vpack.c.b16 %v2768, %v2764
    %v2857 = vpack.c.b16 %v2773, %v2769
    %v2858 = vpack.c.b16 %v2774, %v2770
    %v2859 = vpack.c.b16 %v2775, %v2771
    %v2860 = vpack.c.b16 %v2776, %v2772
    %v2861 = vpack.c.b16 %v2781, %v2777
    %v2862 = vpack.c.b16 %v2782, %v2778
    %v2863 = vpack.c.b16 %v2783, %v2779
    %v2864 = vpack.c.b16 %v2784, %v2780
    %v2865 = vpack.c.b16 %v2789, %v2785
    %v2866 = vpack.c.b16 %v2790, %v2786
    %v2867 = vpack.c.b16 %v2791, %v2787
    %v2868 = vpack.c.b16 %v2792, %v2788
    %v2869 = vpack.c.b16 %v2797, %v2793
    %v2870 = vpack.c.b16 %v2798, %v2794
    %v2871 = vpack.c.b16 %v2799, %v2795
    %v2872 = vpack.c.b16 %v2800, %v2796
    %v2873 = vpack.c.b16 %v2805, %v2801
    %v2874 = vpack.c.b16 %v2806, %v2802
    %v2875 = vpack.c.b16 %v2807, %v2803
    %v2876 = vpack.c.b16 %v2808, %v2804
    %v2877 = vpack.c.b16 %v2813, %v2809
    %v2878 = vpack.c.b16 %v2814, %v2810
    %v2879 = vpack.c.b16 %v2815, %v2811
    %v2880 = vpack.c.b16 %v2816, %v2812
    %v2881 = vpack.c.b16 %v2821, %v2817
    %v2882 = vpack.c.b16 %v2822, %v2818
    %v2883 = vpack.c.b16 %v2823, %v2819
    %v2884 = vpack.c.b16 %v2824, %v2820
    %v2885 = vpack.c.b16 %v2829, %v2825
    %v2886 = vpack.c.b16 %v2830, %v2826
    %v2887 = vpack.c.b16 %v2831, %v2827
    %v2888 = vpack.c.b16 %v2832, %v2828
    %v2889 = vpack.c.b16 %v2837, %v2833
    %v2890 = vpack.c.b16 %v2838, %v2834
    %v2891 = vpack.c.b16 %v2839, %v2835
    %v2892 = vpack.c.b16 %v2840, %v2836
    %v2893 = vpack.c.b16 %v2841, %v2841
    %v2894 = vpack.c.b16 %v2842, %v2842
    %v2895 = vpack.c.b16 %v2843, %v2843
    %v2896 = vpack.c.b16 %v2844, %v2844
    %v2946 = vsel %vm2191, %v1825, 0
    %v2949 = vsel %vm541, %v2893, 0
    %v2952 = vsel %vm541, %v2894, 0
    %v2955 = vsel %vm541, %v2895, 0
    %v2958 = vsel %vm541, %v2896, 0
    %2960 = vmatprep.subr.bf16.mxu0 %v2874
    %2961 = vmatpush1.bf16.msra.mxu0 %v2873
    %2962 = vmatprep.subr.bf16.mxu0 %v2870
    %2963 = vmatpush1.bf16.msra.mxu0 %v2869
    %2964 = vmatprep.subr.bf16.mxu0 %v2866
    %2965 = vmatpush1.bf16.msra.mxu0 %v2865
    %2966 = vmatprep.subr.bf16.mxu0 %v2862
    %2967 = vmatpush1.bf16.msra.mxu0 %v2861
    %2968 = vmatprep.subr.bf16.mxu0 %v2858
    %2969 = vmatpush1.bf16.msra.mxu0 %v2857
    %2970 = vmatprep.subr.bf16.mxu0 %v2854
    %2971 = vmatpush1.bf16.msra.mxu0 %v2853
    %2972 = vmatprep.subr.bf16.mxu0 %v2850
    %2973 = vmatpush1.bf16.msra.mxu0 %v2849
    %2974 = vmatprep.subr.bf16.mxu0 %v2846
    %2975 = vmatpush1.bf16.msra.mxu0 %v2845
    %2976 = vmatprep.subr.bf16.mxu0 0
    %2977 = vmatpush2.bf16.msra.mxu0 0
    %2978 = vmatprep.subr.bf16.mxu0 0
    %2979 = vmatpush2.bf16.msra.mxu0 0
    %2980 = vmatprep.subr.bf16.mxu0 0
    %2981 = vmatpush2.bf16.msra.mxu0 0
    %2982 = vmatprep.subr.bf16.mxu0 %v2952
    %2983 = vmatpush2.bf16.msra.mxu0 %v2949
    %2984 = vmatprep.subr.bf16.mxu0 %v2890
    %2985 = vmatpush2.bf16.msra.mxu0 %v2889
    %2986 = vmatprep.subr.bf16.mxu0 %v2886
    %2987 = vmatpush2.bf16.msra.mxu0 %v2885
    %2988 = vmatprep.subr.bf16.mxu0 %v2882
    %2989 = vmatpush2.bf16.msra.mxu0 %v2881
    %2990 = vmatprep.subr.bf16.mxu0 %v2878
    %2991 = vmatpush2.bf16.msra.mxu0 %v2877
    %2992 = vmatprep.mubr.bf16.mxu0 %v2946
    %2993 = vmatmul.mubr.bf16.gmra.mxu0 %v1824
    %v2994 = vpop.f32.mrf.mxu0
    %v2995 = vadd.f32 0.0, %v2994
    %v2996 = vpop.f32.mrf.mxu0
    %v2997 = vadd.f32 0.0, %v2996
    %v2998 = vpop.f32.mrf.mxu0
    %v2999 = vadd.f32 0.0, %v2998
    %v3000 = vpop.f32.mrf.mxu0
    %v3001 = vadd.f32 0.0, %v3000
    %3002 = vdwg.mxu0
    %3003 = vmatprep.subr.bf16.mxu0 %v2876
    %3004 = vmatpush1.bf16.msra.mxu0 %v2875
    %3005 = vmatprep.subr.bf16.mxu0 %v2872
    %3006 = vmatpush1.bf16.msra.mxu0 %v2871
    %3007 = vmatprep.subr.bf16.mxu0 %v2868
    %3008 = vmatpush1.bf16.msra.mxu0 %v2867
    %3009 = vmatprep.subr.bf16.mxu0 %v2864
    %3010 = vmatpush1.bf16.msra.mxu0 %v2863
    %3011 = vmatprep.subr.bf16.mxu0 %v2860
    %3012 = vmatpush1.bf16.msra.mxu0 %v2859
    %3013 = vmatprep.subr.bf16.mxu0 %v2856
    %3014 = vmatpush1.bf16.msra.mxu0 %v2855
    %3015 = vmatprep.subr.bf16.mxu0 %v2852
    %3016 = vmatpush1.bf16.msra.mxu0 %v2851
    %3017 = vmatprep.subr.bf16.mxu0 %v2848
    %3018 = vmatpush1.bf16.msra.mxu0 %v2847
    %3019 = vmatprep.subr.bf16.mxu0 0
    %3020 = vmatpush2.bf16.msra.mxu0 0
    %3021 = vmatprep.subr.bf16.mxu0 0
    %3022 = vmatpush2.bf16.msra.mxu0 0
    %3023 = vmatprep.subr.bf16.mxu0 0
    %3024 = vmatpush2.bf16.msra.mxu0 0
    %3025 = vmatprep.subr.bf16.mxu0 %v2958
    %3026 = vmatpush2.bf16.msra.mxu0 %v2955
    %3027 = vmatprep.subr.bf16.mxu0 %v2892
    %3028 = vmatpush2.bf16.msra.mxu0 %v2891
    %3029 = vmatprep.subr.bf16.mxu0 %v2888
    %3030 = vmatpush2.bf16.msra.mxu0 %v2887
    %3031 = vmatprep.subr.bf16.mxu0 %v2884
    %3032 = vmatpush2.bf16.msra.mxu0 %v2883
    %3033 = vmatprep.subr.bf16.mxu0 %v2880
    %3034 = vmatpush2.bf16.msra.mxu0 %v2879
    %3035 = vmatprep.mubr.bf16.mxu0 %v2946
    %3036 = vmatmul.mubr.bf16.gmra.mxu0 %v1824
    %v3037 = vpop.f32.mrf.mxu0
    %v3038 = vadd.f32 0.0, %v3037
    %v3039 = vpop.f32.mrf.mxu0
    %v3040 = vadd.f32 0.0, %v3039
    %v3041 = vpop.f32.mrf.mxu0
    %v3042 = vadd.f32 0.0, %v3041
    %v3043 = vpop.f32.mrf.mxu0
    %v3044 = vadd.f32 0.0, %v3043
    %3045 = vdwg.mxu0
    %v3046 = vadd.f32 %v2593, %v2995
    %v3047 = vadd.f32 %v2595, %v2997
    %v3048 = vadd.f32 %v2636, %v3038
    %v3049 = vadd.f32 %v2638, %v3040
    %v3050 = vadd.f32 %v2597, %v2999
    %v3051 = vadd.f32 %v2599, %v3001
    %v3052 = vadd.f32 %v2640, %v3042
    %v3053 = vadd.f32 %v2642, %v3044
    %s3054 = scalar_lea.vmem [#allocation7], 1200
    %v3055 = vld [vmem:[%s3054] sm:$0xff]
    %v3056 = vld [vmem:[%s3054 + $0x8] sm:$0xff]
    %v3057 = vld [vmem:[%s3054 + $0x10] sm:$0xff]
    %v3058 = vld [vmem:[%s3054 + $0x18] sm:$0xff]
    %v3059 = vld [vmem:[%s3054 + $0x20] sm:$0xff]
    %v3060 = vld [vmem:[%s3054 + $0x28] sm:$0xff]
    %v3061 = vld [vmem:[%s3054 + $0x30] sm:$0xff]
    %v3062 = vld [vmem:[%s3054 + $0x38] sm:$0xff]
    %v3063 = vld [vmem:[%s3054 + $0x40] sm:$0xff]
    %v3064 = vld [vmem:[%s3054 + $0x48] sm:$0xff]
    %v3065 = vld [vmem:[%s3054 + $0x50] sm:$0xff]
    %v3066 = vld [vmem:[%s3054 + $0x58] sm:$0xff]
    %v3067 = vld [vmem:[%s3054 + $0x60] sm:$0xff]
    %v3068 = vld [vmem:[%s3054 + $0x68] sm:$0xff]
    %v3069 = vld [vmem:[%s3054 + $0x70] sm:$0xff]
    %v3070 = vld [vmem:[%s3054 + $0x78] sm:$0xff]
    %v3071 = vld [vmem:[%s3054 + $0x80] sm:$0xff]
    %v3072 = vld [vmem:[%s3054 + $0x88] sm:$0xff]
    %v3073 = vld [vmem:[%s3054 + $0x90] sm:$0xff]
    %v3074 = vld [vmem:[%s3054 + $0x98] sm:$0xff]
    %v3075 = vld [vmem:[%s3054 + $0xa0] sm:$0xff]
    %v3076 = vld [vmem:[%s3054 + $0xa8] sm:$0xff]
    %v3077 = vld [vmem:[%s3054 + $0xb0] sm:$0xff]
    %v3078 = vld [vmem:[%s3054 + $0xb8] sm:$0xff]
    %v3079 = vld [vmem:[%s3054 + $0xc0] sm:$0xff]
    %v3080 = vld [vmem:[%s3054 + $0xc8] sm:$0xff]
    %v3081 = vld [vmem:[%s3054 + $0xd0] sm:$0xff]
    %v3082 = vld [vmem:[%s3054 + $0xd8] sm:$0xff]
    %v3083 = vld [vmem:[%s3054 + $0xe0] sm:$0xff]
    %v3084 = vld [vmem:[%s3054 + $0xe8] sm:$0xff]
    %v3085 = vld [vmem:[%s3054 + $0xf0] sm:$0xff]
    %v3086 = vld [vmem:[%s3054 + $0xf8] sm:$0xff]
    %v3087 = vld [vmem:[%s3054 + $0x100] sm:$0xff]
    %v3088 = vld [vmem:[%s3054 + $0x108] sm:$0xff]
    %v3089 = vld [vmem:[%s3054 + $0x110] sm:$0xff]
    %v3090 = vld [vmem:[%s3054 + $0x118] sm:$0xff]
    %v3091 = vld [vmem:[%s3054 + $0x120] sm:$0xff]
    %v3092 = vld [vmem:[%s3054 + $0x128] sm:$0xff]
    %v3093 = vld [vmem:[%s3054 + $0x130] sm:$0xff]
    %v3094 = vld [vmem:[%s3054 + $0x138] sm:$0xff]
    %v3095 = vld [vmem:[%s3054 + $0x140] sm:$0xff]
    %v3096 = vld [vmem:[%s3054 + $0x148] sm:$0xff]
    %v3097 = vld [vmem:[%s3054 + $0x150] sm:$0xff]
    %v3098 = vld [vmem:[%s3054 + $0x158] sm:$0xff]
    %v3099 = vld [vmem:[%s3054 + $0x160] sm:$0xff]
    %v3100 = vld [vmem:[%s3054 + $0x168] sm:$0xff]
    %v3101 = vld [vmem:[%s3054 + $0x170] sm:$0xff]
    %v3102 = vld [vmem:[%s3054 + $0x178] sm:$0xff]
    %v3103 = vld [vmem:[%s3054 + $0x180] sm:$0xff]
    %v3104 = vld [vmem:[%s3054 + $0x188] sm:$0xff]
    %v3155 = vunpack.c.l.b16 %v3055
    %v3156 = vunpack.c.h.b16 %v3055
    %v3157 = vunpack.c.l.b16 %v3056
    %v3158 = vunpack.c.h.b16 %v3056
    %v3159 = vunpack.c.l.b16 %v3057
    %v3160 = vunpack.c.h.b16 %v3057
    %v3161 = vunpack.c.l.b16 %v3058
    %v3162 = vunpack.c.h.b16 %v3058
    %v3163 = vunpack.c.l.b16 %v3059
    %v3164 = vunpack.c.h.b16 %v3059
    %v3165 = vunpack.c.l.b16 %v3060
    %v3166 = vunpack.c.h.b16 %v3060
    %v3167 = vunpack.c.l.b16 %v3061
    %v3168 = vunpack.c.h.b16 %v3061
    %v3169 = vunpack.c.l.b16 %v3062
    %v3170 = vunpack.c.h.b16 %v3062
    %v3171 = vunpack.c.l.b16 %v3063
    %v3172 = vunpack.c.h.b16 %v3063
    %v3173 = vunpack.c.l.b16 %v3064
    %v3174 = vunpack.c.h.b16 %v3064
    %v3175 = vunpack.c.l.b16 %v3065
    %v3176 = vunpack.c.h.b16 %v3065
    %v3177 = vunpack.c.l.b16 %v3066
    %v3178 = vunpack.c.h.b16 %v3066
    %v3179 = vunpack.c.l.b16 %v3067
    %v3180 = vunpack.c.h.b16 %v3067
    %v3181 = vunpack.c.l.b16 %v3068
    %v3182 = vunpack.c.h.b16 %v3068
    %v3183 = vunpack.c.l.b16 %v3069
    %v3184 = vunpack.c.h.b16 %v3069
    %v3185 = vunpack.c.l.b16 %v3070
    %v3186 = vunpack.c.h.b16 %v3070
    %v3187 = vunpack.c.l.b16 %v3071
    %v3188 = vunpack.c.h.b16 %v3071
    %v3189 = vunpack.c.l.b16 %v3072
    %v3190 = vunpack.c.h.b16 %v3072
    %v3191 = vunpack.c.l.b16 %v3073
    %v3192 = vunpack.c.h.b16 %v3073
    %v3193 = vunpack.c.l.b16 %v3074
    %v3194 = vunpack.c.h.b16 %v3074
    %v3195 = vunpack.c.l.b16 %v3075
    %v3196 = vunpack.c.h.b16 %v3075
    %v3197 = vunpack.c.l.b16 %v3076
    %v3198 = vunpack.c.h.b16 %v3076
    %v3199 = vunpack.c.l.b16 %v3077
    %v3200 = vunpack.c.h.b16 %v3077
    %v3201 = vunpack.c.l.b16 %v3078
    %v3202 = vunpack.c.h.b16 %v3078
    %v3203 = vunpack.c.l.b16 %v3079
    %v3204 = vunpack.c.h.b16 %v3079
    %v3205 = vunpack.c.l.b16 %v3080
    %v3206 = vunpack.c.h.b16 %v3080
    %v3207 = vunpack.c.l.b16 %v3081
    %v3208 = vunpack.c.h.b16 %v3081
    %v3209 = vunpack.c.l.b16 %v3082
    %v3210 = vunpack.c.h.b16 %v3082
    %v3211 = vunpack.c.l.b16 %v3083
    %v3212 = vunpack.c.h.b16 %v3083
    %v3213 = vunpack.c.l.b16 %v3084
    %v3214 = vunpack.c.h.b16 %v3084
    %v3215 = vunpack.c.l.b16 %v3085
    %v3216 = vunpack.c.h.b16 %v3085
    %v3217 = vunpack.c.l.b16 %v3086
    %v3218 = vunpack.c.h.b16 %v3086
    %v3219 = vunpack.c.l.b16 %v3087
    %v3220 = vunpack.c.h.b16 %v3087
    %v3221 = vunpack.c.l.b16 %v3088
    %v3222 = vunpack.c.h.b16 %v3088
    %v3223 = vunpack.c.l.b16 %v3089
    %v3224 = vunpack.c.h.b16 %v3089
    %v3225 = vunpack.c.l.b16 %v3090
    %v3226 = vunpack.c.h.b16 %v3090
    %v3227 = vunpack.c.l.b16 %v3091
    %v3228 = vunpack.c.h.b16 %v3091
    %v3229 = vunpack.c.l.b16 %v3092
    %v3230 = vunpack.c.h.b16 %v3092
    %v3231 = vunpack.c.l.b16 %v3093
    %v3232 = vunpack.c.h.b16 %v3093
    %v3233 = vunpack.c.l.b16 %v3094
    %v3234 = vunpack.c.h.b16 %v3094
    %v3235 = vunpack.c.l.b16 %v3095
    %v3236 = vunpack.c.h.b16 %v3095
    %v3237 = vunpack.c.l.b16 %v3096
    %v3238 = vunpack.c.h.b16 %v3096
    %v3239 = vunpack.c.l.b16 %v3097
    %v3240 = vunpack.c.h.b16 %v3097
    %v3241 = vunpack.c.l.b16 %v3098
    %v3242 = vunpack.c.h.b16 %v3098
    %v3243 = vunpack.c.l.b16 %v3099
    %v3244 = vunpack.c.h.b16 %v3099
    %v3245 = vunpack.c.l.b16 %v3100
    %v3246 = vunpack.c.h.b16 %v3100
    %v3247 = vunpack.c.l.b16 %v3101
    %v3248 = vunpack.c.h.b16 %v3101
    %v3249 = vunpack.c.l.b16 %v3102
    %v3250 = vunpack.c.h.b16 %v3102
    %v3251 = vunpack.c.l.b16 %v3103
    %v3252 = vunpack.c.h.b16 %v3103
    %v3253 = vunpack.c.l.b16 %v3104
    %v3254 = vunpack.c.h.b16 %v3104
    %v3255 = vpack.c.b16 %v3159, %v3155
    %v3256 = vpack.c.b16 %v3160, %v3156
    %v3257 = vpack.c.b16 %v3161, %v3157
    %v3258 = vpack.c.b16 %v3162, %v3158
    %v3259 = vpack.c.b16 %v3167, %v3163
    %v3260 = vpack.c.b16 %v3168, %v3164
    %v3261 = vpack.c.b16 %v3169, %v3165
    %v3262 = vpack.c.b16 %v3170, %v3166
    %v3263 = vpack.c.b16 %v3175, %v3171
    %v3264 = vpack.c.b16 %v3176, %v3172
    %v3265 = vpack.c.b16 %v3177, %v3173
    %v3266 = vpack.c.b16 %v3178, %v3174
    %v3267 = vpack.c.b16 %v3183, %v3179
    %v3268 = vpack.c.b16 %v3184, %v3180
    %v3269 = vpack.c.b16 %v3185, %v3181
    %v3270 = vpack.c.b16 %v3186, %v3182
    %v3271 = vpack.c.b16 %v3191, %v3187
    %v3272 = vpack.c.b16 %v3192, %v3188
    %v3273 = vpack.c.b16 %v3193, %v3189
    %v3274 = vpack.c.b16 %v3194, %v3190
    %v3275 = vpack.c.b16 %v3199, %v3195
    %v3276 = vpack.c.b16 %v3200, %v3196
    %v3277 = vpack.c.b16 %v3201, %v3197
    %v3278 = vpack.c.b16 %v3202, %v3198
    %v3279 = vpack.c.b16 %v3207, %v3203
    %v3280 = vpack.c.b16 %v3208, %v3204
    %v3281 = vpack.c.b16 %v3209, %v3205
    %v3282 = vpack.c.b16 %v3210, %v3206
    %v3283 = vpack.c.b16 %v3215, %v3211
    %v3284 = vpack.c.b16 %v3216, %v3212
    %v3285 = vpack.c.b16 %v3217, %v3213
    %v3286 = vpack.c.b16 %v3218, %v3214
    %v3287 = vpack.c.b16 %v3223, %v3219
    %v3288 = vpack.c.b16 %v3224, %v3220
    %v3289 = vpack.c.b16 %v3225, %v3221
    %v3290 = vpack.c.b16 %v3226, %v3222
    %v3291 = vpack.c.b16 %v3231, %v3227
    %v3292 = vpack.c.b16 %v3232, %v3228
    %v3293 = vpack.c.b16 %v3233, %v3229
    %v3294 = vpack.c.b16 %v3234, %v3230
    %v3295 = vpack.c.b16 %v3239, %v3235
    %v3296 = vpack.c.b16 %v3240, %v3236
    %v3297 = vpack.c.b16 %v3241, %v3237
    %v3298 = vpack.c.b16 %v3242, %v3238
    %v3299 = vpack.c.b16 %v3247, %v3243
    %v3300 = vpack.c.b16 %v3248, %v3244
    %v3301 = vpack.c.b16 %v3249, %v3245
    %v3302 = vpack.c.b16 %v3250, %v3246
    %v3303 = vpack.c.b16 %v3251, %v3251
    %v3304 = vpack.c.b16 %v3252, %v3252
    %v3305 = vpack.c.b16 %v3253, %v3253
    %v3306 = vpack.c.b16 %v3254, %v3254
    %v3356 = vsel %vm2191, %v1827, 0
    %v3359 = vsel %vm541, %v3303, 0
    %v3362 = vsel %vm541, %v3304, 0
    %v3365 = vsel %vm541, %v3305, 0
    %v3368 = vsel %vm541, %v3306, 0
    %3370 = vmatprep.subr.bf16.mxu0 %v3284
    %3371 = vmatpush1.bf16.msra.mxu0 %v3283
    %3372 = vmatprep.subr.bf16.mxu0 %v3280
    %3373 = vmatpush1.bf16.msra.mxu0 %v3279
    %3374 = vmatprep.subr.bf16.mxu0 %v3276
    %3375 = vmatpush1.bf16.msra.mxu0 %v3275
    %3376 = vmatprep.subr.bf16.mxu0 %v3272
    %3377 = vmatpush1.bf16.msra.mxu0 %v3271
    %3378 = vmatprep.subr.bf16.mxu0 %v3268
    %3379 = vmatpush1.bf16.msra.mxu0 %v3267
    %3380 = vmatprep.subr.bf16.mxu0 %v3264
    %3381 = vmatpush1.bf16.msra.mxu0 %v3263
    %3382 = vmatprep.subr.bf16.mxu0 %v3260
    %3383 = vmatpush1.bf16.msra.mxu0 %v3259
    %3384 = vmatprep.subr.bf16.mxu0 %v3256
    %3385 = vmatpush1.bf16.msra.mxu0 %v3255
    %3386 = vmatprep.subr.bf16.mxu0 0
    %3387 = vmatpush2.bf16.msra.mxu0 0
    %3388 = vmatprep.subr.bf16.mxu0 0
    %3389 = vmatpush2.bf16.msra.mxu0 0
    %3390 = vmatprep.subr.bf16.mxu0 0
    %3391 = vmatpush2.bf16.msra.mxu0 0
    %3392 = vmatprep.subr.bf16.mxu0 %v3362
    %3393 = vmatpush2.bf16.msra.mxu0 %v3359
    %3394 = vmatprep.subr.bf16.mxu0 %v3300
    %3395 = vmatpush2.bf16.msra.mxu0 %v3299
    %3396 = vmatprep.subr.bf16.mxu0 %v3296
    %3397 = vmatpush2.bf16.msra.mxu0 %v3295
    %3398 = vmatprep.subr.bf16.mxu0 %v3292
    %3399 = vmatpush2.bf16.msra.mxu0 %v3291
    %3400 = vmatprep.subr.bf16.mxu0 %v3288
    %3401 = vmatpush2.bf16.msra.mxu0 %v3287
    %3402 = vmatprep.mubr.bf16.mxu0 %v3356
    %3403 = vmatmul.mubr.bf16.gmra.mxu0 %v1826
    %v3404 = vpop.f32.mrf.mxu0
    %v3405 = vadd.f32 0.0, %v3404
    %v3406 = vpop.f32.mrf.mxu0
    %v3407 = vadd.f32 0.0, %v3406
    %v3408 = vpop.f32.mrf.mxu0
    %v3409 = vadd.f32 0.0, %v3408
    %v3410 = vpop.f32.mrf.mxu0
    %v3411 = vadd.f32 0.0, %v3410
    %3412 = vdwg.mxu0
    %3413 = vmatprep.subr.bf16.mxu0 %v3286
    %3414 = vmatpush1.bf16.msra.mxu0 %v3285
    %3415 = vmatprep.subr.bf16.mxu0 %v3282
    %3416 = vmatpush1.bf16.msra.mxu0 %v3281
    %3417 = vmatprep.subr.bf16.mxu0 %v3278
    %3418 = vmatpush1.bf16.msra.mxu0 %v3277
    %3419 = vmatprep.subr.bf16.mxu0 %v3274
    %3420 = vmatpush1.bf16.msra.mxu0 %v3273
    %3421 = vmatprep.subr.bf16.mxu0 %v3270
    %3422 = vmatpush1.bf16.msra.mxu0 %v3269
    %3423 = vmatprep.subr.bf16.mxu0 %v3266
    %3424 = vmatpush1.bf16.msra.mxu0 %v3265
    %3425 = vmatprep.subr.bf16.mxu0 %v3262
    %3426 = vmatpush1.bf16.msra.mxu0 %v3261
    %3427 = vmatprep.subr.bf16.mxu0 %v3258
    %3428 = vmatpush1.bf16.msra.mxu0 %v3257
    %3429 = vmatprep.subr.bf16.mxu0 0
    %3430 = vmatpush2.bf16.msra.mxu0 0
    %3431 = vmatprep.subr.bf16.mxu0 0
    %3432 = vmatpush2.bf16.msra.mxu0 0
    %3433 = vmatprep.subr.bf16.mxu0 0
    %3434 = vmatpush2.bf16.msra.mxu0 0
    %3435 = vmatprep.subr.bf16.mxu0 %v3368
    %3436 = vmatpush2.bf16.msra.mxu0 %v3365
    %3437 = vmatprep.subr.bf16.mxu0 %v3302
    %3438 = vmatpush2.bf16.msra.mxu0 %v3301
    %3439 = vmatprep.subr.bf16.mxu0 %v3298
    %3440 = vmatpush2.bf16.msra.mxu0 %v3297
    %3441 = vmatprep.subr.bf16.mxu0 %v3294
    %3442 = vmatpush2.bf16.msra.mxu0 %v3293
    %3443 = vmatprep.subr.bf16.mxu0 %v3290
    %3444 = vmatpush2.bf16.msra.mxu0 %v3289
    %3445 = vmatprep.mubr.bf16.mxu0 %v3356
    %3446 = vmatmul.mubr.bf16.gmra.mxu0 %v1826
    %v3447 = vpop.f32.mrf.mxu0
    %v3448 = vadd.f32 0.0, %v3447
    %v3449 = vpop.f32.mrf.mxu0
    %v3450 = vadd.f32 0.0, %v3449
    %v3451 = vpop.f32.mrf.mxu0
    %v3452 = vadd.f32 0.0, %v3451
    %v3453 = vpop.f32.mrf.mxu0
    %v3454 = vadd.f32 0.0, %v3453
    %3455 = vdwg.mxu0
    %v3456 = vadd.f32 %v3046, %v3405
    %v3457 = vadd.f32 %v3047, %v3407
    %v3458 = vadd.f32 %v3048, %v3448
    %v3459 = vadd.f32 %v3049, %v3450
    %v3460 = vadd.f32 %v3050, %v3409
    %v3461 = vadd.f32 %v3051, %v3411
    %v3462 = vadd.f32 %v3052, %v3452
    %v3463 = vadd.f32 %v3053, %v3454
    %s3464 = scalar_lea.vmem [#allocation7], 1600
    %v3465 = vld [vmem:[%s3464] sm:$0xff]
    %v3466 = vld [vmem:[%s3464 + $0x8] sm:$0xff]
    %v3467 = vld [vmem:[%s3464 + $0x10] sm:$0xff]
    %v3468 = vld [vmem:[%s3464 + $0x18] sm:$0xff]
    %v3469 = vld [vmem:[%s3464 + $0x20] sm:$0xff]
    %v3470 = vld [vmem:[%s3464 + $0x28] sm:$0xff]
    %v3471 = vld [vmem:[%s3464 + $0x30] sm:$0xff]
    %v3472 = vld [vmem:[%s3464 + $0x38] sm:$0xff]
    %v3473 = vld [vmem:[%s3464 + $0x40] sm:$0xff]
    %v3474 = vld [vmem:[%s3464 + $0x48] sm:$0xff]
    %v3475 = vld [vmem:[%s3464 + $0x50] sm:$0xff]
    %v3476 = vld [vmem:[%s3464 + $0x58] sm:$0xff]
    %v3477 = vld [vmem:[%s3464 + $0x60] sm:$0xff]
    %v3478 = vld [vmem:[%s3464 + $0x68] sm:$0xff]
    %v3479 = vld [vmem:[%s3464 + $0x70] sm:$0xff]
    %v3480 = vld [vmem:[%s3464 + $0x78] sm:$0xff]
    %v3481 = vld [vmem:[%s3464 + $0x80] sm:$0xff]
    %v3482 = vld [vmem:[%s3464 + $0x88] sm:$0xff]
    %v3483 = vld [vmem:[%s3464 + $0x90] sm:$0xff]
    %v3484 = vld [vmem:[%s3464 + $0x98] sm:$0xff]
    %v3485 = vld [vmem:[%s3464 + $0xa0] sm:$0xff]
    %v3486 = vld [vmem:[%s3464 + $0xa8] sm:$0xff]
    %v3487 = vld [vmem:[%s3464 + $0xb0] sm:$0xff]
    %v3488 = vld [vmem:[%s3464 + $0xb8] sm:$0xff]
    %v3489 = vld [vmem:[%s3464 + $0xc0] sm:$0xff]
    %v3490 = vld [vmem:[%s3464 + $0xc8] sm:$0xff]
    %v3491 = vld [vmem:[%s3464 + $0xd0] sm:$0xff]
    %v3492 = vld [vmem:[%s3464 + $0xd8] sm:$0xff]
    %v3493 = vld [vmem:[%s3464 + $0xe0] sm:$0xff]
    %v3494 = vld [vmem:[%s3464 + $0xe8] sm:$0xff]
    %v3495 = vld [vmem:[%s3464 + $0xf0] sm:$0xff]
    %v3496 = vld [vmem:[%s3464 + $0xf8] sm:$0xff]
    %v3497 = vld [vmem:[%s3464 + $0x100] sm:$0xff]
    %v3498 = vld [vmem:[%s3464 + $0x108] sm:$0xff]
    %v3499 = vld [vmem:[%s3464 + $0x110] sm:$0xff]
    %v3500 = vld [vmem:[%s3464 + $0x118] sm:$0xff]
    %v3501 = vld [vmem:[%s3464 + $0x120] sm:$0xff]
    %v3502 = vld [vmem:[%s3464 + $0x128] sm:$0xff]
    %v3503 = vld [vmem:[%s3464 + $0x130] sm:$0xff]
    %v3504 = vld [vmem:[%s3464 + $0x138] sm:$0xff]
    %v3505 = vld [vmem:[%s3464 + $0x140] sm:$0xff]
    %v3506 = vld [vmem:[%s3464 + $0x148] sm:$0xff]
    %v3507 = vld [vmem:[%s3464 + $0x150] sm:$0xff]
    %v3508 = vld [vmem:[%s3464 + $0x158] sm:$0xff]
    %v3509 = vld [vmem:[%s3464 + $0x160] sm:$0xff]
    %v3510 = vld [vmem:[%s3464 + $0x168] sm:$0xff]
    %v3511 = vld [vmem:[%s3464 + $0x170] sm:$0xff]
    %v3512 = vld [vmem:[%s3464 + $0x178] sm:$0xff]
    %v3513 = vld [vmem:[%s3464 + $0x180] sm:$0xff]
    %v3514 = vld [vmem:[%s3464 + $0x188] sm:$0xff]
    %v3565 = vunpack.c.l.b16 %v3465
    %v3566 = vunpack.c.h.b16 %v3465
    %v3567 = vunpack.c.l.b16 %v3466
    %v3568 = vunpack.c.h.b16 %v3466
    %v3569 = vunpack.c.l.b16 %v3467
    %v3570 = vunpack.c.h.b16 %v3467
    %v3571 = vunpack.c.l.b16 %v3468
    %v3572 = vunpack.c.h.b16 %v3468
    %v3573 = vunpack.c.l.b16 %v3469
    %v3574 = vunpack.c.h.b16 %v3469
    %v3575 = vunpack.c.l.b16 %v3470
    %v3576 = vunpack.c.h.b16 %v3470
    %v3577 = vunpack.c.l.b16 %v3471
    %v3578 = vunpack.c.h.b16 %v3471
    %v3579 = vunpack.c.l.b16 %v3472
    %v3580 = vunpack.c.h.b16 %v3472
    %v3581 = vunpack.c.l.b16 %v3473
    %v3582 = vunpack.c.h.b16 %v3473
    %v3583 = vunpack.c.l.b16 %v3474
    %v3584 = vunpack.c.h.b16 %v3474
    %v3585 = vunpack.c.l.b16 %v3475
    %v3586 = vunpack.c.h.b16 %v3475
    %v3587 = vunpack.c.l.b16 %v3476
    %v3588 = vunpack.c.h.b16 %v3476
    %v3589 = vunpack.c.l.b16 %v3477
    %v3590 = vunpack.c.h.b16 %v3477
    %v3591 = vunpack.c.l.b16 %v3478
    %v3592 = vunpack.c.h.b16 %v3478
    %v3593 = vunpack.c.l.b16 %v3479
    %v3594 = vunpack.c.h.b16 %v3479
    %v3595 = vunpack.c.l.b16 %v3480
    %v3596 = vunpack.c.h.b16 %v3480
    %v3597 = vunpack.c.l.b16 %v3481
    %v3598 = vunpack.c.h.b16 %v3481
    %v3599 = vunpack.c.l.b16 %v3482
    %v3600 = vunpack.c.h.b16 %v3482
    %v3601 = vunpack.c.l.b16 %v3483
    %v3602 = vunpack.c.h.b16 %v3483
    %v3603 = vunpack.c.l.b16 %v3484
    %v3604 = vunpack.c.h.b16 %v3484
    %v3605 = vunpack.c.l.b16 %v3485
    %v3606 = vunpack.c.h.b16 %v3485
    %v3607 = vunpack.c.l.b16 %v3486
    %v3608 = vunpack.c.h.b16 %v3486
    %v3609 = vunpack.c.l.b16 %v3487
    %v3610 = vunpack.c.h.b16 %v3487
    %v3611 = vunpack.c.l.b16 %v3488
    %v3612 = vunpack.c.h.b16 %v3488
    %v3613 = vunpack.c.l.b16 %v3489
    %v3614 = vunpack.c.h.b16 %v3489
    %v3615 = vunpack.c.l.b16 %v3490
    %v3616 = vunpack.c.h.b16 %v3490
    %v3617 = vunpack.c.l.b16 %v3491
    %v3618 = vunpack.c.h.b16 %v3491
    %v3619 = vunpack.c.l.b16 %v3492
    %v3620 = vunpack.c.h.b16 %v3492
    %v3621 = vunpack.c.l.b16 %v3493
    %v3622 = vunpack.c.h.b16 %v3493
    %v3623 = vunpack.c.l.b16 %v3494
    %v3624 = vunpack.c.h.b16 %v3494
    %v3625 = vunpack.c.l.b16 %v3495
    %v3626 = vunpack.c.h.b16 %v3495
    %v3627 = vunpack.c.l.b16 %v3496
    %v3628 = vunpack.c.h.b16 %v3496
    %v3629 = vunpack.c.l.b16 %v3497
    %v3630 = vunpack.c.h.b16 %v3497
    %v3631 = vunpack.c.l.b16 %v3498
    %v3632 = vunpack.c.h.b16 %v3498
    %v3633 = vunpack.c.l.b16 %v3499
    %v3634 = vunpack.c.h.b16 %v3499
    %v3635 = vunpack.c.l.b16 %v3500
    %v3636 = vunpack.c.h.b16 %v3500
    %v3637 = vunpack.c.l.b16 %v3501
    %v3638 = vunpack.c.h.b16 %v3501
    %v3639 = vunpack.c.l.b16 %v3502
    %v3640 = vunpack.c.h.b16 %v3502
    %v3641 = vunpack.c.l.b16 %v3503
    %v3642 = vunpack.c.h.b16 %v3503
    %v3643 = vunpack.c.l.b16 %v3504
    %v3644 = vunpack.c.h.b16 %v3504
    %v3645 = vunpack.c.l.b16 %v3505
    %v3646 = vunpack.c.h.b16 %v3505
    %v3647 = vunpack.c.l.b16 %v3506
    %v3648 = vunpack.c.h.b16 %v3506
    %v3649 = vunpack.c.l.b16 %v3507
    %v3650 = vunpack.c.h.b16 %v3507
    %v3651 = vunpack.c.l.b16 %v3508
    %v3652 = vunpack.c.h.b16 %v3508
    %v3653 = vunpack.c.l.b16 %v3509
    %v3654 = vunpack.c.h.b16 %v3509
    %v3655 = vunpack.c.l.b16 %v3510
    %v3656 = vunpack.c.h.b16 %v3510
    %v3657 = vunpack.c.l.b16 %v3511
    %v3658 = vunpack.c.h.b16 %v3511
    %v3659 = vunpack.c.l.b16 %v3512
    %v3660 = vunpack.c.h.b16 %v3512
    %v3661 = vunpack.c.l.b16 %v3513
    %v3662 = vunpack.c.h.b16 %v3513
    %v3663 = vunpack.c.l.b16 %v3514
    %v3664 = vunpack.c.h.b16 %v3514
    %v3665 = vpack.c.b16 %v3569, %v3565
    %v3666 = vpack.c.b16 %v3570, %v3566
    %v3667 = vpack.c.b16 %v3571, %v3567
    %v3668 = vpack.c.b16 %v3572, %v3568
    %v3669 = vpack.c.b16 %v3577, %v3573
    %v3670 = vpack.c.b16 %v3578, %v3574
    %v3671 = vpack.c.b16 %v3579, %v3575
    %v3672 = vpack.c.b16 %v3580, %v3576
    %v3673 = vpack.c.b16 %v3585, %v3581
    %v3674 = vpack.c.b16 %v3586, %v3582
    %v3675 = vpack.c.b16 %v3587, %v3583
    %v3676 = vpack.c.b16 %v3588, %v3584
    %v3677 = vpack.c.b16 %v3593, %v3589
    %v3678 = vpack.c.b16 %v3594, %v3590
    %v3679 = vpack.c.b16 %v3595, %v3591
    %v3680 = vpack.c.b16 %v3596, %v3592
    %v3681 = vpack.c.b16 %v3601, %v3597
    %v3682 = vpack.c.b16 %v3602, %v3598
    %v3683 = vpack.c.b16 %v3603, %v3599
    %v3684 = vpack.c.b16 %v3604, %v3600
    %v3685 = vpack.c.b16 %v3609, %v3605
    %v3686 = vpack.c.b16 %v3610, %v3606
    %v3687 = vpack.c.b16 %v3611, %v3607
    %v3688 = vpack.c.b16 %v3612, %v3608
    %v3689 = vpack.c.b16 %v3617, %v3613
    %v3690 = vpack.c.b16 %v3618, %v3614
    %v3691 = vpack.c.b16 %v3619, %v3615
    %v3692 = vpack.c.b16 %v3620, %v3616
    %v3693 = vpack.c.b16 %v3625, %v3621
    %v3694 = vpack.c.b16 %v3626, %v3622
    %v3695 = vpack.c.b16 %v3627, %v3623
    %v3696 = vpack.c.b16 %v3628, %v3624
    %v3697 = vpack.c.b16 %v3633, %v3629
    %v3698 = vpack.c.b16 %v3634, %v3630
    %v3699 = vpack.c.b16 %v3635, %v3631
    %v3700 = vpack.c.b16 %v3636, %v3632
    %v3701 = vpack.c.b16 %v3641, %v3637
    %v3702 = vpack.c.b16 %v3642, %v3638
    %v3703 = vpack.c.b16 %v3643, %v3639
    %v3704 = vpack.c.b16 %v3644, %v3640
    %v3705 = vpack.c.b16 %v3649, %v3645
    %v3706 = vpack.c.b16 %v3650, %v3646
    %v3707 = vpack.c.b16 %v3651, %v3647
    %v3708 = vpack.c.b16 %v3652, %v3648
    %v3709 = vpack.c.b16 %v3657, %v3653
    %v3710 = vpack.c.b16 %v3658, %v3654
    %v3711 = vpack.c.b16 %v3659, %v3655
    %v3712 = vpack.c.b16 %v3660, %v3656
    %v3713 = vpack.c.b16 %v3661, %v3661
    %v3714 = vpack.c.b16 %v3662, %v3662
    %v3715 = vpack.c.b16 %v3663, %v3663
    %v3716 = vpack.c.b16 %v3664, %v3664
    %v3766 = vsel %vm2191, %v1829, 0
    %v3769 = vsel %vm541, %v3713, 0
    %v3772 = vsel %vm541, %v3714, 0
    %v3775 = vsel %vm541, %v3715, 0
    %v3778 = vsel %vm541, %v3716, 0
    %3780 = vmatprep.subr.bf16.mxu0 %v3694
    %3781 = vmatpush1.bf16.msra.mxu0 %v3693
    %3782 = vmatprep.subr.bf16.mxu0 %v3690
    %3783 = vmatpush1.bf16.msra.mxu0 %v3689
    %3784 = vmatprep.subr.bf16.mxu0 %v3686
    %3785 = vmatpush1.bf16.msra.mxu0 %v3685
    %3786 = vmatprep.subr.bf16.mxu0 %v3682
    %3787 = vmatpush1.bf16.msra.mxu0 %v3681
    %3788 = vmatprep.subr.bf16.mxu0 %v3678
    %3789 = vmatpush1.bf16.msra.mxu0 %v3677
    %3790 = vmatprep.subr.bf16.mxu0 %v3674
    %3791 = vmatpush1.bf16.msra.mxu0 %v3673
    %3792 = vmatprep.subr.bf16.mxu0 %v3670
    %3793 = vmatpush1.bf16.msra.mxu0 %v3669
    %3794 = vmatprep.subr.bf16.mxu0 %v3666
    %3795 = vmatpush1.bf16.msra.mxu0 %v3665
    %3796 = vmatprep.subr.bf16.mxu0 0
    %3797 = vmatpush2.bf16.msra.mxu0 0
    %3798 = vmatprep.subr.bf16.mxu0 0
    %3799 = vmatpush2.bf16.msra.mxu0 0
    %3800 = vmatprep.subr.bf16.mxu0 0
    %3801 = vmatpush2.bf16.msra.mxu0 0
    %3802 = vmatprep.subr.bf16.mxu0 %v3772
    %3803 = vmatpush2.bf16.msra.mxu0 %v3769
    %3804 = vmatprep.subr.bf16.mxu0 %v3710
    %3805 = vmatpush2.bf16.msra.mxu0 %v3709
    %3806 = vmatprep.subr.bf16.mxu0 %v3706
    %3807 = vmatpush2.bf16.msra.mxu0 %v3705
    %3808 = vmatprep.subr.bf16.mxu0 %v3702
    %3809 = vmatpush2.bf16.msra.mxu0 %v3701
    %3810 = vmatprep.subr.bf16.mxu0 %v3698
    %3811 = vmatpush2.bf16.msra.mxu0 %v3697
    %3812 = vmatprep.mubr.bf16.mxu0 %v3766
    %3813 = vmatmul.mubr.bf16.gmra.mxu0 %v1828
    %v3814 = vpop.f32.mrf.mxu0
    %v3815 = vadd.f32 0.0, %v3814
    %v3816 = vpop.f32.mrf.mxu0
    %v3817 = vadd.f32 0.0, %v3816
    %v3818 = vpop.f32.mrf.mxu0
    %v3819 = vadd.f32 0.0, %v3818
    %v3820 = vpop.f32.mrf.mxu0
    %v3821 = vadd.f32 0.0, %v3820
    %3822 = vdwg.mxu0
    %3823 = vmatprep.subr.bf16.mxu0 %v3696
    %3824 = vmatpush1.bf16.msra.mxu0 %v3695
    %3825 = vmatprep.subr.bf16.mxu0 %v3692
    %3826 = vmatpush1.bf16.msra.mxu0 %v3691
    %3827 = vmatprep.subr.bf16.mxu0 %v3688
    %3828 = vmatpush1.bf16.msra.mxu0 %v3687
    %3829 = vmatprep.subr.bf16.mxu0 %v3684
    %3830 = vmatpush1.bf16.msra.mxu0 %v3683
    %3831 = vmatprep.subr.bf16.mxu0 %v3680
    %3832 = vmatpush1.bf16.msra.mxu0 %v3679
    %3833 = vmatprep.subr.bf16.mxu0 %v3676
    %3834 = vmatpush1.bf16.msra.mxu0 %v3675
    %3835 = vmatprep.subr.bf16.mxu0 %v3672
    %3836 = vmatpush1.bf16.msra.mxu0 %v3671
    %3837 = vmatprep.subr.bf16.mxu0 %v3668
    %3838 = vmatpush1.bf16.msra.mxu0 %v3667
    %3839 = vmatprep.subr.bf16.mxu0 0
    %3840 = vmatpush2.bf16.msra.mxu0 0
    %3841 = vmatprep.subr.bf16.mxu0 0
    %3842 = vmatpush2.bf16.msra.mxu0 0
    %3843 = vmatprep.subr.bf16.mxu0 0
    %3844 = vmatpush2.bf16.msra.mxu0 0
    %3845 = vmatprep.subr.bf16.mxu0 %v3778
    %3846 = vmatpush2.bf16.msra.mxu0 %v3775
    %3847 = vmatprep.subr.bf16.mxu0 %v3712
    %3848 = vmatpush2.bf16.msra.mxu0 %v3711
    %3849 = vmatprep.subr.bf16.mxu0 %v3708
    %3850 = vmatpush2.bf16.msra.mxu0 %v3707
    %3851 = vmatprep.subr.bf16.mxu0 %v3704
    %3852 = vmatpush2.bf16.msra.mxu0 %v3703
    %3853 = vmatprep.subr.bf16.mxu0 %v3700
    %3854 = vmatpush2.bf16.msra.mxu0 %v3699
    %3855 = vmatprep.mubr.bf16.mxu0 %v3766
    %3856 = vmatmul.mubr.bf16.gmra.mxu0 %v1828
    %v3857 = vpop.f32.mrf.mxu0
    %v3858 = vadd.f32 0.0, %v3857
    %v3859 = vpop.f32.mrf.mxu0
    %v3860 = vadd.f32 0.0, %v3859
    %v3861 = vpop.f32.mrf.mxu0
    %v3862 = vadd.f32 0.0, %v3861
    %v3863 = vpop.f32.mrf.mxu0
    %v3864 = vadd.f32 0.0, %v3863
    %3865 = vdwg.mxu0
    %v3866 = vadd.f32 %v3456, %v3815
    %v3867 = vadd.f32 %v3457, %v3817
    %v3868 = vadd.f32 %v3458, %v3858
    %v3869 = vadd.f32 %v3459, %v3860
    %v3870 = vadd.f32 %v3460, %v3819
    %v3871 = vadd.f32 %v3461, %v3821
    %v3872 = vadd.f32 %v3462, %v3862
    %v3873 = vadd.f32 %v3463, %v3864
    %s3874 = scalar_lea.vmem [#allocation7], 2000
    %v3875 = vld [vmem:[%s3874] sm:$0xff]
    %v3876 = vld [vmem:[%s3874 + $0x8] sm:$0xff]
    %v3877 = vld [vmem:[%s3874 + $0x10] sm:$0xff]
    %v3878 = vld [vmem:[%s3874 + $0x18] sm:$0xff]
    %v3879 = vld [vmem:[%s3874 + $0x20] sm:$0xff]
    %v3880 = vld [vmem:[%s3874 + $0x28] sm:$0xff]
    %v3881 = vld [vmem:[%s3874 + $0x30] sm:$0xff]
    %v3882 = vld [vmem:[%s3874 + $0x38] sm:$0xff]
    %v3883 = vld [vmem:[%s3874 + $0x40] sm:$0xff]
    %v3884 = vld [vmem:[%s3874 + $0x48] sm:$0xff]
    %v3885 = vld [vmem:[%s3874 + $0x50] sm:$0xff]
    %v3886 = vld [vmem:[%s3874 + $0x58] sm:$0xff]
    %v3887 = vld [vmem:[%s3874 + $0x60] sm:$0xff]
    %v3888 = vld [vmem:[%s3874 + $0x68] sm:$0xff]
    %v3889 = vld [vmem:[%s3874 + $0x70] sm:$0xff]
    %v3890 = vld [vmem:[%s3874 + $0x78] sm:$0xff]
    %v3891 = vld [vmem:[%s3874 + $0x80] sm:$0xff]
    %v3892 = vld [vmem:[%s3874 + $0x88] sm:$0xff]
    %v3893 = vld [vmem:[%s3874 + $0x90] sm:$0xff]
    %v3894 = vld [vmem:[%s3874 + $0x98] sm:$0xff]
    %v3895 = vld [vmem:[%s3874 + $0xa0] sm:$0xff]
    %v3896 = vld [vmem:[%s3874 + $0xa8] sm:$0xff]
    %v3897 = vld [vmem:[%s3874 + $0xb0] sm:$0xff]
    %v3898 = vld [vmem:[%s3874 + $0xb8] sm:$0xff]
    %v3899 = vld [vmem:[%s3874 + $0xc0] sm:$0xff]
    %v3900 = vld [vmem:[%s3874 + $0xc8] sm:$0xff]
    %v3901 = vld [vmem:[%s3874 + $0xd0] sm:$0xff]
    %v3902 = vld [vmem:[%s3874 + $0xd8] sm:$0xff]
    %v3903 = vld [vmem:[%s3874 + $0xe0] sm:$0xff]
    %v3904 = vld [vmem:[%s3874 + $0xe8] sm:$0xff]
    %v3905 = vld [vmem:[%s3874 + $0xf0] sm:$0xff]
    %v3906 = vld [vmem:[%s3874 + $0xf8] sm:$0xff]
    %v3907 = vld [vmem:[%s3874 + $0x100] sm:$0xff]
    %v3908 = vld [vmem:[%s3874 + $0x108] sm:$0xff]
    %v3909 = vld [vmem:[%s3874 + $0x110] sm:$0xff]
    %v3910 = vld [vmem:[%s3874 + $0x118] sm:$0xff]
    %v3911 = vld [vmem:[%s3874 + $0x120] sm:$0xff]
    %v3912 = vld [vmem:[%s3874 + $0x128] sm:$0xff]
    %v3913 = vld [vmem:[%s3874 + $0x130] sm:$0xff]
    %v3914 = vld [vmem:[%s3874 + $0x138] sm:$0xff]
    %v3915 = vld [vmem:[%s3874 + $0x140] sm:$0xff]
    %v3916 = vld [vmem:[%s3874 + $0x148] sm:$0xff]
    %v3917 = vld [vmem:[%s3874 + $0x150] sm:$0xff]
    %v3918 = vld [vmem:[%s3874 + $0x158] sm:$0xff]
    %v3919 = vld [vmem:[%s3874 + $0x160] sm:$0xff]
    %v3920 = vld [vmem:[%s3874 + $0x168] sm:$0xff]
    %v3921 = vld [vmem:[%s3874 + $0x170] sm:$0xff]
    %v3922 = vld [vmem:[%s3874 + $0x178] sm:$0xff]
    %v3923 = vld [vmem:[%s3874 + $0x180] sm:$0xff]
    %v3924 = vld [vmem:[%s3874 + $0x188] sm:$0xff]
    %v3975 = vunpack.c.l.b16 %v3875
    %v3976 = vunpack.c.h.b16 %v3875
    %v3977 = vunpack.c.l.b16 %v3876
    %v3978 = vunpack.c.h.b16 %v3876
    %v3979 = vunpack.c.l.b16 %v3877
    %v3980 = vunpack.c.h.b16 %v3877
    %v3981 = vunpack.c.l.b16 %v3878
    %v3982 = vunpack.c.h.b16 %v3878
    %v3983 = vunpack.c.l.b16 %v3879
    %v3984 = vunpack.c.h.b16 %v3879
    %v3985 = vunpack.c.l.b16 %v3880
    %v3986 = vunpack.c.h.b16 %v3880
    %v3987 = vunpack.c.l.b16 %v3881
    %v3988 = vunpack.c.h.b16 %v3881
    %v3989 = vunpack.c.l.b16 %v3882
    %v3990 = vunpack.c.h.b16 %v3882
    %v3991 = vunpack.c.l.b16 %v3883
    %v3992 = vunpack.c.h.b16 %v3883
    %v3993 = vunpack.c.l.b16 %v3884
    %v3994 = vunpack.c.h.b16 %v3884
    %v3995 = vunpack.c.l.b16 %v3885
    %v3996 = vunpack.c.h.b16 %v3885
    %v3997 = vunpack.c.l.b16 %v3886
    %v3998 = vunpack.c.h.b16 %v3886
    %v3999 = vunpack.c.l.b16 %v3887
    %v4000 = vunpack.c.h.b16 %v3887
    %v4001 = vunpack.c.l.b16 %v3888
    %v4002 = vunpack.c.h.b16 %v3888
    %v4003 = vunpack.c.l.b16 %v3889
    %v4004 = vunpack.c.h.b16 %v3889
    %v4005 = vunpack.c.l.b16 %v3890
    %v4006 = vunpack.c.h.b16 %v3890
    %v4007 = vunpack.c.l.b16 %v3891
    %v4008 = vunpack.c.h.b16 %v3891
    %v4009 = vunpack.c.l.b16 %v3892
    %v4010 = vunpack.c.h.b16 %v3892
    %v4011 = vunpack.c.l.b16 %v3893
    %v4012 = vunpack.c.h.b16 %v3893
    %v4013 = vunpack.c.l.b16 %v3894
    %v4014 = vunpack.c.h.b16 %v3894
    %v4015 = vunpack.c.l.b16 %v3895
    %v4016 = vunpack.c.h.b16 %v3895
    %v4017 = vunpack.c.l.b16 %v3896
    %v4018 = vunpack.c.h.b16 %v3896
    %v4019 = vunpack.c.l.b16 %v3897
    %v4020 = vunpack.c.h.b16 %v3897
    %v4021 = vunpack.c.l.b16 %v3898
    %v4022 = vunpack.c.h.b16 %v3898
    %v4023 = vunpack.c.l.b16 %v3899
    %v4024 = vunpack.c.h.b16 %v3899
    %v4025 = vunpack.c.l.b16 %v3900
    %v4026 = vunpack.c.h.b16 %v3900
    %v4027 = vunpack.c.l.b16 %v3901
    %v4028 = vunpack.c.h.b16 %v3901
    %v4029 = vunpack.c.l.b16 %v3902
    %v4030 = vunpack.c.h.b16 %v3902
    %v4031 = vunpack.c.l.b16 %v3903
    %v4032 = vunpack.c.h.b16 %v3903
    %v4033 = vunpack.c.l.b16 %v3904
    %v4034 = vunpack.c.h.b16 %v3904
    %v4035 = vunpack.c.l.b16 %v3905
    %v4036 = vunpack.c.h.b16 %v3905
    %v4037 = vunpack.c.l.b16 %v3906
    %v4038 = vunpack.c.h.b16 %v3906
    %v4039 = vunpack.c.l.b16 %v3907
    %v4040 = vunpack.c.h.b16 %v3907
    %v4041 = vunpack.c.l.b16 %v3908
    %v4042 = vunpack.c.h.b16 %v3908
    %v4043 = vunpack.c.l.b16 %v3909
    %v4044 = vunpack.c.h.b16 %v3909
    %v4045 = vunpack.c.l.b16 %v3910
    %v4046 = vunpack.c.h.b16 %v3910
    %v4047 = vunpack.c.l.b16 %v3911
    %v4048 = vunpack.c.h.b16 %v3911
    %v4049 = vunpack.c.l.b16 %v3912
    %v4050 = vunpack.c.h.b16 %v3912
    %v4051 = vunpack.c.l.b16 %v3913
    %v4052 = vunpack.c.h.b16 %v3913
    %v4053 = vunpack.c.l.b16 %v3914
    %v4054 = vunpack.c.h.b16 %v3914
    %v4055 = vunpack.c.l.b16 %v3915
    %v4056 = vunpack.c.h.b16 %v3915
    %v4057 = vunpack.c.l.b16 %v3916
    %v4058 = vunpack.c.h.b16 %v3916
    %v4059 = vunpack.c.l.b16 %v3917
    %v4060 = vunpack.c.h.b16 %v3917
    %v4061 = vunpack.c.l.b16 %v3918
    %v4062 = vunpack.c.h.b16 %v3918
    %v4063 = vunpack.c.l.b16 %v3919
    %v4064 = vunpack.c.h.b16 %v3919
    %v4065 = vunpack.c.l.b16 %v3920
    %v4066 = vunpack.c.h.b16 %v3920
    %v4067 = vunpack.c.l.b16 %v3921
    %v4068 = vunpack.c.h.b16 %v3921
    %v4069 = vunpack.c.l.b16 %v3922
    %v4070 = vunpack.c.h.b16 %v3922
    %v4071 = vunpack.c.l.b16 %v3923
    %v4072 = vunpack.c.h.b16 %v3923
    %v4073 = vunpack.c.l.b16 %v3924
    %v4074 = vunpack.c.h.b16 %v3924
    %v4075 = vpack.c.b16 %v3979, %v3975
    %v4076 = vpack.c.b16 %v3980, %v3976
    %v4077 = vpack.c.b16 %v3981, %v3977
    %v4078 = vpack.c.b16 %v3982, %v3978
    %v4079 = vpack.c.b16 %v3987, %v3983
    %v4080 = vpack.c.b16 %v3988, %v3984
    %v4081 = vpack.c.b16 %v3989, %v3985
    %v4082 = vpack.c.b16 %v3990, %v3986
    %v4083 = vpack.c.b16 %v3995, %v3991
    %v4084 = vpack.c.b16 %v3996, %v3992
    %v4085 = vpack.c.b16 %v3997, %v3993
    %v4086 = vpack.c.b16 %v3998, %v3994
    %v4087 = vpack.c.b16 %v4003, %v3999
    %v4088 = vpack.c.b16 %v4004, %v4000
    %v4089 = vpack.c.b16 %v4005, %v4001
    %v4090 = vpack.c.b16 %v4006, %v4002
    %v4091 = vpack.c.b16 %v4011, %v4007
    %v4092 = vpack.c.b16 %v4012, %v4008
    %v4093 = vpack.c.b16 %v4013, %v4009
    %v4094 = vpack.c.b16 %v4014, %v4010
    %v4095 = vpack.c.b16 %v4019, %v4015
    %v4096 = vpack.c.b16 %v4020, %v4016
    %v4097 = vpack.c.b16 %v4021, %v4017
    %v4098 = vpack.c.b16 %v4022, %v4018
    %v4099 = vpack.c.b16 %v4027, %v4023
    %v4100 = vpack.c.b16 %v4028, %v4024
    %v4101 = vpack.c.b16 %v4029, %v4025
    %v4102 = vpack.c.b16 %v4030, %v4026
    %v4103 = vpack.c.b16 %v4035, %v4031
    %v4104 = vpack.c.b16 %v4036, %v4032
    %v4105 = vpack.c.b16 %v4037, %v4033
    %v4106 = vpack.c.b16 %v4038, %v4034
    %v4107 = vpack.c.b16 %v4043, %v4039
    %v4108 = vpack.c.b16 %v4044, %v4040
    %v4109 = vpack.c.b16 %v4045, %v4041
    %v4110 = vpack.c.b16 %v4046, %v4042
    %v4111 = vpack.c.b16 %v4051, %v4047
    %v4112 = vpack.c.b16 %v4052, %v4048
    %v4113 = vpack.c.b16 %v4053, %v4049
    %v4114 = vpack.c.b16 %v4054, %v4050
    %v4115 = vpack.c.b16 %v4059, %v4055
    %v4116 = vpack.c.b16 %v4060, %v4056
    %v4117 = vpack.c.b16 %v4061, %v4057
    %v4118 = vpack.c.b16 %v4062, %v4058
    %v4119 = vpack.c.b16 %v4067, %v4063
    %v4120 = vpack.c.b16 %v4068, %v4064
    %v4121 = vpack.c.b16 %v4069, %v4065
    %v4122 = vpack.c.b16 %v4070, %v4066
    %v4123 = vpack.c.b16 %v4071, %v4071
    %v4124 = vpack.c.b16 %v4072, %v4072
    %v4125 = vpack.c.b16 %v4073, %v4073
    %v4126 = vpack.c.b16 %v4074, %v4074
    %v4176 = vsel %vm2191, %v1831, 0
    %v4179 = vsel %vm541, %v4123, 0
    %v4182 = vsel %vm541, %v4124, 0
    %v4185 = vsel %vm541, %v4125, 0
    %v4188 = vsel %vm541, %v4126, 0
    %4190 = vmatprep.subr.bf16.mxu0 %v4104
    %4191 = vmatpush1.bf16.msra.mxu0 %v4103
    %4192 = vmatprep.subr.bf16.mxu0 %v4100
    %4193 = vmatpush1.bf16.msra.mxu0 %v4099
    %4194 = vmatprep.subr.bf16.mxu0 %v4096
    %4195 = vmatpush1.bf16.msra.mxu0 %v4095
    %4196 = vmatprep.subr.bf16.mxu0 %v4092
    %4197 = vmatpush1.bf16.msra.mxu0 %v4091
    %4198 = vmatprep.subr.bf16.mxu0 %v4088
    %4199 = vmatpush1.bf16.msra.mxu0 %v4087
    %4200 = vmatprep.subr.bf16.mxu0 %v4084
    %4201 = vmatpush1.bf16.msra.mxu0 %v4083
    %4202 = vmatprep.subr.bf16.mxu0 %v4080
    %4203 = vmatpush1.bf16.msra.mxu0 %v4079
    %4204 = vmatprep.subr.bf16.mxu0 %v4076
    %4205 = vmatpush1.bf16.msra.mxu0 %v4075
    %4206 = vmatprep.subr.bf16.mxu0 0
    %4207 = vmatpush2.bf16.msra.mxu0 0
    %4208 = vmatprep.subr.bf16.mxu0 0
    %4209 = vmatpush2.bf16.msra.mxu0 0
    %4210 = vmatprep.subr.bf16.mxu0 0
    %4211 = vmatpush2.bf16.msra.mxu0 0
    %4212 = vmatprep.subr.bf16.mxu0 %v4182
    %4213 = vmatpush2.bf16.msra.mxu0 %v4179
    %4214 = vmatprep.subr.bf16.mxu0 %v4120
    %4215 = vmatpush2.bf16.msra.mxu0 %v4119
    %4216 = vmatprep.subr.bf16.mxu0 %v4116
    %4217 = vmatpush2.bf16.msra.mxu0 %v4115
    %4218 = vmatprep.subr.bf16.mxu0 %v4112
    %4219 = vmatpush2.bf16.msra.mxu0 %v4111
    %4220 = vmatprep.subr.bf16.mxu0 %v4108
    %4221 = vmatpush2.bf16.msra.mxu0 %v4107
    %4222 = vmatprep.mubr.bf16.mxu0 %v4176
    %4223 = vmatmul.mubr.bf16.gmra.mxu0 %v1830
    %v4224 = vpop.f32.mrf.mxu0
    %v4225 = vadd.f32 0.0, %v4224
    %v4226 = vpop.f32.mrf.mxu0
    %v4227 = vadd.f32 0.0, %v4226
    %v4228 = vpop.f32.mrf.mxu0
    %v4229 = vadd.f32 0.0, %v4228
    %v4230 = vpop.f32.mrf.mxu0
    %v4231 = vadd.f32 0.0, %v4230
    %4232 = vdwg.mxu0
    %4233 = vmatprep.subr.bf16.mxu0 %v4106
    %4234 = vmatpush1.bf16.msra.mxu0 %v4105
    %4235 = vmatprep.subr.bf16.mxu0 %v4102
    %4236 = vmatpush1.bf16.msra.mxu0 %v4101
    %4237 = vmatprep.subr.bf16.mxu0 %v4098
    %4238 = vmatpush1.bf16.msra.mxu0 %v4097
    %4239 = vmatprep.subr.bf16.mxu0 %v4094
    %4240 = vmatpush1.bf16.msra.mxu0 %v4093
    %4241 = vmatprep.subr.bf16.mxu0 %v4090
    %4242 = vmatpush1.bf16.msra.mxu0 %v4089
    %4243 = vmatprep.subr.bf16.mxu0 %v4086
    %4244 = vmatpush1.bf16.msra.mxu0 %v4085
    %4245 = vmatprep.subr.bf16.mxu0 %v4082
    %4246 = vmatpush1.bf16.msra.mxu0 %v4081
    %4247 = vmatprep.subr.bf16.mxu0 %v4078
    %4248 = vmatpush1.bf16.msra.mxu0 %v4077
    %4249 = vmatprep.subr.bf16.mxu0 0
    %4250 = vmatpush2.bf16.msra.mxu0 0
    %4251 = vmatprep.subr.bf16.mxu0 0
    %4252 = vmatpush2.bf16.msra.mxu0 0
    %4253 = vmatprep.subr.bf16.mxu0 0
    %4254 = vmatpush2.bf16.msra.mxu0 0
    %4255 = vmatprep.subr.bf16.mxu0 %v4188
    %4256 = vmatpush2.bf16.msra.mxu0 %v4185
    %4257 = vmatprep.subr.bf16.mxu0 %v4122
    %4258 = vmatpush2.bf16.msra.mxu0 %v4121
    %4259 = vmatprep.subr.bf16.mxu0 %v4118
    %4260 = vmatpush2.bf16.msra.mxu0 %v4117
    %4261 = vmatprep.subr.bf16.mxu0 %v4114
    %4262 = vmatpush2.bf16.msra.mxu0 %v4113
    %4263 = vmatprep.subr.bf16.mxu0 %v4110
    %4264 = vmatpush2.bf16.msra.mxu0 %v4109
    %4265 = vmatprep.mubr.bf16.mxu0 %v4176
    %4266 = vmatmul.mubr.bf16.gmra.mxu0 %v1830
    %v4267 = vpop.f32.mrf.mxu0
    %v4268 = vadd.f32 0.0, %v4267
    %v4269 = vpop.f32.mrf.mxu0
    %v4270 = vadd.f32 0.0, %v4269
    %v4271 = vpop.f32.mrf.mxu0
    %v4272 = vadd.f32 0.0, %v4271
    %v4273 = vpop.f32.mrf.mxu0
    %v4274 = vadd.f32 0.0, %v4273
    %4275 = vdwg.mxu0
    %v4276 = vadd.f32 %v3866, %v4225
    %v4277 = vadd.f32 %v3867, %v4227
    %v4278 = vadd.f32 %v3868, %v4268
    %v4279 = vadd.f32 %v3869, %v4270
    %v4280 = vadd.f32 %v3870, %v4229
    %v4281 = vadd.f32 %v3871, %v4231
    %v4282 = vadd.f32 %v3872, %v4272
    %v4283 = vadd.f32 %v3873, %v4274
    %s4284 = scalar_lea.vmem [#allocation7], 2400
    %v4285 = vld [vmem:[%s4284] sm:$0xff]
    %v4286 = vld [vmem:[%s4284 + $0x8] sm:$0xff]
    %v4287 = vld [vmem:[%s4284 + $0x10] sm:$0xff]
    %v4288 = vld [vmem:[%s4284 + $0x18] sm:$0xff]
    %v4289 = vld [vmem:[%s4284 + $0x20] sm:$0xff]
    %v4290 = vld [vmem:[%s4284 + $0x28] sm:$0xff]
    %v4291 = vld [vmem:[%s4284 + $0x30] sm:$0xff]
    %v4292 = vld [vmem:[%s4284 + $0x38] sm:$0xff]
    %v4293 = vld [vmem:[%s4284 + $0x40] sm:$0xff]
    %v4294 = vld [vmem:[%s4284 + $0x48] sm:$0xff]
    %v4295 = vld [vmem:[%s4284 + $0x50] sm:$0xff]
    %v4296 = vld [vmem:[%s4284 + $0x58] sm:$0xff]
    %v4297 = vld [vmem:[%s4284 + $0x60] sm:$0xff]
    %v4298 = vld [vmem:[%s4284 + $0x68] sm:$0xff]
    %v4299 = vld [vmem:[%s4284 + $0x70] sm:$0xff]
    %v4300 = vld [vmem:[%s4284 + $0x78] sm:$0xff]
    %v4301 = vld [vmem:[%s4284 + $0x80] sm:$0xff]
    %v4302 = vld [vmem:[%s4284 + $0x88] sm:$0xff]
    %v4303 = vld [vmem:[%s4284 + $0x90] sm:$0xff]
    %v4304 = vld [vmem:[%s4284 + $0x98] sm:$0xff]
    %v4305 = vld [vmem:[%s4284 + $0xa0] sm:$0xff]
    %v4306 = vld [vmem:[%s4284 + $0xa8] sm:$0xff]
    %v4307 = vld [vmem:[%s4284 + $0xb0] sm:$0xff]
    %v4308 = vld [vmem:[%s4284 + $0xb8] sm:$0xff]
    %v4309 = vld [vmem:[%s4284 + $0xc0] sm:$0xff]
    %v4310 = vld [vmem:[%s4284 + $0xc8] sm:$0xff]
    %v4311 = vld [vmem:[%s4284 + $0xd0] sm:$0xff]
    %v4312 = vld [vmem:[%s4284 + $0xd8] sm:$0xff]
    %v4313 = vld [vmem:[%s4284 + $0xe0] sm:$0xff]
    %v4314 = vld [vmem:[%s4284 + $0xe8] sm:$0xff]
    %v4315 = vld [vmem:[%s4284 + $0xf0] sm:$0xff]
    %v4316 = vld [vmem:[%s4284 + $0xf8] sm:$0xff]
    %v4317 = vld [vmem:[%s4284 + $0x100] sm:$0xff]
    %v4318 = vld [vmem:[%s4284 + $0x108] sm:$0xff]
    %v4319 = vld [vmem:[%s4284 + $0x110] sm:$0xff]
    %v4320 = vld [vmem:[%s4284 + $0x118] sm:$0xff]
    %v4321 = vld [vmem:[%s4284 + $0x120] sm:$0xff]
    %v4322 = vld [vmem:[%s4284 + $0x128] sm:$0xff]
    %v4323 = vld [vmem:[%s4284 + $0x130] sm:$0xff]
    %v4324 = vld [vmem:[%s4284 + $0x138] sm:$0xff]
    %v4325 = vld [vmem:[%s4284 + $0x140] sm:$0xff]
    %v4326 = vld [vmem:[%s4284 + $0x148] sm:$0xff]
    %v4327 = vld [vmem:[%s4284 + $0x150] sm:$0xff]
    %v4328 = vld [vmem:[%s4284 + $0x158] sm:$0xff]
    %v4329 = vld [vmem:[%s4284 + $0x160] sm:$0xff]
    %v4330 = vld [vmem:[%s4284 + $0x168] sm:$0xff]
    %v4331 = vld [vmem:[%s4284 + $0x170] sm:$0xff]
    %v4332 = vld [vmem:[%s4284 + $0x178] sm:$0xff]
    %v4333 = vld [vmem:[%s4284 + $0x180] sm:$0xff]
    %v4334 = vld [vmem:[%s4284 + $0x188] sm:$0xff]
    %v4385 = vunpack.c.l.b16 %v4285
    %v4386 = vunpack.c.h.b16 %v4285
    %v4387 = vunpack.c.l.b16 %v4286
    %v4388 = vunpack.c.h.b16 %v4286
    %v4389 = vunpack.c.l.b16 %v4287
    %v4390 = vunpack.c.h.b16 %v4287
    %v4391 = vunpack.c.l.b16 %v4288
    %v4392 = vunpack.c.h.b16 %v4288
    %v4393 = vunpack.c.l.b16 %v4289
    %v4394 = vunpack.c.h.b16 %v4289
    %v4395 = vunpack.c.l.b16 %v4290
    %v4396 = vunpack.c.h.b16 %v4290
    %v4397 = vunpack.c.l.b16 %v4291
    %v4398 = vunpack.c.h.b16 %v4291
    %v4399 = vunpack.c.l.b16 %v4292
    %v4400 = vunpack.c.h.b16 %v4292
    %v4401 = vunpack.c.l.b16 %v4293
    %v4402 = vunpack.c.h.b16 %v4293
    %v4403 = vunpack.c.l.b16 %v4294
    %v4404 = vunpack.c.h.b16 %v4294
    %v4405 = vunpack.c.l.b16 %v4295
    %v4406 = vunpack.c.h.b16 %v4295
    %v4407 = vunpack.c.l.b16 %v4296
    %v4408 = vunpack.c.h.b16 %v4296
    %v4409 = vunpack.c.l.b16 %v4297
    %v4410 = vunpack.c.h.b16 %v4297
    %v4411 = vunpack.c.l.b16 %v4298
    %v4412 = vunpack.c.h.b16 %v4298
    %v4413 = vunpack.c.l.b16 %v4299
    %v4414 = vunpack.c.h.b16 %v4299
    %v4415 = vunpack.c.l.b16 %v4300
    %v4416 = vunpack.c.h.b16 %v4300
    %v4417 = vunpack.c.l.b16 %v4301
    %v4418 = vunpack.c.h.b16 %v4301
    %v4419 = vunpack.c.l.b16 %v4302
    %v4420 = vunpack.c.h.b16 %v4302
    %v4421 = vunpack.c.l.b16 %v4303
    %v4422 = vunpack.c.h.b16 %v4303
    %v4423 = vunpack.c.l.b16 %v4304
    %v4424 = vunpack.c.h.b16 %v4304
    %v4425 = vunpack.c.l.b16 %v4305
    %v4426 = vunpack.c.h.b16 %v4305
    %v4427 = vunpack.c.l.b16 %v4306
    %v4428 = vunpack.c.h.b16 %v4306
    %v4429 = vunpack.c.l.b16 %v4307
    %v4430 = vunpack.c.h.b16 %v4307
    %v4431 = vunpack.c.l.b16 %v4308
    %v4432 = vunpack.c.h.b16 %v4308
    %v4433 = vunpack.c.l.b16 %v4309
    %v4434 = vunpack.c.h.b16 %v4309
    %v4435 = vunpack.c.l.b16 %v4310
    %v4436 = vunpack.c.h.b16 %v4310
    %v4437 = vunpack.c.l.b16 %v4311
    %v4438 = vunpack.c.h.b16 %v4311
    %v4439 = vunpack.c.l.b16 %v4312
    %v4440 = vunpack.c.h.b16 %v4312
    %v4441 = vunpack.c.l.b16 %v4313
    %v4442 = vunpack.c.h.b16 %v4313
    %v4443 = vunpack.c.l.b16 %v4314
    %v4444 = vunpack.c.h.b16 %v4314
    %v4445 = vunpack.c.l.b16 %v4315
    %v4446 = vunpack.c.h.b16 %v4315
    %v4447 = vunpack.c.l.b16 %v4316
    %v4448 = vunpack.c.h.b16 %v4316
    %v4449 = vunpack.c.l.b16 %v4317
    %v4450 = vunpack.c.h.b16 %v4317
    %v4451 = vunpack.c.l.b16 %v4318
    %v4452 = vunpack.c.h.b16 %v4318
    %v4453 = vunpack.c.l.b16 %v4319
    %v4454 = vunpack.c.h.b16 %v4319
    %v4455 = vunpack.c.l.b16 %v4320
    %v4456 = vunpack.c.h.b16 %v4320
    %v4457 = vunpack.c.l.b16 %v4321
    %v4458 = vunpack.c.h.b16 %v4321
    %v4459 = vunpack.c.l.b16 %v4322
    %v4460 = vunpack.c.h.b16 %v4322
    %v4461 = vunpack.c.l.b16 %v4323
    %v4462 = vunpack.c.h.b16 %v4323
    %v4463 = vunpack.c.l.b16 %v4324
    %v4464 = vunpack.c.h.b16 %v4324
    %v4465 = vunpack.c.l.b16 %v4325
    %v4466 = vunpack.c.h.b16 %v4325
    %v4467 = vunpack.c.l.b16 %v4326
    %v4468 = vunpack.c.h.b16 %v4326
    %v4469 = vunpack.c.l.b16 %v4327
    %v4470 = vunpack.c.h.b16 %v4327
    %v4471 = vunpack.c.l.b16 %v4328
    %v4472 = vunpack.c.h.b16 %v4328
    %v4473 = vunpack.c.l.b16 %v4329
    %v4474 = vunpack.c.h.b16 %v4329
    %v4475 = vunpack.c.l.b16 %v4330
    %v4476 = vunpack.c.h.b16 %v4330
    %v4477 = vunpack.c.l.b16 %v4331
    %v4478 = vunpack.c.h.b16 %v4331
    %v4479 = vunpack.c.l.b16 %v4332
    %v4480 = vunpack.c.h.b16 %v4332
    %v4481 = vunpack.c.l.b16 %v4333
    %v4482 = vunpack.c.h.b16 %v4333
    %v4483 = vunpack.c.l.b16 %v4334
    %v4484 = vunpack.c.h.b16 %v4334
    %v4485 = vpack.c.b16 %v4389, %v4385
    %v4486 = vpack.c.b16 %v4390, %v4386
    %v4487 = vpack.c.b16 %v4391, %v4387
    %v4488 = vpack.c.b16 %v4392, %v4388
    %v4489 = vpack.c.b16 %v4397, %v4393
    %v4490 = vpack.c.b16 %v4398, %v4394
    %v4491 = vpack.c.b16 %v4399, %v4395
    %v4492 = vpack.c.b16 %v4400, %v4396
    %v4493 = vpack.c.b16 %v4405, %v4401
    %v4494 = vpack.c.b16 %v4406, %v4402
    %v4495 = vpack.c.b16 %v4407, %v4403
    %v4496 = vpack.c.b16 %v4408, %v4404
    %v4497 = vpack.c.b16 %v4413, %v4409
    %v4498 = vpack.c.b16 %v4414, %v4410
    %v4499 = vpack.c.b16 %v4415, %v4411
    %v4500 = vpack.c.b16 %v4416, %v4412
    %v4501 = vpack.c.b16 %v4421, %v4417
    %v4502 = vpack.c.b16 %v4422, %v4418
    %v4503 = vpack.c.b16 %v4423, %v4419
    %v4504 = vpack.c.b16 %v4424, %v4420
    %v4505 = vpack.c.b16 %v4429, %v4425
    %v4506 = vpack.c.b16 %v4430, %v4426
    %v4507 = vpack.c.b16 %v4431, %v4427
    %v4508 = vpack.c.b16 %v4432, %v4428
    %v4509 = vpack.c.b16 %v4437, %v4433
    %v4510 = vpack.c.b16 %v4438, %v4434
    %v4511 = vpack.c.b16 %v4439, %v4435
    %v4512 = vpack.c.b16 %v4440, %v4436
    %v4513 = vpack.c.b16 %v4445, %v4441
    %v4514 = vpack.c.b16 %v4446, %v4442
    %v4515 = vpack.c.b16 %v4447, %v4443
    %v4516 = vpack.c.b16 %v4448, %v4444
    %v4517 = vpack.c.b16 %v4453, %v4449
    %v4518 = vpack.c.b16 %v4454, %v4450
    %v4519 = vpack.c.b16 %v4455, %v4451
    %v4520 = vpack.c.b16 %v4456, %v4452
    %v4521 = vpack.c.b16 %v4461, %v4457
    %v4522 = vpack.c.b16 %v4462, %v4458
    %v4523 = vpack.c.b16 %v4463, %v4459
    %v4524 = vpack.c.b16 %v4464, %v4460
    %v4525 = vpack.c.b16 %v4469, %v4465
    %v4526 = vpack.c.b16 %v4470, %v4466
    %v4527 = vpack.c.b16 %v4471, %v4467
    %v4528 = vpack.c.b16 %v4472, %v4468
    %v4529 = vpack.c.b16 %v4477, %v4473
    %v4530 = vpack.c.b16 %v4478, %v4474
    %v4531 = vpack.c.b16 %v4479, %v4475
    %v4532 = vpack.c.b16 %v4480, %v4476
    %v4533 = vpack.c.b16 %v4481, %v4481
    %v4534 = vpack.c.b16 %v4482, %v4482
    %v4535 = vpack.c.b16 %v4483, %v4483
    %v4536 = vpack.c.b16 %v4484, %v4484
    %v4586 = vsel %vm2191, %v1833, 0
    %v4589 = vsel %vm541, %v4533, 0
    %v4592 = vsel %vm541, %v4534, 0
    %v4595 = vsel %vm541, %v4535, 0
    %v4598 = vsel %vm541, %v4536, 0
    %4600 = vmatprep.subr.bf16.mxu0 %v4514
    %4601 = vmatpush1.bf16.msra.mxu0 %v4513
    %4602 = vmatprep.subr.bf16.mxu0 %v4510
    %4603 = vmatpush1.bf16.msra.mxu0 %v4509
    %4604 = vmatprep.subr.bf16.mxu0 %v4506
    %4605 = vmatpush1.bf16.msra.mxu0 %v4505
    %4606 = vmatprep.subr.bf16.mxu0 %v4502
    %4607 = vmatpush1.bf16.msra.mxu0 %v4501
    %4608 = vmatprep.subr.bf16.mxu0 %v4498
    %4609 = vmatpush1.bf16.msra.mxu0 %v4497
    %4610 = vmatprep.subr.bf16.mxu0 %v4494
    %4611 = vmatpush1.bf16.msra.mxu0 %v4493
    %4612 = vmatprep.subr.bf16.mxu0 %v4490
    %4613 = vmatpush1.bf16.msra.mxu0 %v4489
    %4614 = vmatprep.subr.bf16.mxu0 %v4486
    %4615 = vmatpush1.bf16.msra.mxu0 %v4485
    %4616 = vmatprep.subr.bf16.mxu0 0
    %4617 = vmatpush2.bf16.msra.mxu0 0
    %4618 = vmatprep.subr.bf16.mxu0 0
    %4619 = vmatpush2.bf16.msra.mxu0 0
    %4620 = vmatprep.subr.bf16.mxu0 0
    %4621 = vmatpush2.bf16.msra.mxu0 0
    %4622 = vmatprep.subr.bf16.mxu0 %v4592
    %4623 = vmatpush2.bf16.msra.mxu0 %v4589
    %4624 = vmatprep.subr.bf16.mxu0 %v4530
    %4625 = vmatpush2.bf16.msra.mxu0 %v4529
    %4626 = vmatprep.subr.bf16.mxu0 %v4526
    %4627 = vmatpush2.bf16.msra.mxu0 %v4525
    %4628 = vmatprep.subr.bf16.mxu0 %v4522
    %4629 = vmatpush2.bf16.msra.mxu0 %v4521
    %4630 = vmatprep.subr.bf16.mxu0 %v4518
    %4631 = vmatpush2.bf16.msra.mxu0 %v4517
    %4632 = vmatprep.mubr.bf16.mxu0 %v4586
    %4633 = vmatmul.mubr.bf16.gmra.mxu0 %v1832
    %v4634 = vpop.f32.mrf.mxu0
    %v4635 = vadd.f32 0.0, %v4634
    %v4636 = vpop.f32.mrf.mxu0
    %v4637 = vadd.f32 0.0, %v4636
    %v4638 = vpop.f32.mrf.mxu0
    %v4639 = vadd.f32 0.0, %v4638
    %v4640 = vpop.f32.mrf.mxu0
    %v4641 = vadd.f32 0.0, %v4640
    %4642 = vdwg.mxu0
    %4643 = vmatprep.subr.bf16.mxu0 %v4516
    %4644 = vmatpush1.bf16.msra.mxu0 %v4515
    %4645 = vmatprep.subr.bf16.mxu0 %v4512
    %4646 = vmatpush1.bf16.msra.mxu0 %v4511
    %4647 = vmatprep.subr.bf16.mxu0 %v4508
    %4648 = vmatpush1.bf16.msra.mxu0 %v4507
    %4649 = vmatprep.subr.bf16.mxu0 %v4504
    %4650 = vmatpush1.bf16.msra.mxu0 %v4503
    %4651 = vmatprep.subr.bf16.mxu0 %v4500
    %4652 = vmatpush1.bf16.msra.mxu0 %v4499
    %4653 = vmatprep.subr.bf16.mxu0 %v4496
    %4654 = vmatpush1.bf16.msra.mxu0 %v4495
    %4655 = vmatprep.subr.bf16.mxu0 %v4492
    %4656 = vmatpush1.bf16.msra.mxu0 %v4491
    %4657 = vmatprep.subr.bf16.mxu0 %v4488
    %4658 = vmatpush1.bf16.msra.mxu0 %v4487
    %4659 = vmatprep.subr.bf16.mxu0 0
    %4660 = vmatpush2.bf16.msra.mxu0 0
    %4661 = vmatprep.subr.bf16.mxu0 0
    %4662 = vmatpush2.bf16.msra.mxu0 0
    %4663 = vmatprep.subr.bf16.mxu0 0
    %4664 = vmatpush2.bf16.msra.mxu0 0
    %4665 = vmatprep.subr.bf16.mxu0 %v4598
    %4666 = vmatpush2.bf16.msra.mxu0 %v4595
    %4667 = vmatprep.subr.bf16.mxu0 %v4532
    %4668 = vmatpush2.bf16.msra.mxu0 %v4531
    %4669 = vmatprep.subr.bf16.mxu0 %v4528
    %4670 = vmatpush2.bf16.msra.mxu0 %v4527
    %4671 = vmatprep.subr.bf16.mxu0 %v4524
    %4672 = vmatpush2.bf16.msra.mxu0 %v4523
    %4673 = vmatprep.subr.bf16.mxu0 %v4520
    %4674 = vmatpush2.bf16.msra.mxu0 %v4519
    %4675 = vmatprep.mubr.bf16.mxu0 %v4586
    %4676 = vmatmul.mubr.bf16.gmra.mxu0 %v1832
    %v4677 = vpop.f32.mrf.mxu0
    %v4678 = vadd.f32 0.0, %v4677
    %v4679 = vpop.f32.mrf.mxu0
    %v4680 = vadd.f32 0.0, %v4679
    %v4681 = vpop.f32.mrf.mxu0
    %v4682 = vadd.f32 0.0, %v4681
    %v4683 = vpop.f32.mrf.mxu0
    %v4684 = vadd.f32 0.0, %v4683
    %4685 = vdwg.mxu0
    %v4686 = vadd.f32 %v4276, %v4635
    %v4687 = vadd.f32 %v4277, %v4637
    %v4688 = vadd.f32 %v4278, %v4678
    %v4689 = vadd.f32 %v4279, %v4680
    %v4690 = vadd.f32 %v4280, %v4639
    %v4691 = vadd.f32 %v4281, %v4641
    %v4692 = vadd.f32 %v4282, %v4682
    %v4693 = vadd.f32 %v4283, %v4684
    %s4694 = scalar_lea.vmem [#allocation7], 2800
    %v4695 = vld [vmem:[%s4694] sm:$0xff]
    %v4696 = vld [vmem:[%s4694 + $0x8] sm:$0xff]
    %v4697 = vld [vmem:[%s4694 + $0x10] sm:$0xff]
    %v4698 = vld [vmem:[%s4694 + $0x18] sm:$0xff]
    %v4699 = vld [vmem:[%s4694 + $0x20] sm:$0xff]
    %v4700 = vld [vmem:[%s4694 + $0x28] sm:$0xff]
    %v4701 = vld [vmem:[%s4694 + $0x30] sm:$0xff]
    %v4702 = vld [vmem:[%s4694 + $0x38] sm:$0xff]
    %v4703 = vld [vmem:[%s4694 + $0x40] sm:$0xff]
    %v4704 = vld [vmem:[%s4694 + $0x48] sm:$0xff]
    %v4705 = vld [vmem:[%s4694 + $0x50] sm:$0xff]
    %v4706 = vld [vmem:[%s4694 + $0x58] sm:$0xff]
    %v4707 = vld [vmem:[%s4694 + $0x60] sm:$0xff]
    %v4708 = vld [vmem:[%s4694 + $0x68] sm:$0xff]
    %v4709 = vld [vmem:[%s4694 + $0x70] sm:$0xff]
    %v4710 = vld [vmem:[%s4694 + $0x78] sm:$0xff]
    %v4711 = vld [vmem:[%s4694 + $0x80] sm:$0xff]
    %v4712 = vld [vmem:[%s4694 + $0x88] sm:$0xff]
    %v4713 = vld [vmem:[%s4694 + $0x90] sm:$0xff]
    %v4714 = vld [vmem:[%s4694 + $0x98] sm:$0xff]
    %v4715 = vld [vmem:[%s4694 + $0xa0] sm:$0xff]
    %v4716 = vld [vmem:[%s4694 + $0xa8] sm:$0xff]
    %v4717 = vld [vmem:[%s4694 + $0xb0] sm:$0xff]
    %v4718 = vld [vmem:[%s4694 + $0xb8] sm:$0xff]
    %v4719 = vld [vmem:[%s4694 + $0xc0] sm:$0xff]
    %v4720 = vld [vmem:[%s4694 + $0xc8] sm:$0xff]
    %v4721 = vld [vmem:[%s4694 + $0xd0] sm:$0xff]
    %v4722 = vld [vmem:[%s4694 + $0xd8] sm:$0xff]
    %v4723 = vld [vmem:[%s4694 + $0xe0] sm:$0xff]
    %v4724 = vld [vmem:[%s4694 + $0xe8] sm:$0xff]
    %v4725 = vld [vmem:[%s4694 + $0xf0] sm:$0xff]
    %v4726 = vld [vmem:[%s4694 + $0xf8] sm:$0xff]
    %v4727 = vld [vmem:[%s4694 + $0x100] sm:$0xff]
    %v4728 = vld [vmem:[%s4694 + $0x108] sm:$0xff]
    %v4729 = vld [vmem:[%s4694 + $0x110] sm:$0xff]
    %v4730 = vld [vmem:[%s4694 + $0x118] sm:$0xff]
    %v4731 = vld [vmem:[%s4694 + $0x120] sm:$0xff]
    %v4732 = vld [vmem:[%s4694 + $0x128] sm:$0xff]
    %v4733 = vld [vmem:[%s4694 + $0x130] sm:$0xff]
    %v4734 = vld [vmem:[%s4694 + $0x138] sm:$0xff]
    %v4735 = vld [vmem:[%s4694 + $0x140] sm:$0xff]
    %v4736 = vld [vmem:[%s4694 + $0x148] sm:$0xff]
    %v4737 = vld [vmem:[%s4694 + $0x150] sm:$0xff]
    %v4738 = vld [vmem:[%s4694 + $0x158] sm:$0xff]
    %v4739 = vld [vmem:[%s4694 + $0x160] sm:$0xff]
    %v4740 = vld [vmem:[%s4694 + $0x168] sm:$0xff]
    %v4741 = vld [vmem:[%s4694 + $0x170] sm:$0xff]
    %v4742 = vld [vmem:[%s4694 + $0x178] sm:$0xff]
    %v4743 = vld [vmem:[%s4694 + $0x180] sm:$0xff]
    %v4744 = vld [vmem:[%s4694 + $0x188] sm:$0xff]
    %v4795 = vunpack.c.l.b16 %v4695
    %v4796 = vunpack.c.h.b16 %v4695
    %v4797 = vunpack.c.l.b16 %v4696
    %v4798 = vunpack.c.h.b16 %v4696
    %v4799 = vunpack.c.l.b16 %v4697
    %v4800 = vunpack.c.h.b16 %v4697
    %v4801 = vunpack.c.l.b16 %v4698
    %v4802 = vunpack.c.h.b16 %v4698
    %v4803 = vunpack.c.l.b16 %v4699
    %v4804 = vunpack.c.h.b16 %v4699
    %v4805 = vunpack.c.l.b16 %v4700
    %v4806 = vunpack.c.h.b16 %v4700
    %v4807 = vunpack.c.l.b16 %v4701
    %v4808 = vunpack.c.h.b16 %v4701
    %v4809 = vunpack.c.l.b16 %v4702
    %v4810 = vunpack.c.h.b16 %v4702
    %v4811 = vunpack.c.l.b16 %v4703
    %v4812 = vunpack.c.h.b16 %v4703
    %v4813 = vunpack.c.l.b16 %v4704
    %v4814 = vunpack.c.h.b16 %v4704
    %v4815 = vunpack.c.l.b16 %v4705
    %v4816 = vunpack.c.h.b16 %v4705
    %v4817 = vunpack.c.l.b16 %v4706
    %v4818 = vunpack.c.h.b16 %v4706
    %v4819 = vunpack.c.l.b16 %v4707
    %v4820 = vunpack.c.h.b16 %v4707
    %v4821 = vunpack.c.l.b16 %v4708
    %v4822 = vunpack.c.h.b16 %v4708
    %v4823 = vunpack.c.l.b16 %v4709
    %v4824 = vunpack.c.h.b16 %v4709
    %v4825 = vunpack.c.l.b16 %v4710
    %v4826 = vunpack.c.h.b16 %v4710
    %v4827 = vunpack.c.l.b16 %v4711
    %v4828 = vunpack.c.h.b16 %v4711
    %v4829 = vunpack.c.l.b16 %v4712
    %v4830 = vunpack.c.h.b16 %v4712
    %v4831 = vunpack.c.l.b16 %v4713
    %v4832 = vunpack.c.h.b16 %v4713
    %v4833 = vunpack.c.l.b16 %v4714
    %v4834 = vunpack.c.h.b16 %v4714
    %v4835 = vunpack.c.l.b16 %v4715
    %v4836 = vunpack.c.h.b16 %v4715
    %v4837 = vunpack.c.l.b16 %v4716
    %v4838 = vunpack.c.h.b16 %v4716
    %v4839 = vunpack.c.l.b16 %v4717
    %v4840 = vunpack.c.h.b16 %v4717
    %v4841 = vunpack.c.l.b16 %v4718
    %v4842 = vunpack.c.h.b16 %v4718
    %v4843 = vunpack.c.l.b16 %v4719
    %v4844 = vunpack.c.h.b16 %v4719
    %v4845 = vunpack.c.l.b16 %v4720
    %v4846 = vunpack.c.h.b16 %v4720
    %v4847 = vunpack.c.l.b16 %v4721
    %v4848 = vunpack.c.h.b16 %v4721
    %v4849 = vunpack.c.l.b16 %v4722
    %v4850 = vunpack.c.h.b16 %v4722
    %v4851 = vunpack.c.l.b16 %v4723
    %v4852 = vunpack.c.h.b16 %v4723
    %v4853 = vunpack.c.l.b16 %v4724
    %v4854 = vunpack.c.h.b16 %v4724
    %v4855 = vunpack.c.l.b16 %v4725
    %v4856 = vunpack.c.h.b16 %v4725
    %v4857 = vunpack.c.l.b16 %v4726
    %v4858 = vunpack.c.h.b16 %v4726
    %v4859 = vunpack.c.l.b16 %v4727
    %v4860 = vunpack.c.h.b16 %v4727
    %v4861 = vunpack.c.l.b16 %v4728
    %v4862 = vunpack.c.h.b16 %v4728
    %v4863 = vunpack.c.l.b16 %v4729
    %v4864 = vunpack.c.h.b16 %v4729
    %v4865 = vunpack.c.l.b16 %v4730
    %v4866 = vunpack.c.h.b16 %v4730
    %v4867 = vunpack.c.l.b16 %v4731
    %v4868 = vunpack.c.h.b16 %v4731
    %v4869 = vunpack.c.l.b16 %v4732
    %v4870 = vunpack.c.h.b16 %v4732
    %v4871 = vunpack.c.l.b16 %v4733
    %v4872 = vunpack.c.h.b16 %v4733
    %v4873 = vunpack.c.l.b16 %v4734
    %v4874 = vunpack.c.h.b16 %v4734
    %v4875 = vunpack.c.l.b16 %v4735
    %v4876 = vunpack.c.h.b16 %v4735
    %v4877 = vunpack.c.l.b16 %v4736
    %v4878 = vunpack.c.h.b16 %v4736
    %v4879 = vunpack.c.l.b16 %v4737
    %v4880 = vunpack.c.h.b16 %v4737
    %v4881 = vunpack.c.l.b16 %v4738
    %v4882 = vunpack.c.h.b16 %v4738
    %v4883 = vunpack.c.l.b16 %v4739
    %v4884 = vunpack.c.h.b16 %v4739
    %v4885 = vunpack.c.l.b16 %v4740
    %v4886 = vunpack.c.h.b16 %v4740
    %v4887 = vunpack.c.l.b16 %v4741
    %v4888 = vunpack.c.h.b16 %v4741
    %v4889 = vunpack.c.l.b16 %v4742
    %v4890 = vunpack.c.h.b16 %v4742
    %v4891 = vunpack.c.l.b16 %v4743
    %v4892 = vunpack.c.h.b16 %v4743
    %v4893 = vunpack.c.l.b16 %v4744
    %v4894 = vunpack.c.h.b16 %v4744
    %v4895 = vpack.c.b16 %v4799, %v4795
    %v4896 = vpack.c.b16 %v4800, %v4796
    %v4897 = vpack.c.b16 %v4801, %v4797
    %v4898 = vpack.c.b16 %v4802, %v4798
    %v4899 = vpack.c.b16 %v4807, %v4803
    %v4900 = vpack.c.b16 %v4808, %v4804
    %v4901 = vpack.c.b16 %v4809, %v4805
    %v4902 = vpack.c.b16 %v4810, %v4806
    %v4903 = vpack.c.b16 %v4815, %v4811
    %v4904 = vpack.c.b16 %v4816, %v4812
    %v4905 = vpack.c.b16 %v4817, %v4813
    %v4906 = vpack.c.b16 %v4818, %v4814
    %v4907 = vpack.c.b16 %v4823, %v4819
    %v4908 = vpack.c.b16 %v4824, %v4820
    %v4909 = vpack.c.b16 %v4825, %v4821
    %v4910 = vpack.c.b16 %v4826, %v4822
    %v4911 = vpack.c.b16 %v4831, %v4827
    %v4912 = vpack.c.b16 %v4832, %v4828
    %v4913 = vpack.c.b16 %v4833, %v4829
    %v4914 = vpack.c.b16 %v4834, %v4830
    %v4915 = vpack.c.b16 %v4839, %v4835
    %v4916 = vpack.c.b16 %v4840, %v4836
    %v4917 = vpack.c.b16 %v4841, %v4837
    %v4918 = vpack.c.b16 %v4842, %v4838
    %v4919 = vpack.c.b16 %v4847, %v4843
    %v4920 = vpack.c.b16 %v4848, %v4844
    %v4921 = vpack.c.b16 %v4849, %v4845
    %v4922 = vpack.c.b16 %v4850, %v4846
    %v4923 = vpack.c.b16 %v4855, %v4851
    %v4924 = vpack.c.b16 %v4856, %v4852
    %v4925 = vpack.c.b16 %v4857, %v4853
    %v4926 = vpack.c.b16 %v4858, %v4854
    %v4927 = vpack.c.b16 %v4863, %v4859
    %v4928 = vpack.c.b16 %v4864, %v4860
    %v4929 = vpack.c.b16 %v4865, %v4861
    %v4930 = vpack.c.b16 %v4866, %v4862
    %v4931 = vpack.c.b16 %v4871, %v4867
    %v4932 = vpack.c.b16 %v4872, %v4868
    %v4933 = vpack.c.b16 %v4873, %v4869
    %v4934 = vpack.c.b16 %v4874, %v4870
    %v4935 = vpack.c.b16 %v4879, %v4875
    %v4936 = vpack.c.b16 %v4880, %v4876
    %v4937 = vpack.c.b16 %v4881, %v4877
    %v4938 = vpack.c.b16 %v4882, %v4878
    %v4939 = vpack.c.b16 %v4887, %v4883
    %v4940 = vpack.c.b16 %v4888, %v4884
    %v4941 = vpack.c.b16 %v4889, %v4885
    %v4942 = vpack.c.b16 %v4890, %v4886
    %v4943 = vpack.c.b16 %v4891, %v4891
    %v4944 = vpack.c.b16 %v4892, %v4892
    %v4945 = vpack.c.b16 %v4893, %v4893
    %v4946 = vpack.c.b16 %v4894, %v4894
    %v4996 = vsel %vm2191, %v1835, 0
    %v4999 = vsel %vm541, %v4943, 0
    %v5002 = vsel %vm541, %v4944, 0
    %v5005 = vsel %vm541, %v4945, 0
    %v5008 = vsel %vm541, %v4946, 0
    %5010 = vmatprep.subr.bf16.mxu0 %v4924
    %5011 = vmatpush1.bf16.msra.mxu0 %v4923
    %5012 = vmatprep.subr.bf16.mxu0 %v4920
    %5013 = vmatpush1.bf16.msra.mxu0 %v4919
    %5014 = vmatprep.subr.bf16.mxu0 %v4916
    %5015 = vmatpush1.bf16.msra.mxu0 %v4915
    %5016 = vmatprep.subr.bf16.mxu0 %v4912
    %5017 = vmatpush1.bf16.msra.mxu0 %v4911
    %5018 = vmatprep.subr.bf16.mxu0 %v4908
    %5019 = vmatpush1.bf16.msra.mxu0 %v4907
    %5020 = vmatprep.subr.bf16.mxu0 %v4904
    %5021 = vmatpush1.bf16.msra.mxu0 %v4903
    %5022 = vmatprep.subr.bf16.mxu0 %v4900
    %5023 = vmatpush1.bf16.msra.mxu0 %v4899
    %5024 = vmatprep.subr.bf16.mxu0 %v4896
    %5025 = vmatpush1.bf16.msra.mxu0 %v4895
    %5026 = vmatprep.subr.bf16.mxu0 0
    %5027 = vmatpush2.bf16.msra.mxu0 0
    %5028 = vmatprep.subr.bf16.mxu0 0
    %5029 = vmatpush2.bf16.msra.mxu0 0
    %5030 = vmatprep.subr.bf16.mxu0 0
    %5031 = vmatpush2.bf16.msra.mxu0 0
    %5032 = vmatprep.subr.bf16.mxu0 %v5002
    %5033 = vmatpush2.bf16.msra.mxu0 %v4999
    %5034 = vmatprep.subr.bf16.mxu0 %v4940
    %5035 = vmatpush2.bf16.msra.mxu0 %v4939
    %5036 = vmatprep.subr.bf16.mxu0 %v4936
    %5037 = vmatpush2.bf16.msra.mxu0 %v4935
    %5038 = vmatprep.subr.bf16.mxu0 %v4932
    %5039 = vmatpush2.bf16.msra.mxu0 %v4931
    %5040 = vmatprep.subr.bf16.mxu0 %v4928
    %5041 = vmatpush2.bf16.msra.mxu0 %v4927
    %5042 = vmatprep.mubr.bf16.mxu0 %v4996
    %5043 = vmatmul.mubr.bf16.gmra.mxu0 %v1834
    %v5044 = vpop.f32.mrf.mxu0
    %v5045 = vadd.f32 0.0, %v5044
    %v5046 = vpop.f32.mrf.mxu0
    %v5047 = vadd.f32 0.0, %v5046
    %v5048 = vpop.f32.mrf.mxu0
    %v5049 = vadd.f32 0.0, %v5048
    %v5050 = vpop.f32.mrf.mxu0
    %v5051 = vadd.f32 0.0, %v5050
    %5052 = vdwg.mxu0
    %5053 = vmatprep.subr.bf16.mxu0 %v4926
    %5054 = vmatpush1.bf16.msra.mxu0 %v4925
    %5055 = vmatprep.subr.bf16.mxu0 %v4922
    %5056 = vmatpush1.bf16.msra.mxu0 %v4921
    %5057 = vmatprep.subr.bf16.mxu0 %v4918
    %5058 = vmatpush1.bf16.msra.mxu0 %v4917
    %5059 = vmatprep.subr.bf16.mxu0 %v4914
    %5060 = vmatpush1.bf16.msra.mxu0 %v4913
    %5061 = vmatprep.subr.bf16.mxu0 %v4910
    %5062 = vmatpush1.bf16.msra.mxu0 %v4909
    %5063 = vmatprep.subr.bf16.mxu0 %v4906
    %5064 = vmatpush1.bf16.msra.mxu0 %v4905
    %5065 = vmatprep.subr.bf16.mxu0 %v4902
    %5066 = vmatpush1.bf16.msra.mxu0 %v4901
    %5067 = vmatprep.subr.bf16.mxu0 %v4898
    %5068 = vmatpush1.bf16.msra.mxu0 %v4897
    %5069 = vmatprep.subr.bf16.mxu0 0
    %5070 = vmatpush2.bf16.msra.mxu0 0
    %5071 = vmatprep.subr.bf16.mxu0 0
    %5072 = vmatpush2.bf16.msra.mxu0 0
    %5073 = vmatprep.subr.bf16.mxu0 0
    %5074 = vmatpush2.bf16.msra.mxu0 0
    %5075 = vmatprep.subr.bf16.mxu0 %v5008
    %5076 = vmatpush2.bf16.msra.mxu0 %v5005
    %5077 = vmatprep.subr.bf16.mxu0 %v4942
    %5078 = vmatpush2.bf16.msra.mxu0 %v4941
    %5079 = vmatprep.subr.bf16.mxu0 %v4938
    %5080 = vmatpush2.bf16.msra.mxu0 %v4937
    %5081 = vmatprep.subr.bf16.mxu0 %v4934
    %5082 = vmatpush2.bf16.msra.mxu0 %v4933
    %5083 = vmatprep.subr.bf16.mxu0 %v4930
    %5084 = vmatpush2.bf16.msra.mxu0 %v4929
    %5085 = vmatprep.mubr.bf16.mxu0 %v4996
    %5086 = vmatmul.mubr.bf16.gmra.mxu0 %v1834
    %v5087 = vpop.f32.mrf.mxu0
    %v5088 = vadd.f32 0.0, %v5087
    %v5089 = vpop.f32.mrf.mxu0
    %v5090 = vadd.f32 0.0, %v5089
    %v5091 = vpop.f32.mrf.mxu0
    %v5092 = vadd.f32 0.0, %v5091
    %v5093 = vpop.f32.mrf.mxu0
    %v5094 = vadd.f32 0.0, %v5093
    %5095 = vdwg.mxu0
    %v5096 = vadd.f32 %v4686, %v5045
    %v5097 = vadd.f32 %v4687, %v5047
    %v5098 = vadd.f32 %v4688, %v5088
    %v5099 = vadd.f32 %v4689, %v5090
    %v5100 = vadd.f32 %v4690, %v5049
    %v5101 = vadd.f32 %v4691, %v5051
    %v5102 = vadd.f32 %v4692, %v5092
    %v5103 = vadd.f32 %v4693, %v5094
    %s5104 = scalar_lea.vmem [#allocation7], 3200
    %v5105 = vld [vmem:[%s5104] sm:$0xff]
    %v5106 = vld [vmem:[%s5104 + $0x8] sm:$0xff]
    %v5107 = vld [vmem:[%s5104 + $0x10] sm:$0xff]
    %v5108 = vld [vmem:[%s5104 + $0x18] sm:$0xff]
    %v5109 = vld [vmem:[%s5104 + $0x20] sm:$0xff]
    %v5110 = vld [vmem:[%s5104 + $0x28] sm:$0xff]
    %v5111 = vld [vmem:[%s5104 + $0x30] sm:$0xff]
    %v5112 = vld [vmem:[%s5104 + $0x38] sm:$0xff]
    %v5113 = vld [vmem:[%s5104 + $0x40] sm:$0xff]
    %v5114 = vld [vmem:[%s5104 + $0x48] sm:$0xff]
    %v5115 = vld [vmem:[%s5104 + $0x50] sm:$0xff]
    %v5116 = vld [vmem:[%s5104 + $0x58] sm:$0xff]
    %v5117 = vld [vmem:[%s5104 + $0x60] sm:$0xff]
    %v5118 = vld [vmem:[%s5104 + $0x68] sm:$0xff]
    %v5119 = vld [vmem:[%s5104 + $0x70] sm:$0xff]
    %v5120 = vld [vmem:[%s5104 + $0x78] sm:$0xff]
    %v5121 = vld [vmem:[%s5104 + $0x80] sm:$0xff]
    %v5122 = vld [vmem:[%s5104 + $0x88] sm:$0xff]
    %v5123 = vld [vmem:[%s5104 + $0x90] sm:$0xff]
    %v5124 = vld [vmem:[%s5104 + $0x98] sm:$0xff]
    %v5125 = vld [vmem:[%s5104 + $0xa0] sm:$0xff]
    %v5126 = vld [vmem:[%s5104 + $0xa8] sm:$0xff]
    %v5127 = vld [vmem:[%s5104 + $0xb0] sm:$0xff]
    %v5128 = vld [vmem:[%s5104 + $0xb8] sm:$0xff]
    %v5129 = vld [vmem:[%s5104 + $0xc0] sm:$0xff]
    %v5130 = vld [vmem:[%s5104 + $0xc8] sm:$0xff]
    %v5131 = vld [vmem:[%s5104 + $0xd0] sm:$0xff]
    %v5132 = vld [vmem:[%s5104 + $0xd8] sm:$0xff]
    %v5133 = vld [vmem:[%s5104 + $0xe0] sm:$0xff]
    %v5134 = vld [vmem:[%s5104 + $0xe8] sm:$0xff]
    %v5135 = vld [vmem:[%s5104 + $0xf0] sm:$0xff]
    %v5136 = vld [vmem:[%s5104 + $0xf8] sm:$0xff]
    %v5137 = vld [vmem:[%s5104 + $0x100] sm:$0xff]
    %v5138 = vld [vmem:[%s5104 + $0x108] sm:$0xff]
    %v5139 = vld [vmem:[%s5104 + $0x110] sm:$0xff]
    %v5140 = vld [vmem:[%s5104 + $0x118] sm:$0xff]
    %v5141 = vld [vmem:[%s5104 + $0x120] sm:$0xff]
    %v5142 = vld [vmem:[%s5104 + $0x128] sm:$0xff]
    %v5143 = vld [vmem:[%s5104 + $0x130] sm:$0xff]
    %v5144 = vld [vmem:[%s5104 + $0x138] sm:$0xff]
    %v5145 = vld [vmem:[%s5104 + $0x140] sm:$0xff]
    %v5146 = vld [vmem:[%s5104 + $0x148] sm:$0xff]
    %v5147 = vld [vmem:[%s5104 + $0x150] sm:$0xff]
    %v5148 = vld [vmem:[%s5104 + $0x158] sm:$0xff]
    %v5149 = vld [vmem:[%s5104 + $0x160] sm:$0xff]
    %v5150 = vld [vmem:[%s5104 + $0x168] sm:$0xff]
    %v5151 = vld [vmem:[%s5104 + $0x170] sm:$0xff]
    %v5152 = vld [vmem:[%s5104 + $0x178] sm:$0xff]
    %v5153 = vld [vmem:[%s5104 + $0x180] sm:$0xff]
    %v5154 = vld [vmem:[%s5104 + $0x188] sm:$0xff]
    %v5205 = vunpack.c.l.b16 %v5105
    %v5206 = vunpack.c.h.b16 %v5105
    %v5207 = vunpack.c.l.b16 %v5106
    %v5208 = vunpack.c.h.b16 %v5106
    %v5209 = vunpack.c.l.b16 %v5107
    %v5210 = vunpack.c.h.b16 %v5107
    %v5211 = vunpack.c.l.b16 %v5108
    %v5212 = vunpack.c.h.b16 %v5108
    %v5213 = vunpack.c.l.b16 %v5109
    %v5214 = vunpack.c.h.b16 %v5109
    %v5215 = vunpack.c.l.b16 %v5110
    %v5216 = vunpack.c.h.b16 %v5110
    %v5217 = vunpack.c.l.b16 %v5111
    %v5218 = vunpack.c.h.b16 %v5111
    %v5219 = vunpack.c.l.b16 %v5112
    %v5220 = vunpack.c.h.b16 %v5112
    %v5221 = vunpack.c.l.b16 %v5113
    %v5222 = vunpack.c.h.b16 %v5113
    %v5223 = vunpack.c.l.b16 %v5114
    %v5224 = vunpack.c.h.b16 %v5114
    %v5225 = vunpack.c.l.b16 %v5115
    %v5226 = vunpack.c.h.b16 %v5115
    %v5227 = vunpack.c.l.b16 %v5116
    %v5228 = vunpack.c.h.b16 %v5116
    %v5229 = vunpack.c.l.b16 %v5117
    %v5230 = vunpack.c.h.b16 %v5117
    %v5231 = vunpack.c.l.b16 %v5118
    %v5232 = vunpack.c.h.b16 %v5118
    %v5233 = vunpack.c.l.b16 %v5119
    %v5234 = vunpack.c.h.b16 %v5119
    %v5235 = vunpack.c.l.b16 %v5120
    %v5236 = vunpack.c.h.b16 %v5120
    %v5237 = vunpack.c.l.b16 %v5121
    %v5238 = vunpack.c.h.b16 %v5121
    %v5239 = vunpack.c.l.b16 %v5122
    %v5240 = vunpack.c.h.b16 %v5122
    %v5241 = vunpack.c.l.b16 %v5123
    %v5242 = vunpack.c.h.b16 %v5123
    %v5243 = vunpack.c.l.b16 %v5124
    %v5244 = vunpack.c.h.b16 %v5124
    %v5245 = vunpack.c.l.b16 %v5125
    %v5246 = vunpack.c.h.b16 %v5125
    %v5247 = vunpack.c.l.b16 %v5126
    %v5248 = vunpack.c.h.b16 %v5126
    %v5249 = vunpack.c.l.b16 %v5127
    %v5250 = vunpack.c.h.b16 %v5127
    %v5251 = vunpack.c.l.b16 %v5128
    %v5252 = vunpack.c.h.b16 %v5128
    %v5253 = vunpack.c.l.b16 %v5129
    %v5254 = vunpack.c.h.b16 %v5129
    %v5255 = vunpack.c.l.b16 %v5130
    %v5256 = vunpack.c.h.b16 %v5130
    %v5257 = vunpack.c.l.b16 %v5131
    %v5258 = vunpack.c.h.b16 %v5131
    %v5259 = vunpack.c.l.b16 %v5132
    %v5260 = vunpack.c.h.b16 %v5132
    %v5261 = vunpack.c.l.b16 %v5133
    %v5262 = vunpack.c.h.b16 %v5133
    %v5263 = vunpack.c.l.b16 %v5134
    %v5264 = vunpack.c.h.b16 %v5134
    %v5265 = vunpack.c.l.b16 %v5135
    %v5266 = vunpack.c.h.b16 %v5135
    %v5267 = vunpack.c.l.b16 %v5136
    %v5268 = vunpack.c.h.b16 %v5136
    %v5269 = vunpack.c.l.b16 %v5137
    %v5270 = vunpack.c.h.b16 %v5137
    %v5271 = vunpack.c.l.b16 %v5138
    %v5272 = vunpack.c.h.b16 %v5138
    %v5273 = vunpack.c.l.b16 %v5139
    %v5274 = vunpack.c.h.b16 %v5139
    %v5275 = vunpack.c.l.b16 %v5140
    %v5276 = vunpack.c.h.b16 %v5140
    %v5277 = vunpack.c.l.b16 %v5141
    %v5278 = vunpack.c.h.b16 %v5141
    %v5279 = vunpack.c.l.b16 %v5142
    %v5280 = vunpack.c.h.b16 %v5142
    %v5281 = vunpack.c.l.b16 %v5143
    %v5282 = vunpack.c.h.b16 %v5143
    %v5283 = vunpack.c.l.b16 %v5144
    %v5284 = vunpack.c.h.b16 %v5144
    %v5285 = vunpack.c.l.b16 %v5145
    %v5286 = vunpack.c.h.b16 %v5145
    %v5287 = vunpack.c.l.b16 %v5146
    %v5288 = vunpack.c.h.b16 %v5146
    %v5289 = vunpack.c.l.b16 %v5147
    %v5290 = vunpack.c.h.b16 %v5147
    %v5291 = vunpack.c.l.b16 %v5148
    %v5292 = vunpack.c.h.b16 %v5148
    %v5293 = vunpack.c.l.b16 %v5149
    %v5294 = vunpack.c.h.b16 %v5149
    %v5295 = vunpack.c.l.b16 %v5150
    %v5296 = vunpack.c.h.b16 %v5150
    %v5297 = vunpack.c.l.b16 %v5151
    %v5298 = vunpack.c.h.b16 %v5151
    %v5299 = vunpack.c.l.b16 %v5152
    %v5300 = vunpack.c.h.b16 %v5152
    %v5301 = vunpack.c.l.b16 %v5153
    %v5302 = vunpack.c.h.b16 %v5153
    %v5303 = vunpack.c.l.b16 %v5154
    %v5304 = vunpack.c.h.b16 %v5154
    %v5305 = vpack.c.b16 %v5209, %v5205
    %v5306 = vpack.c.b16 %v5210, %v5206
    %v5307 = vpack.c.b16 %v5211, %v5207
    %v5308 = vpack.c.b16 %v5212, %v5208
    %v5309 = vpack.c.b16 %v5217, %v5213
    %v5310 = vpack.c.b16 %v5218, %v5214
    %v5311 = vpack.c.b16 %v5219, %v5215
    %v5312 = vpack.c.b16 %v5220, %v5216
    %v5313 = vpack.c.b16 %v5225, %v5221
    %v5314 = vpack.c.b16 %v5226, %v5222
    %v5315 = vpack.c.b16 %v5227, %v5223
    %v5316 = vpack.c.b16 %v5228, %v5224
    %v5317 = vpack.c.b16 %v5233, %v5229
    %v5318 = vpack.c.b16 %v5234, %v5230
    %v5319 = vpack.c.b16 %v5235, %v5231
    %v5320 = vpack.c.b16 %v5236, %v5232
    %v5321 = vpack.c.b16 %v5241, %v5237
    %v5322 = vpack.c.b16 %v5242, %v5238
    %v5323 = vpack.c.b16 %v5243, %v5239
    %v5324 = vpack.c.b16 %v5244, %v5240
    %v5325 = vpack.c.b16 %v5249, %v5245
    %v5326 = vpack.c.b16 %v5250, %v5246
    %v5327 = vpack.c.b16 %v5251, %v5247
    %v5328 = vpack.c.b16 %v5252, %v5248
    %v5329 = vpack.c.b16 %v5257, %v5253
    %v5330 = vpack.c.b16 %v5258, %v5254
    %v5331 = vpack.c.b16 %v5259, %v5255
    %v5332 = vpack.c.b16 %v5260, %v5256
    %v5333 = vpack.c.b16 %v5265, %v5261
    %v5334 = vpack.c.b16 %v5266, %v5262
    %v5335 = vpack.c.b16 %v5267, %v5263
    %v5336 = vpack.c.b16 %v5268, %v5264
    %v5337 = vpack.c.b16 %v5273, %v5269
    %v5338 = vpack.c.b16 %v5274, %v5270
    %v5339 = vpack.c.b16 %v5275, %v5271
    %v5340 = vpack.c.b16 %v5276, %v5272
    %v5341 = vpack.c.b16 %v5281, %v5277
    %v5342 = vpack.c.b16 %v5282, %v5278
    %v5343 = vpack.c.b16 %v5283, %v5279
    %v5344 = vpack.c.b16 %v5284, %v5280
    %v5345 = vpack.c.b16 %v5289, %v5285
    %v5346 = vpack.c.b16 %v5290, %v5286
    %v5347 = vpack.c.b16 %v5291, %v5287
    %v5348 = vpack.c.b16 %v5292, %v5288
    %v5349 = vpack.c.b16 %v5297, %v5293
    %v5350 = vpack.c.b16 %v5298, %v5294
    %v5351 = vpack.c.b16 %v5299, %v5295
    %v5352 = vpack.c.b16 %v5300, %v5296
    %v5353 = vpack.c.b16 %v5301, %v5301
    %v5354 = vpack.c.b16 %v5302, %v5302
    %v5355 = vpack.c.b16 %v5303, %v5303
    %v5356 = vpack.c.b16 %v5304, %v5304
    %v5406 = vsel %vm2191, %v1837, 0
    %v5409 = vsel %vm541, %v5353, 0
    %v5412 = vsel %vm541, %v5354, 0
    %v5415 = vsel %vm541, %v5355, 0
    %v5418 = vsel %vm541, %v5356, 0
    %5420 = vmatprep.subr.bf16.mxu0 %v5334
    %5421 = vmatpush1.bf16.msra.mxu0 %v5333
    %5422 = vmatprep.subr.bf16.mxu0 %v5330
    %5423 = vmatpush1.bf16.msra.mxu0 %v5329
    %5424 = vmatprep.subr.bf16.mxu0 %v5326
    %5425 = vmatpush1.bf16.msra.mxu0 %v5325
    %5426 = vmatprep.subr.bf16.mxu0 %v5322
    %5427 = vmatpush1.bf16.msra.mxu0 %v5321
    %5428 = vmatprep.subr.bf16.mxu0 %v5318
    %5429 = vmatpush1.bf16.msra.mxu0 %v5317
    %5430 = vmatprep.subr.bf16.mxu0 %v5314
    %5431 = vmatpush1.bf16.msra.mxu0 %v5313
    %5432 = vmatprep.subr.bf16.mxu0 %v5310
    %5433 = vmatpush1.bf16.msra.mxu0 %v5309
    %5434 = vmatprep.subr.bf16.mxu0 %v5306
    %5435 = vmatpush1.bf16.msra.mxu0 %v5305
    %5436 = vmatprep.subr.bf16.mxu0 0
    %5437 = vmatpush2.bf16.msra.mxu0 0
    %5438 = vmatprep.subr.bf16.mxu0 0
    %5439 = vmatpush2.bf16.msra.mxu0 0
    %5440 = vmatprep.subr.bf16.mxu0 0
    %5441 = vmatpush2.bf16.msra.mxu0 0
    %5442 = vmatprep.subr.bf16.mxu0 %v5412
    %5443 = vmatpush2.bf16.msra.mxu0 %v5409
    %5444 = vmatprep.subr.bf16.mxu0 %v5350
    %5445 = vmatpush2.bf16.msra.mxu0 %v5349
    %5446 = vmatprep.subr.bf16.mxu0 %v5346
    %5447 = vmatpush2.bf16.msra.mxu0 %v5345
    %5448 = vmatprep.subr.bf16.mxu0 %v5342
    %5449 = vmatpush2.bf16.msra.mxu0 %v5341
    %5450 = vmatprep.subr.bf16.mxu0 %v5338
    %5451 = vmatpush2.bf16.msra.mxu0 %v5337
    %5452 = vmatprep.mubr.bf16.mxu0 %v5406
    %5453 = vmatmul.mubr.bf16.gmra.mxu0 %v1836
    %v5454 = vpop.f32.mrf.mxu0
    %v5455 = vadd.f32 0.0, %v5454
    %v5456 = vpop.f32.mrf.mxu0
    %v5457 = vadd.f32 0.0, %v5456
    %v5458 = vpop.f32.mrf.mxu0
    %v5459 = vadd.f32 0.0, %v5458
    %v5460 = vpop.f32.mrf.mxu0
    %v5461 = vadd.f32 0.0, %v5460
    %5462 = vdwg.mxu0
    %5463 = vmatprep.subr.bf16.mxu0 %v5336
    %5464 = vmatpush1.bf16.msra.mxu0 %v5335
    %5465 = vmatprep.subr.bf16.mxu0 %v5332
    %5466 = vmatpush1.bf16.msra.mxu0 %v5331
    %5467 = vmatprep.subr.bf16.mxu0 %v5328
    %5468 = vmatpush1.bf16.msra.mxu0 %v5327
    %5469 = vmatprep.subr.bf16.mxu0 %v5324
    %5470 = vmatpush1.bf16.msra.mxu0 %v5323
    %5471 = vmatprep.subr.bf16.mxu0 %v5320
    %5472 = vmatpush1.bf16.msra.mxu0 %v5319
    %5473 = vmatprep.subr.bf16.mxu0 %v5316
    %5474 = vmatpush1.bf16.msra.mxu0 %v5315
    %5475 = vmatprep.subr.bf16.mxu0 %v5312
    %5476 = vmatpush1.bf16.msra.mxu0 %v5311
    %5477 = vmatprep.subr.bf16.mxu0 %v5308
    %5478 = vmatpush1.bf16.msra.mxu0 %v5307
    %5479 = vmatprep.subr.bf16.mxu0 0
    %5480 = vmatpush2.bf16.msra.mxu0 0
    %5481 = vmatprep.subr.bf16.mxu0 0
    %5482 = vmatpush2.bf16.msra.mxu0 0
    %5483 = vmatprep.subr.bf16.mxu0 0
    %5484 = vmatpush2.bf16.msra.mxu0 0
    %5485 = vmatprep.subr.bf16.mxu0 %v5418
    %5486 = vmatpush2.bf16.msra.mxu0 %v5415
    %5487 = vmatprep.subr.bf16.mxu0 %v5352
    %5488 = vmatpush2.bf16.msra.mxu0 %v5351
    %5489 = vmatprep.subr.bf16.mxu0 %v5348
    %5490 = vmatpush2.bf16.msra.mxu0 %v5347
    %5491 = vmatprep.subr.bf16.mxu0 %v5344
    %5492 = vmatpush2.bf16.msra.mxu0 %v5343
    %5493 = vmatprep.subr.bf16.mxu0 %v5340
    %5494 = vmatpush2.bf16.msra.mxu0 %v5339
    %5495 = vmatprep.mubr.bf16.mxu0 %v5406
    %5496 = vmatmul.mubr.bf16.gmra.mxu0 %v1836
    %v5497 = vpop.f32.mrf.mxu0
    %v5498 = vadd.f32 0.0, %v5497
    %v5499 = vpop.f32.mrf.mxu0
    %v5500 = vadd.f32 0.0, %v5499
    %v5501 = vpop.f32.mrf.mxu0
    %v5502 = vadd.f32 0.0, %v5501
    %v5503 = vpop.f32.mrf.mxu0
    %v5504 = vadd.f32 0.0, %v5503
    %5505 = vdwg.mxu0
    %v5506 = vadd.f32 %v5096, %v5455
    %v5507 = vadd.f32 %v5097, %v5457
    %v5508 = vadd.f32 %v5098, %v5498
    %v5509 = vadd.f32 %v5099, %v5500
    %v5510 = vadd.f32 %v5100, %v5459
    %v5511 = vadd.f32 %v5101, %v5461
    %v5512 = vadd.f32 %v5102, %v5502
    %v5513 = vadd.f32 %v5103, %v5504
    %s5514 = scalar_lea.vmem [#allocation7], 3600
    %v5515 = vld [vmem:[%s5514] sm:$0xff]
    %v5516 = vld [vmem:[%s5514 + $0x8] sm:$0xff]
    %v5517 = vld [vmem:[%s5514 + $0x10] sm:$0xff]
    %v5518 = vld [vmem:[%s5514 + $0x18] sm:$0xff]
    %v5519 = vld [vmem:[%s5514 + $0x20] sm:$0xff]
    %v5520 = vld [vmem:[%s5514 + $0x28] sm:$0xff]
    %v5521 = vld [vmem:[%s5514 + $0x30] sm:$0xff]
    %v5522 = vld [vmem:[%s5514 + $0x38] sm:$0xff]
    %v5523 = vld [vmem:[%s5514 + $0x40] sm:$0xff]
    %v5524 = vld [vmem:[%s5514 + $0x48] sm:$0xff]
    %v5525 = vld [vmem:[%s5514 + $0x50] sm:$0xff]
    %v5526 = vld [vmem:[%s5514 + $0x58] sm:$0xff]
    %v5527 = vld [vmem:[%s5514 + $0x60] sm:$0xff]
    %v5528 = vld [vmem:[%s5514 + $0x68] sm:$0xff]
    %v5529 = vld [vmem:[%s5514 + $0x70] sm:$0xff]
    %v5530 = vld [vmem:[%s5514 + $0x78] sm:$0xff]
    %v5531 = vld [vmem:[%s5514 + $0x80] sm:$0xff]
    %v5532 = vld [vmem:[%s5514 + $0x88] sm:$0xff]
    %v5533 = vld [vmem:[%s5514 + $0x90] sm:$0xff]
    %v5534 = vld [vmem:[%s5514 + $0x98] sm:$0xff]
    %v5535 = vld [vmem:[%s5514 + $0xa0] sm:$0xff]
    %v5536 = vld [vmem:[%s5514 + $0xa8] sm:$0xff]
    %v5537 = vld [vmem:[%s5514 + $0xb0] sm:$0xff]
    %v5538 = vld [vmem:[%s5514 + $0xb8] sm:$0xff]
    %v5539 = vld [vmem:[%s5514 + $0xc0] sm:$0xff]
    %v5540 = vld [vmem:[%s5514 + $0xc8] sm:$0xff]
    %v5541 = vld [vmem:[%s5514 + $0xd0] sm:$0xff]
    %v5542 = vld [vmem:[%s5514 + $0xd8] sm:$0xff]
    %v5543 = vld [vmem:[%s5514 + $0xe0] sm:$0xff]
    %v5544 = vld [vmem:[%s5514 + $0xe8] sm:$0xff]
    %v5545 = vld [vmem:[%s5514 + $0xf0] sm:$0xff]
    %v5546 = vld [vmem:[%s5514 + $0xf8] sm:$0xff]
    %v5547 = vld [vmem:[%s5514 + $0x100] sm:$0xff]
    %v5548 = vld [vmem:[%s5514 + $0x108] sm:$0xff]
    %v5549 = vld [vmem:[%s5514 + $0x110] sm:$0xff]
    %v5550 = vld [vmem:[%s5514 + $0x118] sm:$0xff]
    %v5551 = vld [vmem:[%s5514 + $0x120] sm:$0xff]
    %v5552 = vld [vmem:[%s5514 + $0x128] sm:$0xff]
    %v5553 = vld [vmem:[%s5514 + $0x130] sm:$0xff]
    %v5554 = vld [vmem:[%s5514 + $0x138] sm:$0xff]
    %v5555 = vld [vmem:[%s5514 + $0x140] sm:$0xff]
    %v5556 = vld [vmem:[%s5514 + $0x148] sm:$0xff]
    %v5557 = vld [vmem:[%s5514 + $0x150] sm:$0xff]
    %v5558 = vld [vmem:[%s5514 + $0x158] sm:$0xff]
    %v5559 = vld [vmem:[%s5514 + $0x160] sm:$0xff]
    %v5560 = vld [vmem:[%s5514 + $0x168] sm:$0xff]
    %v5561 = vld [vmem:[%s5514 + $0x170] sm:$0xff]
    %v5562 = vld [vmem:[%s5514 + $0x178] sm:$0xff]
    %v5563 = vld [vmem:[%s5514 + $0x180] sm:$0xff]
    %v5564 = vld [vmem:[%s5514 + $0x188] sm:$0xff]
    %v5615 = vunpack.c.l.b16 %v5515
    %v5616 = vunpack.c.h.b16 %v5515
    %v5617 = vunpack.c.l.b16 %v5516
    %v5618 = vunpack.c.h.b16 %v5516
    %v5619 = vunpack.c.l.b16 %v5517
    %v5620 = vunpack.c.h.b16 %v5517
    %v5621 = vunpack.c.l.b16 %v5518
    %v5622 = vunpack.c.h.b16 %v5518
    %v5623 = vunpack.c.l.b16 %v5519
    %v5624 = vunpack.c.h.b16 %v5519
    %v5625 = vunpack.c.l.b16 %v5520
    %v5626 = vunpack.c.h.b16 %v5520
    %v5627 = vunpack.c.l.b16 %v5521
    %v5628 = vunpack.c.h.b16 %v5521
    %v5629 = vunpack.c.l.b16 %v5522
    %v5630 = vunpack.c.h.b16 %v5522
    %v5631 = vunpack.c.l.b16 %v5523
    %v5632 = vunpack.c.h.b16 %v5523
    %v5633 = vunpack.c.l.b16 %v5524
    %v5634 = vunpack.c.h.b16 %v5524
    %v5635 = vunpack.c.l.b16 %v5525
    %v5636 = vunpack.c.h.b16 %v5525
    %v5637 = vunpack.c.l.b16 %v5526
    %v5638 = vunpack.c.h.b16 %v5526
    %v5639 = vunpack.c.l.b16 %v5527
    %v5640 = vunpack.c.h.b16 %v5527
    %v5641 = vunpack.c.l.b16 %v5528
    %v5642 = vunpack.c.h.b16 %v5528
    %v5643 = vunpack.c.l.b16 %v5529
    %v5644 = vunpack.c.h.b16 %v5529
    %v5645 = vunpack.c.l.b16 %v5530
    %v5646 = vunpack.c.h.b16 %v5530
    %v5647 = vunpack.c.l.b16 %v5531
    %v5648 = vunpack.c.h.b16 %v5531
    %v5649 = vunpack.c.l.b16 %v5532
    %v5650 = vunpack.c.h.b16 %v5532
    %v5651 = vunpack.c.l.b16 %v5533
    %v5652 = vunpack.c.h.b16 %v5533
    %v5653 = vunpack.c.l.b16 %v5534
    %v5654 = vunpack.c.h.b16 %v5534
    %v5655 = vunpack.c.l.b16 %v5535
    %v5656 = vunpack.c.h.b16 %v5535
    %v5657 = vunpack.c.l.b16 %v5536
    %v5658 = vunpack.c.h.b16 %v5536
    %v5659 = vunpack.c.l.b16 %v5537
    %v5660 = vunpack.c.h.b16 %v5537
    %v5661 = vunpack.c.l.b16 %v5538
    %v5662 = vunpack.c.h.b16 %v5538
    %v5663 = vunpack.c.l.b16 %v5539
    %v5664 = vunpack.c.h.b16 %v5539
    %v5665 = vunpack.c.l.b16 %v5540
    %v5666 = vunpack.c.h.b16 %v5540
    %v5667 = vunpack.c.l.b16 %v5541
    %v5668 = vunpack.c.h.b16 %v5541
    %v5669 = vunpack.c.l.b16 %v5542
    %v5670 = vunpack.c.h.b16 %v5542
    %v5671 = vunpack.c.l.b16 %v5543
    %v5672 = vunpack.c.h.b16 %v5543
    %v5673 = vunpack.c.l.b16 %v5544
    %v5674 = vunpack.c.h.b16 %v5544
    %v5675 = vunpack.c.l.b16 %v5545
    %v5676 = vunpack.c.h.b16 %v5545
    %v5677 = vunpack.c.l.b16 %v5546
    %v5678 = vunpack.c.h.b16 %v5546
    %v5679 = vunpack.c.l.b16 %v5547
    %v5680 = vunpack.c.h.b16 %v5547
    %v5681 = vunpack.c.l.b16 %v5548
    %v5682 = vunpack.c.h.b16 %v5548
    %v5683 = vunpack.c.l.b16 %v5549
    %v5684 = vunpack.c.h.b16 %v5549
    %v5685 = vunpack.c.l.b16 %v5550
    %v5686 = vunpack.c.h.b16 %v5550
    %v5687 = vunpack.c.l.b16 %v5551
    %v5688 = vunpack.c.h.b16 %v5551
    %v5689 = vunpack.c.l.b16 %v5552
    %v5690 = vunpack.c.h.b16 %v5552
    %v5691 = vunpack.c.l.b16 %v5553
    %v5692 = vunpack.c.h.b16 %v5553
    %v5693 = vunpack.c.l.b16 %v5554
    %v5694 = vunpack.c.h.b16 %v5554
    %v5695 = vunpack.c.l.b16 %v5555
    %v5696 = vunpack.c.h.b16 %v5555
    %v5697 = vunpack.c.l.b16 %v5556
    %v5698 = vunpack.c.h.b16 %v5556
    %v5699 = vunpack.c.l.b16 %v5557
    %v5700 = vunpack.c.h.b16 %v5557
    %v5701 = vunpack.c.l.b16 %v5558
    %v5702 = vunpack.c.h.b16 %v5558
    %v5703 = vunpack.c.l.b16 %v5559
    %v5704 = vunpack.c.h.b16 %v5559
    %v5705 = vunpack.c.l.b16 %v5560
    %v5706 = vunpack.c.h.b16 %v5560
    %v5707 = vunpack.c.l.b16 %v5561
    %v5708 = vunpack.c.h.b16 %v5561
    %v5709 = vunpack.c.l.b16 %v5562
    %v5710 = vunpack.c.h.b16 %v5562
    %v5711 = vunpack.c.l.b16 %v5563
    %v5712 = vunpack.c.h.b16 %v5563
    %v5713 = vunpack.c.l.b16 %v5564
    %v5714 = vunpack.c.h.b16 %v5564
    %v5715 = vpack.c.b16 %v5619, %v5615
    %v5716 = vpack.c.b16 %v5620, %v5616
    %v5717 = vpack.c.b16 %v5621, %v5617
    %v5718 = vpack.c.b16 %v5622, %v5618
    %v5719 = vpack.c.b16 %v5627, %v5623
    %v5720 = vpack.c.b16 %v5628, %v5624
    %v5721 = vpack.c.b16 %v5629, %v5625
    %v5722 = vpack.c.b16 %v5630, %v5626
    %v5723 = vpack.c.b16 %v5635, %v5631
    %v5724 = vpack.c.b16 %v5636, %v5632
    %v5725 = vpack.c.b16 %v5637, %v5633
    %v5726 = vpack.c.b16 %v5638, %v5634
    %v5727 = vpack.c.b16 %v5643, %v5639
    %v5728 = vpack.c.b16 %v5644, %v5640
    %v5729 = vpack.c.b16 %v5645, %v5641
    %v5730 = vpack.c.b16 %v5646, %v5642
    %v5731 = vpack.c.b16 %v5651, %v5647
    %v5732 = vpack.c.b16 %v5652, %v5648
    %v5733 = vpack.c.b16 %v5653, %v5649
    %v5734 = vpack.c.b16 %v5654, %v5650
    %v5735 = vpack.c.b16 %v5659, %v5655
    %v5736 = vpack.c.b16 %v5660, %v5656
    %v5737 = vpack.c.b16 %v5661, %v5657
    %v5738 = vpack.c.b16 %v5662, %v5658
    %v5739 = vpack.c.b16 %v5667, %v5663
    %v5740 = vpack.c.b16 %v5668, %v5664
    %v5741 = vpack.c.b16 %v5669, %v5665
    %v5742 = vpack.c.b16 %v5670, %v5666
    %v5743 = vpack.c.b16 %v5675, %v5671
    %v5744 = vpack.c.b16 %v5676, %v5672
    %v5745 = vpack.c.b16 %v5677, %v5673
    %v5746 = vpack.c.b16 %v5678, %v5674
    %v5747 = vpack.c.b16 %v5683, %v5679
    %v5748 = vpack.c.b16 %v5684, %v5680
    %v5749 = vpack.c.b16 %v5685, %v5681
    %v5750 = vpack.c.b16 %v5686, %v5682
    %v5751 = vpack.c.b16 %v5691, %v5687
    %v5752 = vpack.c.b16 %v5692, %v5688
    %v5753 = vpack.c.b16 %v5693, %v5689
    %v5754 = vpack.c.b16 %v5694, %v5690
    %v5755 = vpack.c.b16 %v5699, %v5695
    %v5756 = vpack.c.b16 %v5700, %v5696
    %v5757 = vpack.c.b16 %v5701, %v5697
    %v5758 = vpack.c.b16 %v5702, %v5698
    %v5759 = vpack.c.b16 %v5707, %v5703
    %v5760 = vpack.c.b16 %v5708, %v5704
    %v5761 = vpack.c.b16 %v5709, %v5705
    %v5762 = vpack.c.b16 %v5710, %v5706
    %v5763 = vpack.c.b16 %v5711, %v5711
    %v5764 = vpack.c.b16 %v5712, %v5712
    %v5765 = vpack.c.b16 %v5713, %v5713
    %v5766 = vpack.c.b16 %v5714, %v5714
    %v5816 = vsel %vm2191, %v1839, 0
    %v5819 = vsel %vm541, %v5763, 0
    %v5822 = vsel %vm541, %v5764, 0
    %v5825 = vsel %vm541, %v5765, 0
    %v5828 = vsel %vm541, %v5766, 0
    %5830 = vmatprep.subr.bf16.mxu0 %v5744
    %5831 = vmatpush1.bf16.msra.mxu0 %v5743
    %5832 = vmatprep.subr.bf16.mxu0 %v5740
    %5833 = vmatpush1.bf16.msra.mxu0 %v5739
    %5834 = vmatprep.subr.bf16.mxu0 %v5736
    %5835 = vmatpush1.bf16.msra.mxu0 %v5735
    %5836 = vmatprep.subr.bf16.mxu0 %v5732
    %5837 = vmatpush1.bf16.msra.mxu0 %v5731
    %5838 = vmatprep.subr.bf16.mxu0 %v5728
    %5839 = vmatpush1.bf16.msra.mxu0 %v5727
    %5840 = vmatprep.subr.bf16.mxu0 %v5724
    %5841 = vmatpush1.bf16.msra.mxu0 %v5723
    %5842 = vmatprep.subr.bf16.mxu0 %v5720
    %5843 = vmatpush1.bf16.msra.mxu0 %v5719
    %5844 = vmatprep.subr.bf16.mxu0 %v5716
    %5845 = vmatpush1.bf16.msra.mxu0 %v5715
    %5846 = vmatprep.subr.bf16.mxu0 0
    %5847 = vmatpush2.bf16.msra.mxu0 0
    %5848 = vmatprep.subr.bf16.mxu0 0
    %5849 = vmatpush2.bf16.msra.mxu0 0
    %5850 = vmatprep.subr.bf16.mxu0 0
    %5851 = vmatpush2.bf16.msra.mxu0 0
    %5852 = vmatprep.subr.bf16.mxu0 %v5822
    %5853 = vmatpush2.bf16.msra.mxu0 %v5819
    %5854 = vmatprep.subr.bf16.mxu0 %v5760
    %5855 = vmatpush2.bf16.msra.mxu0 %v5759
    %5856 = vmatprep.subr.bf16.mxu0 %v5756
    %5857 = vmatpush2.bf16.msra.mxu0 %v5755
    %5858 = vmatprep.subr.bf16.mxu0 %v5752
    %5859 = vmatpush2.bf16.msra.mxu0 %v5751
    %5860 = vmatprep.subr.bf16.mxu0 %v5748
    %5861 = vmatpush2.bf16.msra.mxu0 %v5747
    %5862 = vmatprep.mubr.bf16.mxu0 %v5816
    %5863 = vmatmul.mubr.bf16.gmra.mxu0 %v1838
    %v5864 = vpop.f32.mrf.mxu0
    %v5865 = vadd.f32 0.0, %v5864
    %v5866 = vpop.f32.mrf.mxu0
    %v5867 = vadd.f32 0.0, %v5866
    %v5868 = vpop.f32.mrf.mxu0
    %v5869 = vadd.f32 0.0, %v5868
    %v5870 = vpop.f32.mrf.mxu0
    %v5871 = vadd.f32 0.0, %v5870
    %5872 = vdwg.mxu0
    %5873 = vmatprep.subr.bf16.mxu0 %v5746
    %5874 = vmatpush1.bf16.msra.mxu0 %v5745
    %5875 = vmatprep.subr.bf16.mxu0 %v5742
    %5876 = vmatpush1.bf16.msra.mxu0 %v5741
    %5877 = vmatprep.subr.bf16.mxu0 %v5738
    %5878 = vmatpush1.bf16.msra.mxu0 %v5737
    %5879 = vmatprep.subr.bf16.mxu0 %v5734
    %5880 = vmatpush1.bf16.msra.mxu0 %v5733
    %5881 = vmatprep.subr.bf16.mxu0 %v5730
    %5882 = vmatpush1.bf16.msra.mxu0 %v5729
    %5883 = vmatprep.subr.bf16.mxu0 %v5726
    %5884 = vmatpush1.bf16.msra.mxu0 %v5725
    %5885 = vmatprep.subr.bf16.mxu0 %v5722
    %5886 = vmatpush1.bf16.msra.mxu0 %v5721
    %5887 = vmatprep.subr.bf16.mxu0 %v5718
    %5888 = vmatpush1.bf16.msra.mxu0 %v5717
    %5889 = vmatprep.subr.bf16.mxu0 0
    %5890 = vmatpush2.bf16.msra.mxu0 0
    %5891 = vmatprep.subr.bf16.mxu0 0
    %5892 = vmatpush2.bf16.msra.mxu0 0
    %5893 = vmatprep.subr.bf16.mxu0 0
    %5894 = vmatpush2.bf16.msra.mxu0 0
    %5895 = vmatprep.subr.bf16.mxu0 %v5828
    %5896 = vmatpush2.bf16.msra.mxu0 %v5825
    %5897 = vmatprep.subr.bf16.mxu0 %v5762
    %5898 = vmatpush2.bf16.msra.mxu0 %v5761
    %5899 = vmatprep.subr.bf16.mxu0 %v5758
    %5900 = vmatpush2.bf16.msra.mxu0 %v5757
    %5901 = vmatprep.subr.bf16.mxu0 %v5754
    %5902 = vmatpush2.bf16.msra.mxu0 %v5753
    %5903 = vmatprep.subr.bf16.mxu0 %v5750
    %5904 = vmatpush2.bf16.msra.mxu0 %v5749
    %5905 = vmatprep.mubr.bf16.mxu0 %v5816
    %5906 = vmatmul.mubr.bf16.gmra.mxu0 %v1838
    %v5907 = vpop.f32.mrf.mxu0
    %v5908 = vadd.f32 0.0, %v5907
    %v5909 = vpop.f32.mrf.mxu0
    %v5910 = vadd.f32 0.0, %v5909
    %v5911 = vpop.f32.mrf.mxu0
    %v5912 = vadd.f32 0.0, %v5911
    %v5913 = vpop.f32.mrf.mxu0
    %v5914 = vadd.f32 0.0, %v5913
    %5915 = vdwg.mxu0
    %v5916 = vadd.f32 %v5506, %v5865
    %v5917 = vadd.f32 %v5507, %v5867
    %v5918 = vadd.f32 %v5508, %v5908
    %v5919 = vadd.f32 %v5509, %v5910
    %v5920 = vadd.f32 %v5510, %v5869
    %v5921 = vadd.f32 %v5511, %v5871
    %v5922 = vadd.f32 %v5512, %v5912
    %v5923 = vadd.f32 %v5513, %v5914
    %v5924 = vld [vmem:[#allocation9] sm:$0xf]
    %v5926 = vlaneseq
    %v5927 = vshrl.u32 %v5926, 7
    %v5928 = vsub.s32 0, %v5927
    %v5929 = vrot.slane %v5924, %v5928
    %v5930 = vlaneseq
    %v5931 = vshrl.u32 %v5930, 7
    %v5932 = vsub.s32 1, %v5931
    %v5933 = vrot.slane %v5924, %v5932
    %v5934 = vlaneseq
    %v5935 = vshrl.u32 %v5934, 7
    %v5936 = vsub.s32 2, %v5935
    %v5937 = vrot.slane %v5924, %v5936
    %v5938 = vlaneseq
    %v5939 = vshrl.u32 %v5938, 7
    %v5940 = vsub.s32 3, %v5939
    %v5941 = vrot.slane %v5924, %v5940
    %v5946 = vadd.f32 %v5916, %v5929
    %v5947 = vadd.f32 %v5917, %v5933
    %v5948 = vadd.f32 %v5918, %v5937
    %v5949 = vadd.f32 %v5919, %v5941
    %v5950 = vadd.f32 %v5920, %v5929
    %v5951 = vadd.f32 %v5921, %v5933
    %v5952 = vadd.f32 %v5922, %v5937
    %v5953 = vadd.f32 %v5923, %v5941
    %v5954 = vmax.f32 %v5946, 0.0
    %v5955 = vmax.f32 %v5947, 0.0
    %v5956 = vmax.f32 %v5948, 0.0
    %v5957 = vmax.f32 %v5949, 0.0
    %v5958 = vmax.f32 %v5950, 0.0
    %v5959 = vmax.f32 %v5951, 0.0
    %v5960 = vmax.f32 %v5952, 0.0
    %v5961 = vmax.f32 %v5953, 0.0
    %v5962 = vpack.c.bf16 %v5958, %v5954
    %v5963 = vpack.c.bf16 %v5959, %v5955
    %v5964 = vpack.c.bf16 %v5960, %v5956
    %v5965 = vpack.c.bf16 %v5961, %v5957
    %v5966 = vld [vmem:[#allocation10] sm:$0xf]
    %v5967 = vld [vmem:[#allocation10 + $0x4] sm:$0xf]
    %v5968 = vld [vmem:[#allocation10 + $0x8] sm:$0xf]
    %v5969 = vld [vmem:[#allocation10 + $0xc] sm:$0xf]
    %v5970 = vld [vmem:[#allocation10 + $0x10] sm:$0xf]
    %v5971 = vld [vmem:[#allocation10 + $0x14] sm:$0xf]
    %v5972 = vld [vmem:[#allocation10 + $0x18] sm:$0xf]
    %v5973 = vld [vmem:[#allocation10 + $0x1c] sm:$0xf]
    %v5974 = vld [vmem:[#allocation10 + $0x20] sm:$0xf]
    %v5975 = vld [vmem:[#allocation10 + $0x24] sm:$0xf]
    %v5976 = vld [vmem:[#allocation10 + $0x28] sm:$0xf]
    %v5977 = vld [vmem:[#allocation10 + $0x2c] sm:$0xf]
    %v5978 = vld [vmem:[#allocation10 + $0x30] sm:$0xf]
    %v5979 = vld [vmem:[#allocation10 + $0x34] sm:$0xf]
    %v5980 = vld [vmem:[#allocation10 + $0x38] sm:$0xf]
    %v5981 = vld [vmem:[#allocation10 + $0x3c] sm:$0xf]
    %v5982 = vld [vmem:[#allocation10 + $0x40] sm:$0xf]
    %v5983 = vld [vmem:[#allocation10 + $0x44] sm:$0xf]
    %v5984 = vld [vmem:[#allocation10 + $0x48] sm:$0xf]
    %v5985 = vld [vmem:[#allocation10 + $0x4c] sm:$0xf]
    %v5986 = vld [vmem:[#allocation10 + $0x50] sm:$0xf]
    %v5987 = vld [vmem:[#allocation10 + $0x54] sm:$0xf]
    %v5988 = vld [vmem:[#allocation10 + $0x58] sm:$0xf]
    %v5989 = vld [vmem:[#allocation10 + $0x5c] sm:$0xf]
    %v5990 = vld [vmem:[#allocation10 + $0x60] sm:$0xf]
    %v5991 = vld [vmem:[#allocation10 + $0x64] sm:$0xf]
    %v5992 = vld [vmem:[#allocation10 + $0x68] sm:$0xf]
    %v5993 = vld [vmem:[#allocation10 + $0x6c] sm:$0xf]
    %v5994 = vld [vmem:[#allocation10 + $0x70] sm:$0xf]
    %v5995 = vld [vmem:[#allocation10 + $0x74] sm:$0xf]
    %v5996 = vld [vmem:[#allocation10 + $0x78] sm:$0xf]
    %v5997 = vld [vmem:[#allocation10 + $0x7c] sm:$0xf]
    %v5998 = vld [vmem:[#allocation10 + $0x80] sm:$0xf]
    %v5999 = vld [vmem:[#allocation10 + $0x84] sm:$0xf]
    %v6000 = vld [vmem:[#allocation10 + $0x88] sm:$0xf]
    %v6001 = vld [vmem:[#allocation10 + $0x8c] sm:$0xf]
    %v6002 = vld [vmem:[#allocation10 + $0x90] sm:$0xf]
    %v6003 = vld [vmem:[#allocation10 + $0x94] sm:$0xf]
    %v6004 = vld [vmem:[#allocation10 + $0x98] sm:$0xf]
    %v6005 = vld [vmem:[#allocation10 + $0x9c] sm:$0xf]
    %v6006 = vld [vmem:[#allocation10 + $0xa0] sm:$0xf]
    %v6007 = vld [vmem:[#allocation10 + $0xa4] sm:$0xf]
    %v6008 = vld [vmem:[#allocation10 + $0xa8] sm:$0xf]
    %v6009 = vld [vmem:[#allocation10 + $0xac] sm:$0xf]
    %v6010 = vld [vmem:[#allocation10 + $0xb0] sm:$0xf]
    %v6011 = vld [vmem:[#allocation10 + $0xb4] sm:$0xf]
    %v6012 = vld [vmem:[#allocation10 + $0xb8] sm:$0xf]
    %v6013 = vld [vmem:[#allocation10 + $0xbc] sm:$0xf]
    %v6014 = vld [vmem:[#allocation10 + $0xc0] sm:$0xf]
    %v6015 = vld [vmem:[#allocation10 + $0xc4] sm:$0xf]
    %v6016 = vld [vmem:[#allocation10 + $0xc8] sm:$0xf]
    %v6017 = vld [vmem:[#allocation10 + $0xcc] sm:$0xf]
    %v6018 = vld [vmem:[#allocation10 + $0xd0] sm:$0xf]
    %v6019 = vld [vmem:[#allocation10 + $0xd4] sm:$0xf]
    %v6020 = vld [vmem:[#allocation10 + $0xd8] sm:$0xf]
    %v6021 = vld [vmem:[#allocation10 + $0xdc] sm:$0xf]
    %v6022 = vld [vmem:[#allocation10 + $0xe0] sm:$0xf]
    %v6023 = vld [vmem:[#allocation10 + $0xe4] sm:$0xf]
    %v6024 = vld [vmem:[#allocation10 + $0xe8] sm:$0xf]
    %v6025 = vld [vmem:[#allocation10 + $0xec] sm:$0xf]
    %v6026 = vld [vmem:[#allocation10 + $0xf0] sm:$0xf]
    %v6027 = vld [vmem:[#allocation10 + $0xf4] sm:$0xf]
    %v6028 = vld [vmem:[#allocation10 + $0xf8] sm:$0xf]
    %v6029 = vld [vmem:[#allocation10 + $0xfc] sm:$0xf]
    %v6030 = vld [vmem:[#allocation12] sm:$0x1]
    %v6032 = vlaneseq
    %v6033 = vshrl.u32 %v6032, 7
    %v6034 = vsub.s32 0, %v6033
    %v6035 = vrot.slane %v6030, %v6034
    %v6101 = vunpack.c.l.b16 %v5966
    %v6102 = vunpack.c.l.b16 %v5967
    %v6103 = vunpack.c.l.b16 %v5968
    %v6104 = vunpack.c.l.b16 %v5969
    %v6105 = vunpack.c.l.b16 %v5970
    %v6106 = vunpack.c.l.b16 %v5971
    %v6107 = vunpack.c.l.b16 %v5972
    %v6108 = vunpack.c.l.b16 %v5973
    %v6109 = vunpack.c.l.b16 %v5974
    %v6110 = vunpack.c.l.b16 %v5975
    %v6111 = vunpack.c.l.b16 %v5976
    %v6112 = vunpack.c.l.b16 %v5977
    %v6113 = vunpack.c.l.b16 %v5978
    %v6114 = vunpack.c.l.b16 %v5979
    %v6115 = vunpack.c.l.b16 %v5980
    %v6116 = vunpack.c.l.b16 %v5981
    %v6117 = vunpack.c.l.b16 %v5982
    %v6118 = vunpack.c.l.b16 %v5983
    %v6119 = vunpack.c.l.b16 %v5984
    %v6120 = vunpack.c.l.b16 %v5985
    %v6121 = vunpack.c.l.b16 %v5986
    %v6122 = vunpack.c.l.b16 %v5987
    %v6123 = vunpack.c.l.b16 %v5988
    %v6124 = vunpack.c.l.b16 %v5989
    %v6125 = vunpack.c.l.b16 %v5990
    %v6126 = vunpack.c.l.b16 %v5991
    %v6127 = vunpack.c.l.b16 %v5992
    %v6128 = vunpack.c.l.b16 %v5993
    %v6129 = vunpack.c.l.b16 %v5994
    %v6130 = vunpack.c.l.b16 %v5995
    %v6131 = vunpack.c.l.b16 %v5996
    %v6132 = vunpack.c.l.b16 %v5997
    %v6133 = vunpack.c.l.b16 %v5998
    %v6134 = vunpack.c.l.b16 %v5999
    %v6135 = vunpack.c.l.b16 %v6000
    %v6136 = vunpack.c.l.b16 %v6001
    %v6137 = vunpack.c.l.b16 %v6002
    %v6138 = vunpack.c.l.b16 %v6003
    %v6139 = vunpack.c.l.b16 %v6004
    %v6140 = vunpack.c.l.b16 %v6005
    %v6141 = vunpack.c.l.b16 %v6006
    %v6142 = vunpack.c.l.b16 %v6007
    %v6143 = vunpack.c.l.b16 %v6008
    %v6144 = vunpack.c.l.b16 %v6009
    %v6145 = vunpack.c.l.b16 %v6010
    %v6146 = vunpack.c.l.b16 %v6011
    %v6147 = vunpack.c.l.b16 %v6012
    %v6148 = vunpack.c.l.b16 %v6013
    %v6149 = vunpack.c.l.b16 %v6014
    %v6150 = vunpack.c.l.b16 %v6015
    %v6151 = vunpack.c.l.b16 %v6016
    %v6152 = vunpack.c.l.b16 %v6017
    %v6153 = vunpack.c.l.b16 %v6018
    %v6154 = vunpack.c.l.b16 %v6019
    %v6155 = vunpack.c.l.b16 %v6020
    %v6156 = vunpack.c.l.b16 %v6021
    %v6157 = vunpack.c.l.b16 %v6022
    %v6158 = vunpack.c.l.b16 %v6023
    %v6159 = vunpack.c.l.b16 %v6024
    %v6160 = vunpack.c.l.b16 %v6025
    %v6161 = vunpack.c.l.b16 %v6026
    %v6162 = vunpack.c.l.b16 %v6027
    %v6163 = vunpack.c.l.b16 %v6028
    %v6164 = vunpack.c.l.b16 %v6029
    %v6165 = vpack.c.b16 %v6102, %v6101
    %v6166 = vpack.c.b16 %v6104, %v6103
    %v6167 = vpack.c.b16 %v6106, %v6105
    %v6168 = vpack.c.b16 %v6108, %v6107
    %v6169 = vpack.c.b16 %v6110, %v6109
    %v6170 = vpack.c.b16 %v6112, %v6111
    %v6171 = vpack.c.b16 %v6114, %v6113
    %v6172 = vpack.c.b16 %v6116, %v6115
    %v6173 = vpack.c.b16 %v6118, %v6117
    %v6174 = vpack.c.b16 %v6120, %v6119
    %v6175 = vpack.c.b16 %v6122, %v6121
    %v6176 = vpack.c.b16 %v6124, %v6123
    %v6177 = vpack.c.b16 %v6126, %v6125
    %v6178 = vpack.c.b16 %v6128, %v6127
    %v6179 = vpack.c.b16 %v6130, %v6129
    %v6180 = vpack.c.b16 %v6132, %v6131
    %v6181 = vpack.c.b16 %v6134, %v6133
    %v6182 = vpack.c.b16 %v6136, %v6135
    %v6183 = vpack.c.b16 %v6138, %v6137
    %v6184 = vpack.c.b16 %v6140, %v6139
    %v6185 = vpack.c.b16 %v6142, %v6141
    %v6186 = vpack.c.b16 %v6144, %v6143
    %v6187 = vpack.c.b16 %v6146, %v6145
    %v6188 = vpack.c.b16 %v6148, %v6147
    %v6189 = vpack.c.b16 %v6150, %v6149
    %v6190 = vpack.c.b16 %v6152, %v6151
    %v6191 = vpack.c.b16 %v6154, %v6153
    %v6192 = vpack.c.b16 %v6156, %v6155
    %v6193 = vpack.c.b16 %v6158, %v6157
    %v6194 = vpack.c.b16 %v6160, %v6159
    %v6195 = vpack.c.b16 %v6162, %v6161
    %v6196 = vpack.c.b16 %v6164, %v6163
    %6229 = vmatprep.subr.bf16.mxu0 0
    %6230 = vmatpush1.bf16.msra.mxu0 %v6172
    %6231 = vmatprep.subr.bf16.mxu0 0
    %6232 = vmatpush1.bf16.msra.mxu0 %v6171
    %6233 = vmatprep.subr.bf16.mxu0 0
    %6234 = vmatpush1.bf16.msra.mxu0 %v6170
    %6235 = vmatprep.subr.bf16.mxu0 0
    %6236 = vmatpush1.bf16.msra.mxu0 %v6169
    %6237 = vmatprep.subr.bf16.mxu0 0
    %6238 = vmatpush1.bf16.msra.mxu0 %v6168
    %6239 = vmatprep.subr.bf16.mxu0 0
    %6240 = vmatpush1.bf16.msra.mxu0 %v6167
    %6241 = vmatprep.subr.bf16.mxu0 0
    %6242 = vmatpush1.bf16.msra.mxu0 %v6166
    %6243 = vmatprep.subr.bf16.mxu0 0
    %6244 = vmatpush1.bf16.msra.mxu0 %v6165
    %6245 = vmatprep.subr.bf16.mxu0 0
    %6246 = vmatpush2.bf16.msra.mxu0 %v6180
    %6247 = vmatprep.subr.bf16.mxu0 0
    %6248 = vmatpush2.bf16.msra.mxu0 %v6179
    %6249 = vmatprep.subr.bf16.mxu0 0
    %6250 = vmatpush2.bf16.msra.mxu0 %v6178
    %6251 = vmatprep.subr.bf16.mxu0 0
    %6252 = vmatpush2.bf16.msra.mxu0 %v6177
    %6253 = vmatprep.subr.bf16.mxu0 0
    %6254 = vmatpush2.bf16.msra.mxu0 %v6176
    %6255 = vmatprep.subr.bf16.mxu0 0
    %6256 = vmatpush2.bf16.msra.mxu0 %v6175
    %6257 = vmatprep.subr.bf16.mxu0 0
    %6258 = vmatpush2.bf16.msra.mxu0 %v6174
    %6259 = vmatprep.subr.bf16.mxu0 0
    %6260 = vmatpush2.bf16.msra.mxu0 %v6173
    %6261 = vmatprep.mubr.bf16.mxu0 %v5963
    %6262 = vmatmul.mubr.bf16.gmra.mxu0 %v5962
    %v6263 = vpop.f32.mrf.mxu0
    %v6264 = vadd.f32 %v6035, %v6263
    %v6265 = vpop.f32.mrf.mxu0
    %v6266 = vpop.f32.mrf.mxu0
    %v6267 = vadd.f32 %v6035, %v6266
    %v6268 = vpop.f32.mrf.mxu0
    %6269 = vdwg.mxu0
    %6270 = vmatprep.subr.bf16.mxu0 0
    %6271 = vmatpush1.bf16.msra.mxu0 %v6188
    %6272 = vmatprep.subr.bf16.mxu0 0
    %6273 = vmatpush1.bf16.msra.mxu0 %v6187
    %6274 = vmatprep.subr.bf16.mxu0 0
    %6275 = vmatpush1.bf16.msra.mxu0 %v6186
    %6276 = vmatprep.subr.bf16.mxu0 0
    %6277 = vmatpush1.bf16.msra.mxu0 %v6185
    %6278 = vmatprep.subr.bf16.mxu0 0
    %6279 = vmatpush1.bf16.msra.mxu0 %v6184
    %6280 = vmatprep.subr.bf16.mxu0 0
    %6281 = vmatpush1.bf16.msra.mxu0 %v6183
    %6282 = vmatprep.subr.bf16.mxu0 0
    %6283 = vmatpush1.bf16.msra.mxu0 %v6182
    %6284 = vmatprep.subr.bf16.mxu0 0
    %6285 = vmatpush1.bf16.msra.mxu0 %v6181
    %6286 = vmatprep.subr.bf16.mxu0 0
    %6287 = vmatpush2.bf16.msra.mxu0 %v6196
    %6288 = vmatprep.subr.bf16.mxu0 0
    %6289 = vmatpush2.bf16.msra.mxu0 %v6195
    %6290 = vmatprep.subr.bf16.mxu0 0
    %6291 = vmatpush2.bf16.msra.mxu0 %v6194
    %6292 = vmatprep.subr.bf16.mxu0 0
    %6293 = vmatpush2.bf16.msra.mxu0 %v6193
    %6294 = vmatprep.subr.bf16.mxu0 0
    %6295 = vmatpush2.bf16.msra.mxu0 %v6192
    %6296 = vmatprep.subr.bf16.mxu0 0
    %6297 = vmatpush2.bf16.msra.mxu0 %v6191
    %6298 = vmatprep.subr.bf16.mxu0 0
    %6299 = vmatpush2.bf16.msra.mxu0 %v6190
    %6300 = vmatprep.subr.bf16.mxu0 0
    %6301 = vmatpush2.bf16.msra.mxu0 %v6189
    %6302 = vmatprep.mubr.bf16.mxu0 %v5965
    %6303 = vmatmul.mubr.bf16.gmra.mxu0 %v5964
    %v6304 = vpop.f32.mrf.mxu0
    %v6305 = vadd.f32 %v6264, %v6304
    %v6306 = vpop.f32.mrf.mxu0
    %v6307 = vpop.f32.mrf.mxu0
    %v6308 = vadd.f32 %v6267, %v6307
    %v6309 = vpop.f32.mrf.mxu0
    %6310 = vdwg.mxu0
    %6311 = vmax.xlane.f32.xlu0 %v6305
    %v6312 = vpop.xlane.xlu0 %6311
    %6313 = vmax.xlane.f32.xlu0 %v6308
    %v6314 = vpop.xlane.xlu0 %6313
    %v6315 = vsub.f32 %v6305, %v6312
    %v6316 = vsub.f32 %v6308, %v6314
    %v6317 = vmul.f32 %v6315, 1.442695
    %v6318 = vpow.pop %v6317
    %v6319 = vmul.f32 %v6316, 1.442695
    %v6320 = vpow.pop %v6319
    %6321 = vadd.xlane.f32.xlu0 %v6318
    %v6322 = vpop.xlane.xlu0 %6321
    %6323 = vadd.xlane.f32.xlu0 %v6320
    %v6324 = vpop.xlane.xlu0 %6323
    %v6325 = vlog2.pop %v6322
    %v6326 = vmul.f32 %v6325, 0.6931472
    %v6327 = vlog2.pop %v6324
    %v6328 = vmul.f32 %v6327, 0.6931472
    %v6329 = vsub.f32 %v6315, %v6326
    %v6330 = vsub.f32 %v6316, %v6328
    %6331 = vst [vmem:[%s9] sm:$0xff] %v6329
    %6332 = vst [vmem:[%s9 + $0x8] sm:$0xff] %v6330
    // Predicated region
    $region66: #{net_forward.1} parent=1 // pred_check
      _
    $region67: #{net_forward.1} parent=1 // pred_check_branch
      %6334 = sbr.rel (0) target = $region69
    $region68: #{net_forward.1} parent=1 // pred_region
      _
    $region69: #{net_forward.1} parent=1 // pred_fallthru
      _
    // Predicated region
    $region70: #{net_forward.1} parent=1 // pred_check
      _
    $region71: #{net_forward.1} parent=1 // pred_check_branch
      %6336 = sbr.rel (0) target = $region73
    $region72: #{net_forward.1} parent=1 // pred_region
      _
    $region73: #{net_forward.1} parent=1 // pred_fallthru
      _
    %6337 = vsyncpa [#allocation3], 1
    %6338 = vsyncpa [#allocation5], 1
    %6339 = vsyncpa [#allocation8], 1
    %6340 = vsyncpa [#allocation11], 1

</llo_original>
